<compile_context>
chip_gen: v5e
topology: v5e:2x2
jax: 0.10.0
libtpu: 0.0.40
codegen_flags: <defaults>
</compile_context>

<pallas_src>
import functools

import jax
import jax.numpy as jnp
from jax import lax
from jax.experimental import pallas as pl
from jax.experimental.pallas import tpu as pltpu

EPS = 1e-5
LEAKY_SLOPE = 0.01          # PyTorch LeakyReLU default negative_slope
LANE = 128
VMEM_LIMIT = 48 << 20       # above the 16/32 MiB scoped defaults, < v7x 64 MiB


def _round_up(x, m):
    return (x + m - 1) // m * m


# ---------------------------------------------------------------------------
# Pass A: tiled GEMM (+bias) + per-tile BatchNorm partial statistics
# ---------------------------------------------------------------------------
def _gemm_stats_kernel(m_true, tm, patches_ref, w_ref, b_ref,
                       conv_ref, stats_ref):
    i = pl.program_id(0)

    # (TM, K_pad) bf16 @ (K_pad, C_pad) bf16 -> f32 accumulation on the MXU.
    conv = jnp.dot(patches_ref[...], w_ref[...],
                   preferred_element_type=jnp.float32)
    conv = conv + b_ref[...]                      # (1, C_pad) broadcast
    conv_ref[...] = conv

    # Partial BN stats for this tile; mask rows that exist only because M was
    # padded up to a multiple of TM so they do not pollute the batch stats.
    row_ids = i * tm + lax.broadcasted_iota(jnp.int32, (tm, 1), 0)
    valid = (row_ids < m_true).astype(jnp.float32)
    cm = conv * valid
    psum = jnp.sum(cm, axis=0, keepdims=True)           # (1, C_pad)
    psq = jnp.sum(cm * cm, axis=0, keepdims=True)       # (1, C_pad)
    stats_ref[...] = jnp.concatenate([psum, psq], axis=0)[None]   # (1,2,C_pad)


# ---------------------------------------------------------------------------
# Pass B: folded BatchNorm affine + activation (slope=0 -> ReLU, 0.01 -> Leaky)
# ---------------------------------------------------------------------------
def _bn_act_kernel(neg_slope, conv_ref, scale_ref, shift_ref, o_ref):
    y = conv_ref[...] * scale_ref[...] + shift_ref[...]
    o_ref[...] = jnp.where(y > 0, y, neg_slope * y).astype(o_ref.dtype)


# ---------------------------------------------------------------------------
# Wrapper glue
# ---------------------------------------------------------------------------
def _im2col(x_ndhwc):
    """x: (N, D, H, W, C) -> zero-padded 3x3x3 patches (M, 27*C), bf16.

    Row order is (n, d, h, w) row-major; column order is (kd, kh, kw, c)."""
    N, D, H, W, C = x_ndhwc.shape
    xp = jnp.pad(x_ndhwc.astype(jnp.bfloat16),
                 ((0, 0), (1, 1), (1, 1), (1, 1), (0, 0)))
    taps = []
    for kd in range(3):
        for kh in range(3):
            for kw in range(3):
                taps.append(xp[:, kd:kd + D, kh:kh + H, kw:kw + W, :])
    P = jnp.stack(taps, axis=4)                 # (N, D, H, W, 27, C)
    return P.reshape(N * D * H * W, 27 * C)


def _conv_bn_act_layer(x_ndhwc, weight, bias, gamma, beta, *,
                       neg_slope, out_dtype, tm):
    """One Conv3d(k=3, pad=1, zeros) + BatchNorm3d(training) + activation.

    x_ndhwc: (N, D, H, W, C_in).  Returns (N, D, H, W, C_out) in out_dtype."""
    N, D, H, W, C_in = x_ndhwc.shape
    C_out = weight.shape[0]
    M = N * D * H * W
    K = 27 * C_in
    K_pad = _round_up(K, LANE)
    C_pad = _round_up(C_out, LANE)
    M_pad = _round_up(M, tm)
    n_tiles = M_pad // tm

    # im2col (data rearrangement only) + zero-pad to MXU-friendly shapes.
    patches = _im2col(x_ndhwc)                                    # (M, K) bf16
    patches = jnp.pad(patches, ((0, M_pad - M), (0, K_pad - K)))

    # weight (C_out, C_in, 3,3,3) -> (kd,kh,kw,C_in,C_out) -> (K, C_out)
    w_mat = weight.transpose(2, 3, 4, 1, 0).reshape(K, C_out)
    w_mat = jnp.pad(w_mat, ((0, K_pad - K), (0, C_pad - C_out)))
    w_mat = w_mat.astype(jnp.bfloat16)
    b_row = jnp.pad(bias.astype(jnp.float32),
                    (0, C_pad - C_out)).reshape(1, C_pad)

    # ---- Pass A: GEMM + bias + partial BN stats ----------------------------
    flops_a = 2 * M_pad * K_pad * C_pad
    bytes_a = (M_pad * K_pad * 2 + K_pad * C_pad * 2
               + M_pad * C_pad * 4 + n_tiles * 2 * C_pad * 4)
    conv2d, part_stats = pl.pallas_call(
        functools.partial(_gemm_stats_kernel, M, tm),
        out_shape=(
            jax.ShapeDtypeStruct((M_pad, C_pad), jnp.float32),
            jax.ShapeDtypeStruct((n_tiles, 2, C_pad), jnp.float32),
        ),
        grid=(n_tiles,),
        in_specs=[
            pl.BlockSpec((tm, K_pad), lambda i: (i, 0)),
            pl.BlockSpec((K_pad, C_pad), lambda i: (0, 0)),
            pl.BlockSpec((1, C_pad), lambda i: (0, 0)),
        ],
        out_specs=(
            pl.BlockSpec((tm, C_pad), lambda i: (i, 0)),
            pl.BlockSpec((1, 2, C_pad), lambda i: (i, 0, 0)),
        ),
        compiler_params=pltpu.CompilerParams(
            dimension_semantics=("parallel",),
            vmem_limit_bytes=VMEM_LIMIT),
        cost_estimate=pl.CostEstimate(
            flops=flops_a, transcendentals=0, bytes_accessed=bytes_a),
    )(patches, w_mat, b_row)

    # ---- tiny per-channel finalization (plain JAX, O(C) work) --------------
    sums = jnp.sum(part_stats[:, 0, :], axis=0)
    sqs = jnp.sum(part_stats[:, 1, :], axis=0)
    mean = sums / M
    var = jnp.maximum(sqs / M - mean * mean, 0.0)   # biased, training-mode BN
    inv_std = lax.rsqrt(var + EPS)
    gamma_p = jnp.pad(gamma.astype(jnp.float32), (0, C_pad - C_out))
    beta_p = jnp.pad(beta.astype(jnp.float32), (0, C_pad - C_out))
    scale = (gamma_p * inv_std).reshape(1, C_pad)            # padded ch: 0
    shift = (beta_p - mean * gamma_p * inv_std).reshape(1, C_pad)

    # ---- Pass B: BN affine + activation, lane-dense store -------------------
    out_itemsize = jnp.dtype(out_dtype).itemsize
    bytes_b = M_pad * C_pad * (4 + out_itemsize) + 2 * C_pad * 4
    act = pl.pallas_call(
        functools.partial(_bn_act_kernel, neg_slope),
        out_shape=jax.ShapeDtypeStruct((M_pad, C_pad), out_dtype),
        grid=(n_tiles,),
        in_specs=[
            pl.BlockSpec((tm, C_pad), lambda i: (i, 0)),
            pl.BlockSpec((1, C_pad), lambda i: (0, 0)),
            pl.BlockSpec((1, C_pad), lambda i: (0, 0)),
        ],
        out_specs=pl.BlockSpec((tm, C_pad), lambda i: (i, 0)),
        compiler_params=pltpu.CompilerParams(
            dimension_semantics=("parallel",),
            vmem_limit_bytes=VMEM_LIMIT),
        cost_estimate=pl.CostEstimate(
            flops=3 * M_pad * C_pad, transcendentals=0,
            bytes_accessed=bytes_b),
    )(conv2d, scale, shift)

    return act[:M, :C_out].reshape(N, D, H, W, C_out)


def double_conv_pallas(x, params, tm=512):
    """x: (N, C_in, D, H, W) f32; params = (w1,b1,g1,be1, w2,b2,g2,be2)."""
    w1, b1, g1, be1, w2, b2, g2, be2 = params
    x_cl = jnp.transpose(x, (0, 2, 3, 4, 1))                 # -> NDHWC
    # block 1: conv -> BN -> ReLU (keep activations bf16 for the next GEMM)
    a1 = _conv_bn_act_layer(x_cl, w1, b1, g1, be1,
                            neg_slope=0.0, out_dtype=jnp.bfloat16, tm=tm)
    # block 2: conv -> BN -> LeakyReLU(0.01), final output in f32
    a2 = _conv_bn_act_layer(a1, w2, b2, g2, be2,
                            neg_slope=LEAKY_SLOPE, out_dtype=jnp.float32,
                            tm=tm)
    return jnp.transpose(a2, (0, 4, 1, 2, 3))                # -> NCDHW


# ---------------------------------------------------------------------------
# Pure-JAX f32 reference matching PyTorch semantics (training-mode BatchNorm)
# ---------------------------------------------------------------------------
def double_conv_reference(x, params):
    w1, b1, g1, be1, w2, b2, g2, be2 = params

    def block(h, w, b, g, be, act):
        conv = lax.conv_general_dilated(
            h, w, window_strides=(1, 1, 1),
            padding=((1, 1), (1, 1), (1, 1)),
            dimension_numbers=("NCDHW", "OIDHW", "NCDHW"))
        conv = conv + b.reshape(1, -1, 1, 1, 1)
        mean = conv.mean(axis=(0, 2, 3, 4), keepdims=True)
        var = conv.var(axis=(0, 2, 3, 4), keepdims=True)     # biased
        y = (conv - mean) * lax.rsqrt(var + EPS)
        y = y * g.reshape(1, -1, 1, 1, 1) + be.reshape(1, -1, 1, 1, 1)
        return act(y)

    h = block(x, w1, b1, g1, be1, lambda y: jnp.maximum(y, 0.0))
    return block(h, w2, b2, g2, be2,
                 lambda y: jnp.where(y > 0, y, LEAKY_SLOPE * y))


if __name__ == "__main__":
    key = jax.random.PRNGKey(0)
    k_x, k_w1, k_b1, k_w2, k_b2 = jax.random.split(key, 5)

    N, C_in, C_out = 2, 4, 8
    D = H = W = 8

    x = jax.random.normal(k_x, (N, C_in, D, H, W), dtype=jnp.float32)

    # Deterministic synthetic parameter init (PyTorch-style uniform bounds).
    def conv_init(kw_key, kb_key, cin, cout):
        bound = 1.0 / ((cin * 27) ** 0.5)
        w = jax.random.uniform(kw_key, (cout, cin, 3, 3, 3),
                               minval=-bound, maxval=bound, dtype=jnp.float32)
        b = jax.random.uniform(kb_key, (cout,),
                               minval=-bound, maxval=bound, dtype=jnp.float32)
        return w, b

    w1, b1 = conv_init(k_w1, k_b1, C_in, C_out)
    w2, b2 = conv_init(k_w2, k_b2, C_out, C_out)
    g1 = jnp.ones((C_out,), jnp.float32)
    be1 = jnp.zeros((C_out,), jnp.float32)
    g2 = jnp.ones((C_out,), jnp.float32)
    be2 = jnp.zeros((C_out,), jnp.float32)
    params = (w1, b1, g1, be1, w2, b2, g2, be2)

    out = jax.jit(double_conv_pallas)(x, params)
    out = jax.block_until_ready(out)

    ref = double_conv_reference(x, params)
    assert out.shape == (N, C_out, D, H, W)
    # bf16 GEMM operands with f32 accumulation -> relaxed tolerance vs f32 ref
    assert jnp.allclose(out, ref, rtol=5e-2, atol=5e-2), (
        float(jnp.max(jnp.abs(out - ref))))

    print("KERNEL_OK")
</pallas_src>

<mosaic_0001>
module attributes {stable_mosaic.version = 11 : i64} {
  func.func @_gemm_stats_kernel(%arg0: i32, %arg1: memref<512x128xbf16, #tpu.memory_space<vmem>>, %arg2: memref<128x128xbf16, #tpu.memory_space<vmem>>, %arg3: memref<1x128xf32, #tpu.memory_space<vmem>>, %arg4: memref<512x128xf32, #tpu.memory_space<vmem>>, %arg5: memref<1x2x128xf32, #tpu.memory_space<vmem>>) attributes {dimension_semantics = [#tpu.dimension_semantics<parallel>], iteration_bounds = array<i64: 2>, scalar_prefetch = 0 : i64, scratch_operands = 0 : i64, tpu.core_type = #tpu.core_type<tc>, window_params = [{transform_indices = @transform_0, window_bounds = array<i64: 512, 128>}, {pipeline_mode = #tpu.pipeline_mode<synchronous>, transform_indices = @transform_1, window_bounds = array<i64: 128, 128>}, {pipeline_mode = #tpu.pipeline_mode<synchronous>, transform_indices = @transform_2, window_bounds = array<i64: 1, 128>}, {transform_indices = @transform_3, window_bounds = array<i64: 512, 128>}, {transform_indices = @transform_4, window_bounds = array<i64: 1, 2, 128>}]} {
    %c0 = arith.constant 0 : index
    %c0_0 = arith.constant 0 : index
    %0 = vector.load %arg1[%c0, %c0_0] : memref<512x128xbf16, #tpu.memory_space<vmem>>, vector<512x128xbf16>
    %c0_1 = arith.constant 0 : index
    %c0_2 = arith.constant 0 : index
    %1 = vector.load %arg2[%c0_1, %c0_2] : memref<128x128xbf16, #tpu.memory_space<vmem>>, vector<128x128xbf16>
    %cst = arith.constant dense<0.000000e+00> : vector<512x128xf32>
    %2 = tpu.matmul %0, %1, %cst {dimension_numbers = #tpu.dot_dimension_numbers<[1], [0], [0], [1], [0, 0, 1, 1], [], []>} : vector<512x128xbf16>, vector<128x128xbf16>, vector<512x128xf32> -> vector<512x128xf32>
    %c0_3 = arith.constant 0 : index
    %c0_4 = arith.constant 0 : index
    %3 = vector.load %arg3[%c0_3, %c0_4] : memref<1x128xf32, #tpu.memory_space<vmem>>, vector<1x128xf32>
    %4 = vector.broadcast %3 : vector<1x128xf32> to vector<512x128xf32>
    %5 = arith.addf %2, %4 : vector<512x128xf32>
    %c0_5 = arith.constant 0 : index
    %c0_6 = arith.constant 0 : index
    %6 = vector.load %arg4[%c0_5, %c0_6] : memref<512x128xf32, #tpu.memory_space<vmem>>, vector<512x128xf32>
    tpu.vector_store %arg4[%c0_5, %c0_6], %5 {strides = array<i32>} : memref<512x128xf32, #tpu.memory_space<vmem>>, vector<512x128xf32>,
    %c512_i32 = arith.constant 512 : i32
    %7 = arith.muli %arg0, %c512_i32 : i32
    %8 = tpu.iota {dimensions = array<i32: 0>} : vector<512x1xi32>
    %9 = vector.broadcast %7 : i32 to vector<512x1xi32>
    %10 = arith.addi %9, %8 : vector<512x1xi32>
    %c1024_i32 = arith.constant 1024 : i32
    %11 = vector.broadcast %c1024_i32 : i32 to vector<512x1xi32>
    %12 = arith.cmpi slt, %10, %11 : vector<512x1xi32>
    %13 = arith.extui %12 : vector<512x1xi1> to vector<512x1xi32>
    %14 = arith.sitofp %13 : vector<512x1xi32> to vector<512x1xf32>
    %15 = vector.broadcast %14 : vector<512x1xf32> to vector<512x128xf32>
    %16 = arith.mulf %5, %15 : vector<512x128xf32>
    %cst_7 = arith.constant dense<0.000000e+00> : vector<128xf32>
    %17 = vector.multi_reduction <add>, %16, %cst_7 [0] : vector<512x128xf32> to vector<128xf32>
    %18 = vector.shape_cast %17 : vector<128xf32> to vector<1x128xf32>
    %19 = arith.mulf %16, %16 : vector<512x128xf32>
    %cst_8 = arith.constant dense<0.000000e+00> : vector<128xf32>
    %20 = vector.multi_reduction <add>, %19, %cst_8 [0] : vector<512x128xf32> to vector<128xf32>
    %21 = vector.shape_cast %20 : vector<128xf32> to vector<1x128xf32>
    %22 = tpu.concatenate %18, %21 in 0 : vector<1x128xf32>, vector<1x128xf32> -> vector<2x128xf32>
    %23 = vector.shape_cast %22 : vector<2x128xf32> to vector<1x2x128xf32>
    %c0_9 = arith.constant 0 : index
    %c0_10 = arith.constant 0 : index
    %c0_11 = arith.constant 0 : index
    %24 = vector.load %arg5[%c0_9, %c0_10, %c0_11] : memref<1x2x128xf32, #tpu.memory_space<vmem>>, vector<1x2x128xf32>
    tpu.vector_store %arg5[%c0_9, %c0_10, %c0_11], %23 {strides = array<i32>} : memref<1x2x128xf32, #tpu.memory_space<vmem>>, vector<1x2x128xf32>,
    return
  }
  func.func @transform_0(%arg0: i32) -> (i32, i32) {
    %c0_i32 = arith.constant 0 : i32
    %c0_i32_0 = arith.constant 0 : i32
    return %arg0, %c0_i32 : i32, i32
  }
  func.func @transform_1(%arg0: i32) -> (i32, i32) {
    %c0_i32 = arith.constant 0 : i32
    %c0_i32_0 = arith.constant 0 : i32
    %c0_i32_1 = arith.constant 0 : i32
    return %c0_i32, %c0_i32_0 : i32, i32
  }
  func.func @transform_2(%arg0: i32) -> (i32, i32) {
    %c0_i32 = arith.constant 0 : i32
    %c0_i32_0 = arith.constant 0 : i32
    %c0_i32_1 = arith.constant 0 : i32
    return %c0_i32, %c0_i32_0 : i32, i32
  }
  func.func @transform_3(%arg0: i32) -> (i32, i32) {
    %c0_i32 = arith.constant 0 : i32
    %c0_i32_0 = arith.constant 0 : i32
    return %arg0, %c0_i32 : i32, i32
  }
  func.func @transform_4(%arg0: i32) -> (i32, i32, i32) {
    %c0_i32 = arith.constant 0 : i32
    %c0_i32_0 = arith.constant 0 : i32
    %c0_i32_1 = arith.constant 0 : i32
    return %arg0, %c0_i32, %c0_i32_0 : i32, i32, i32
  }
}

module attributes {stable_mosaic.version = 11 : i64} {
  func.func @_bn_act_kernel(%arg0: i32, %arg1: memref<512x128xf32, #tpu.memory_space<vmem>>, %arg2: memref<1x128xf32, #tpu.memory_space<vmem>>, %arg3: memref<1x128xf32, #tpu.memory_space<vmem>>, %arg4: memref<512x128xbf16, #tpu.memory_space<vmem>>) attributes {dimension_semantics = [#tpu.dimension_semantics<parallel>], iteration_bounds = array<i64: 2>, scalar_prefetch = 0 : i64, scratch_operands = 0 : i64, tpu.core_type = #tpu.core_type<tc>, window_params = [{transform_indices = @transform_0, window_bounds = array<i64: 512, 128>}, {pipeline_mode = #tpu.pipeline_mode<synchronous>, transform_indices = @transform_1, window_bounds = array<i64: 1, 128>}, {pipeline_mode = #tpu.pipeline_mode<synchronous>, transform_indices = @transform_2, window_bounds = array<i64: 1, 128>}, {transform_indices = @transform_3, window_bounds = array<i64: 512, 128>}]} {
    %c0 = arith.constant 0 : index
    %c0_0 = arith.constant 0 : index
    %0 = vector.load %arg1[%c0, %c0_0] : memref<512x128xf32, #tpu.memory_space<vmem>>, vector<512x128xf32>
    %c0_1 = arith.constant 0 : index
    %c0_2 = arith.constant 0 : index
    %1 = vector.load %arg2[%c0_1, %c0_2] : memref<1x128xf32, #tpu.memory_space<vmem>>, vector<1x128xf32>
    %2 = vector.broadcast %1 : vector<1x128xf32> to vector<512x128xf32>
    %3 = arith.mulf %0, %2 : vector<512x128xf32>
    %c0_3 = arith.constant 0 : index
    %c0_4 = arith.constant 0 : index
    %4 = vector.load %arg3[%c0_3, %c0_4] : memref<1x128xf32, #tpu.memory_space<vmem>>, vector<1x128xf32>
    %5 = vector.broadcast %4 : vector<1x128xf32> to vector<512x128xf32>
    %6 = arith.addf %3, %5 : vector<512x128xf32>
    %cst = arith.constant 0.000000e+00 : f32
    %7 = vector.broadcast %cst : f32 to vector<512x128xf32>
    %8 = arith.cmpf ogt, %6, %7 : vector<512x128xf32>
    %cst_5 = arith.constant 0.000000e+00 : f32
    %9 = vector.broadcast %cst_5 : f32 to vector<512x128xf32>
    %10 = arith.mulf %9, %6 : vector<512x128xf32>
    %11 = arith.select %8, %6, %10 : vector<512x128xi1>, vector<512x128xf32>
    %12 = arith.truncf %11 : vector<512x128xf32> to vector<512x128xbf16>
    %c0_6 = arith.constant 0 : index
    %c0_7 = arith.constant 0 : index
    %13 = vector.load %arg4[%c0_6, %c0_7] : memref<512x128xbf16, #tpu.memory_space<vmem>>, vector<512x128xbf16>
    tpu.vector_store %arg4[%c0_6, %c0_7], %12 {strides = array<i32>} : memref<512x128xbf16, #tpu.memory_space<vmem>>, vector<512x128xbf16>,
    return
  }
  func.func @transform_0(%arg0: i32) -> (i32, i32) {
    %c0_i32 = arith.constant 0 : i32
    %c0_i32_0 = arith.constant 0 : i32
    return %arg0, %c0_i32 : i32, i32
  }
  func.func @transform_1(%arg0: i32) -> (i32, i32) {
    %c0_i32 = arith.constant 0 : i32
    %c0_i32_0 = arith.constant 0 : i32
    %c0_i32_1 = arith.constant 0 : i32
    return %c0_i32, %c0_i32_0 : i32, i32
  }
  func.func @transform_2(%arg0: i32) -> (i32, i32) {
    %c0_i32 = arith.constant 0 : i32
    %c0_i32_0 = arith.constant 0 : i32
    %c0_i32_1 = arith.constant 0 : i32
    return %c0_i32, %c0_i32_0 : i32, i32
  }
  func.func @transform_3(%arg0: i32) -> (i32, i32) {
    %c0_i32 = arith.constant 0 : i32
    %c0_i32_0 = arith.constant 0 : i32
    return %arg0, %c0_i32 : i32, i32
  }
}

module attributes {stable_mosaic.version = 11 : i64} {
  func.func @_gemm_stats_kernel(%arg0: i32, %arg1: memref<512x256xbf16, #tpu.memory_space<vmem>>, %arg2: memref<256x128xbf16, #tpu.memory_space<vmem>>, %arg3: memref<1x128xf32, #tpu.memory_space<vmem>>, %arg4: memref<512x128xf32, #tpu.memory_space<vmem>>, %arg5: memref<1x2x128xf32, #tpu.memory_space<vmem>>) attributes {dimension_semantics = [#tpu.dimension_semantics<parallel>], iteration_bounds = array<i64: 2>, scalar_prefetch = 0 : i64, scratch_operands = 0 : i64, tpu.core_type = #tpu.core_type<tc>, window_params = [{transform_indices = @transform_0, window_bounds = array<i64: 512, 256>}, {pipeline_mode = #tpu.pipeline_mode<synchronous>, transform_indices = @transform_1, window_bounds = array<i64: 256, 128>}, {pipeline_mode = #tpu.pipeline_mode<synchronous>, transform_indices = @transform_2, window_bounds = array<i64: 1, 128>}, {transform_indices = @transform_3, window_bounds = array<i64: 512, 128>}, {transform_indices = @transform_4, window_bounds = array<i64: 1, 2, 128>}]} {
    %c0 = arith.constant 0 : index
    %c0_0 = arith.constant 0 : index
    %0 = vector.load %arg1[%c0, %c0_0] : memref<512x256xbf16, #tpu.memory_space<vmem>>, vector<512x256xbf16>
    %c0_1 = arith.constant 0 : index
    %c0_2 = arith.constant 0 : index
    %1 = vector.load %arg2[%c0_1, %c0_2] : memref<256x128xbf16, #tpu.memory_space<vmem>>, vector<256x128xbf16>
    %cst = arith.constant dense<0.000000e+00> : vector<512x128xf32>
    %2 = tpu.matmul %0, %1, %cst {dimension_numbers = #tpu.dot_dimension_numbers<[1], [0], [0], [1], [0, 0, 1, 1], [], []>} : vector<512x256xbf16>, vector<256x128xbf16>, vector<512x128xf32> -> vector<512x128xf32>
    %c0_3 = arith.constant 0 : index
    %c0_4 = arith.constant 0 : index
    %3 = vector.load %arg3[%c0_3, %c0_4] : memref<1x128xf32, #tpu.memory_space<vmem>>, vector<1x128xf32>
    %4 = vector.broadcast %3 : vector<1x128xf32> to vector<512x128xf32>
    %5 = arith.addf %2, %4 : vector<512x128xf32>
    %c0_5 = arith.constant 0 : index
    %c0_6 = arith.constant 0 : index
    %6 = vector.load %arg4[%c0_5, %c0_6] : memref<512x128xf32, #tpu.memory_space<vmem>>, vector<512x128xf32>
    tpu.vector_store %arg4[%c0_5, %c0_6], %5 {strides = array<i32>} : memref<512x128xf32, #tpu.memory_space<vmem>>, vector<512x128xf32>,
    %c512_i32 = arith.constant 512 : i32
    %7 = arith.muli %arg0, %c512_i32 : i32
    %8 = tpu.iota {dimensions = array<i32: 0>} : vector<512x1xi32>
    %9 = vector.broadcast %7 : i32 to vector<512x1xi32>
    %10 = arith.addi %9, %8 : vector<512x1xi32>
    %c1024_i32 = arith.constant 1024 : i32
    %11 = vector.broadcast %c1024_i32 : i32 to vector<512x1xi32>
    %12 = arith.cmpi slt, %10, %11 : vector<512x1xi32>
    %13 = arith.extui %12 : vector<512x1xi1> to vector<512x1xi32>
    %14 = arith.sitofp %13 : vector<512x1xi32> to vector<512x1xf32>
    %15 = vector.broadcast %14 : vector<512x1xf32> to vector<512x128xf32>
    %16 = arith.mulf %5, %15 : vector<512x128xf32>
    %cst_7 = arith.constant dense<0.000000e+00> : vector<128xf32>
    %17 = vector.multi_reduction <add>, %16, %cst_7 [0] : vector<512x128xf32> to vector<128xf32>
    %18 = vector.shape_cast %17 : vector<128xf32> to vector<1x128xf32>
    %19 = arith.mulf %16, %16 : vector<512x128xf32>
    %cst_8 = arith.constant dense<0.000000e+00> : vector<128xf32>
    %20 = vector.multi_reduction <add>, %19, %cst_8 [0] : vector<512x128xf32> to vector<128xf32>
    %21 = vector.shape_cast %20 : vector<128xf32> to vector<1x128xf32>
    %22 = tpu.concatenate %18, %21 in 0 : vector<1x128xf32>, vector<1x128xf32> -> vector<2x128xf32>
    %23 = vector.shape_cast %22 : vector<2x128xf32> to vector<1x2x128xf32>
    %c0_9 = arith.constant 0 : index
    %c0_10 = arith.constant 0 : index
    %c0_11 = arith.constant 0 : index
    %24 = vector.load %arg5[%c0_9, %c0_10, %c0_11] : memref<1x2x128xf32, #tpu.memory_space<vmem>>, vector<1x2x128xf32>
    tpu.vector_store %arg5[%c0_9, %c0_10, %c0_11], %23 {strides = array<i32>} : memref<1x2x128xf32, #tpu.memory_space<vmem>>, vector<1x2x128xf32>,
    return
  }
  func.func @transform_0(%arg0: i32) -> (i32, i32) {
    %c0_i32 = arith.constant 0 : i32
    %c0_i32_0 = arith.constant 0 : i32
    return %arg0, %c0_i32 : i32, i32
  }
  func.func @transform_1(%arg0: i32) -> (i32, i32) {
    %c0_i32 = arith.constant 0 : i32
    %c0_i32_0 = arith.constant 0 : i32
    %c0_i32_1 = arith.constant 0 : i32
    return %c0_i32, %c0_i32_0 : i32, i32
  }
  func.func @transform_2(%arg0: i32) -> (i32, i32) {
    %c0_i32 = arith.constant 0 : i32
    %c0_i32_0 = arith.constant 0 : i32
    %c0_i32_1 = arith.constant 0 : i32
    return %c0_i32, %c0_i32_0 : i32, i32
  }
  func.func @transform_3(%arg0: i32) -> (i32, i32) {
    %c0_i32 = arith.constant 0 : i32
    %c0_i32_0 = arith.constant 0 : i32
    return %arg0, %c0_i32 : i32, i32
  }
  func.func @transform_4(%arg0: i32) -> (i32, i32, i32) {
    %c0_i32 = arith.constant 0 : i32
    %c0_i32_0 = arith.constant 0 : i32
    %c0_i32_1 = arith.constant 0 : i32
    return %arg0, %c0_i32, %c0_i32_0 : i32, i32, i32
  }
}

module attributes {stable_mosaic.version = 11 : i64} {
  func.func @_bn_act_kernel(%arg0: i32, %arg1: memref<512x128xf32, #tpu.memory_space<vmem>>, %arg2: memref<1x128xf32, #tpu.memory_space<vmem>>, %arg3: memref<1x128xf32, #tpu.memory_space<vmem>>, %arg4: memref<512x128xf32, #tpu.memory_space<vmem>>) attributes {dimension_semantics = [#tpu.dimension_semantics<parallel>], iteration_bounds = array<i64: 2>, scalar_prefetch = 0 : i64, scratch_operands = 0 : i64, tpu.core_type = #tpu.core_type<tc>, window_params = [{transform_indices = @transform_0, window_bounds = array<i64: 512, 128>}, {pipeline_mode = #tpu.pipeline_mode<synchronous>, transform_indices = @transform_1, window_bounds = array<i64: 1, 128>}, {pipeline_mode = #tpu.pipeline_mode<synchronous>, transform_indices = @transform_2, window_bounds = array<i64: 1, 128>}, {transform_indices = @transform_3, window_bounds = array<i64: 512, 128>}]} {
    %c0 = arith.constant 0 : index
    %c0_0 = arith.constant 0 : index
    %0 = vector.load %arg1[%c0, %c0_0] : memref<512x128xf32, #tpu.memory_space<vmem>>, vector<512x128xf32>
    %c0_1 = arith.constant 0 : index
    %c0_2 = arith.constant 0 : index
    %1 = vector.load %arg2[%c0_1, %c0_2] : memref<1x128xf32, #tpu.memory_space<vmem>>, vector<1x128xf32>
    %2 = vector.broadcast %1 : vector<1x128xf32> to vector<512x128xf32>
    %3 = arith.mulf %0, %2 : vector<512x128xf32>
    %c0_3 = arith.constant 0 : index
    %c0_4 = arith.constant 0 : index
    %4 = vector.load %arg3[%c0_3, %c0_4] : memref<1x128xf32, #tpu.memory_space<vmem>>, vector<1x128xf32>
    %5 = vector.broadcast %4 : vector<1x128xf32> to vector<512x128xf32>
    %6 = arith.addf %3, %5 : vector<512x128xf32>
    %cst = arith.constant 0.000000e+00 : f32
    %7 = vector.broadcast %cst : f32 to vector<512x128xf32>
    %8 = arith.cmpf ogt, %6, %7 : vector<512x128xf32>
    %cst_5 = arith.constant 0.00999999977 : f32
    %9 = vector.broadcast %cst_5 : f32 to vector<512x128xf32>
    %10 = arith.mulf %9, %6 : vector<512x128xf32>
    %11 = arith.select %8, %6, %10 : vector<512x128xi1>, vector<512x128xf32>
    %c0_6 = arith.constant 0 : index
    %c0_7 = arith.constant 0 : index
    %12 = vector.load %arg4[%c0_6, %c0_7] : memref<512x128xf32, #tpu.memory_space<vmem>>, vector<512x128xf32>
    tpu.vector_store %arg4[%c0_6, %c0_7], %11 {strides = array<i32>} : memref<512x128xf32, #tpu.memory_space<vmem>>, vector<512x128xf32>,
    return
  }
  func.func @transform_0(%arg0: i32) -> (i32, i32) {
    %c0_i32 = arith.constant 0 : i32
    %c0_i32_0 = arith.constant 0 : i32
    return %arg0, %c0_i32 : i32, i32
  }
  func.func @transform_1(%arg0: i32) -> (i32, i32) {
    %c0_i32 = arith.constant 0 : i32
    %c0_i32_0 = arith.constant 0 : i32
    %c0_i32_1 = arith.constant 0 : i32
    return %c0_i32, %c0_i32_0 : i32, i32
  }
  func.func @transform_2(%arg0: i32) -> (i32, i32) {
    %c0_i32 = arith.constant 0 : i32
    %c0_i32_0 = arith.constant 0 : i32
    %c0_i32_1 = arith.constant 0 : i32
    return %c0_i32, %c0_i32_0 : i32, i32
  }
  func.func @transform_3(%arg0: i32) -> (i32, i32) {
    %c0_i32 = arith.constant 0 : i32
    %c0_i32_0 = arith.constant 0 : i32
    return %arg0, %c0_i32 : i32, i32
  }
}

</mosaic_0001>

<llo_original>
// kernel: double_conv_pallas.5
$region0: #{double_conv_pallas.5}
  #allocation0 [shape = 'u32[]', space=smem, size = 0x4, offset = 0x4, fixed_abs, tag = 'smem constant byte address 0x4 - core index']
  #allocation1 [shape = 'u32[72,128]{1,0:T(1,128)}', space=vmem, size = 0x9000, scoped, tag = 'internal scratch']
  %s0 = inlined_call_operand.vmem [shape: f32[1024,128], index: 0, kind: input, shape index: {}]
  %s1 = inlined_call_operand.vmem [shape: f32[1,128], index: 1, kind: input, shape index: {}]
  %s2 = inlined_call_operand.vmem [shape: f32[1,128], index: 2, kind: input, shape index: {}]
  %s3 = inlined_call_operand.vmem [shape: bf16[1024,128], index: 3, kind: output, shape index: {}]
  %s4 = sld [smem:[#allocation0]]
  $region45: #{double_conv_pallas.5} parent=0
    _
  %s6 = ssub.s32 1, %s4
  %s7 = scalar_select 0, %s6, %s4
  loop: start=0, step=1, limit=4
  $region2: #{double_conv_pallas.5} parent=0 // loop_pre_header
    _
  $region3: #{double_conv_pallas.5} parent=0 // loop_header
    %s9 = sphi 0, %s13
    %p10 = scmp.ge.s32.totalorder %s9, 4
    %s19 = sphi 0, %s21
    %s22 = sphi 0, %s19
    %s23 = sphi 0, %s22
    %s39 = sphi 0, %s23
    %s43 = sphi 0, %s43
    %s45 = sphi 0, %s43
    %s46 = sphi 0, %s45
    %s60 = sphi 0, %s46
    %s64 = sphi 0, %s64
    %s66 = sphi 0, %s64
    %s67 = sphi 0, %s66
    %s81 = sphi 0, %s67
    %s87 = sphi 0, %s89
    %s90 = sphi 0, %s87
    %s91 = sphi 0, %s90
    %s107 = sphi 0, %s91
  $region4: #{double_conv_pallas.5} parent=0 // loop_header_branch
    %12 = sbr.rel (%p10) target = $region8
  $region5: #{double_conv_pallas.5} parent=0 // loop_body
    %s14 = ssub.s32 %s9, 1
    %s15 = ssub.s32 %s9, 2
    %s16 = sadd.s32 %s9, 1
    %s17 = ssub.s32 %s9, %s16
    %p18 = scmp.eq.s32.totalorder %s17, 0
    %s20 = sadd.s32 %s19, 1
    %s21 = scalar_select %p18, %s19, %s20
    %p24 = pneg %p18
    %p25 = scmp.eq.s32.totalorder %s9, 1
    %p26 = por %p24, %p25
    %p27 = scmp.ne.s32.totalorder %s19, %s22
    %p28 = scmp.eq.s32.totalorder %s9, 0
    %p29 = por %p27, %p28
    %p30 = scmp.ne.s32.totalorder %s19, %s22
    %p31 = scmp.eq.s32.totalorder %s14, 1
    %p32 = por %p30, %p31
    %p33 = scmp.ne.s32.totalorder %s22, %s23
    %p34 = scmp.eq.s32.totalorder %s14, 0
    %p35 = por %p33, %p34
    %p36 = scmp.ne.s32.totalorder %s22, %s23
    %p37 = scmp.eq.s32.totalorder %s15, 1
    %p38 = por %p36, %p37
    %p40 = scmp.ne.s32.totalorder %s23, %s39
    %p41 = scmp.eq.s32.totalorder %s15, 0
    %p42 = por %p40, %p41
    %s44 = sadd.s32 %s43, 1
    %p47 = scmp.eq.s32.totalorder %s9, 1
    %p48 = scmp.ne.s32.totalorder %s43, %s45
    %p49 = scmp.eq.s32.totalorder %s9, 0
    %p50 = por %p48, %p49
    %p51 = scmp.ne.s32.totalorder %s43, %s45
    %p52 = scmp.eq.s32.totalorder %s14, 1
    %p53 = por %p51, %p52
    %p54 = scmp.ne.s32.totalorder %s45, %s46
    %p55 = scmp.eq.s32.totalorder %s14, 0
    %p56 = por %p54, %p55
    %p57 = scmp.ne.s32.totalorder %s45, %s46
    %p58 = scmp.eq.s32.totalorder %s15, 1
    %p59 = por %p57, %p58
    %p61 = scmp.ne.s32.totalorder %s46, %s60
    %p62 = scmp.eq.s32.totalorder %s15, 0
    %p63 = por %p61, %p62
    %s65 = sadd.s32 %s64, 1
    %p68 = scmp.eq.s32.totalorder %s9, 1
    %p69 = scmp.ne.s32.totalorder %s64, %s66
    %p70 = scmp.eq.s32.totalorder %s9, 0
    %p71 = por %p69, %p70
    %p72 = scmp.ne.s32.totalorder %s64, %s66
    %p73 = scmp.eq.s32.totalorder %s14, 1
    %p74 = por %p72, %p73
    %p75 = scmp.ne.s32.totalorder %s66, %s67
    %p76 = scmp.eq.s32.totalorder %s14, 0
    %p77 = por %p75, %p76
    %p78 = scmp.ne.s32.totalorder %s66, %s67
    %p79 = scmp.eq.s32.totalorder %s15, 1
    %p80 = por %p78, %p79
    %p82 = scmp.ne.s32.totalorder %s67, %s81
    %p83 = scmp.eq.s32.totalorder %s15, 0
    %p84 = por %p82, %p83
    %s85 = ssub.s32 %s9, %s16
    %p86 = scmp.eq.s32.totalorder %s85, 0
    %s88 = sadd.s32 %s87, 1
    %s89 = scalar_select %p86, %s87, %s88
    %p92 = pneg %p86
    %p93 = scmp.eq.s32.totalorder %s9, 1
    %p94 = por %p92, %p93
    %p95 = scmp.ne.s32.totalorder %s87, %s90
    %p96 = scmp.eq.s32.totalorder %s9, 0
    %p97 = por %p95, %p96
    %p98 = scmp.ne.s32.totalorder %s87, %s90
    %p99 = scmp.eq.s32.totalorder %s14, 1
    %p100 = por %p98, %p99
    %p101 = scmp.ne.s32.totalorder %s90, %s91
    %p102 = scmp.eq.s32.totalorder %s14, 0
    %p103 = por %p101, %p102
    %p104 = scmp.ne.s32.totalorder %s90, %s91
    %p105 = scmp.eq.s32.totalorder %s15, 1
    %p106 = por %p104, %p105
    %p108 = scmp.ne.s32.totalorder %s91, %s107
    %p109 = scmp.eq.s32.totalorder %s15, 0
    %p110 = por %p108, %p109
    %p111 = scmp.le.s32.totalorder 1, %s9
    %p112 = scmp.lt.s32.totalorder %s9, 3
    %p113 = pnand %p111, %p112
    %p114 = pneg %p113
    // Predicated region
    $region9: #{double_conv_pallas.5} parent=5 // pred_check
      _
    $region10: #{double_conv_pallas.5} parent=5 // pred_check_branch
      %116 = sbr.rel (%p113) target = $region12
    $region11: #{double_conv_pallas.5} parent=5 // pred_region
      %s117 = ssub.s32 %s9, 1
      // Predicated region
      $region13: #{double_conv_pallas.5} parent=11 // pred_check
        %p118 = pneg %p56
      $region14: #{double_conv_pallas.5} parent=11 // pred_check_branch
        %120 = sbr.rel (%p118) target = $region16
      $region15: #{double_conv_pallas.5} parent=11 // pred_region
        _
      $region16: #{double_conv_pallas.5} parent=11 // pred_fallthru
        _
      // Predicated region
      $region17: #{double_conv_pallas.5} parent=11 // pred_check
        %p121 = pneg %p77
      $region18: #{double_conv_pallas.5} parent=11 // pred_check_branch
        %123 = sbr.rel (%p121) target = $region20
      $region19: #{double_conv_pallas.5} parent=11 // pred_region
        _
      $region20: #{double_conv_pallas.5} parent=11 // pred_fallthru
        _
    $region12: #{double_conv_pallas.5} parent=5 // pred_fallthru
      _
    %p124 = scmp.lt.s32.totalorder %s9, 2
    // Predicated region
    $region21: #{double_conv_pallas.5} parent=5 // pred_check
      %p125 = pneg %p124
    $region22: #{double_conv_pallas.5} parent=5 // pred_check_branch
      %127 = sbr.rel (%p125) target = $region24
    $region23: #{double_conv_pallas.5} parent=5 // pred_region
      // Predicated region
      $region25: #{double_conv_pallas.5} parent=23 // pred_check
        %p128 = pneg %p29
      $region26: #{double_conv_pallas.5} parent=23 // pred_check_branch
        %130 = sbr.rel (%p128) target = $region28
      $region27: #{double_conv_pallas.5} parent=23 // pred_region
        %s131 = smul.u32 64, %s9
        %p132 = scmp.lt.s32.totalorder %s131, 127
        %s133 = scalar_select %p132, %s131, 127
        %s134 = smul.addr %s133, 8
        %s135 = scalar_lea.vmem %s0, %s134
        %s136 = smul.u32 64, %s9
      $region28: #{double_conv_pallas.5} parent=23 // pred_fallthru
        _
    $region24: #{double_conv_pallas.5} parent=5 // pred_fallthru
      _
    %p137 = scmp.le.s32.totalorder 1, %s9
    %p138 = scmp.lt.s32.totalorder %s9, 3
    %p139 = pnand %p137, %p138
    %p140 = pneg %p139
    // Predicated region
    $region29: #{double_conv_pallas.5} parent=5 // pred_check
      _
    $region30: #{double_conv_pallas.5} parent=5 // pred_check_branch
      %142 = sbr.rel (%p139) target = $region32
    $region31: #{double_conv_pallas.5} parent=5 // pred_region
      %s143 = ssub.s32 %s9, 1
      %s144 = smul.u32 64, %s14
      %p145 = scmp.lt.s32.totalorder %s144, 127
      %s146 = scalar_select %p145, %s144, 127
      %s147 = smul.addr %s146, 8
      %s148 = scalar_lea.vmem %s0, %s147
      %p149 = pneg %p35
      %p150 = pneg %p32
      %p151 = pneg %p56
      %p152 = pneg %p53
      %p153 = pneg %p77
      %p154 = pneg %p74
      %p155 = pneg %p103
      %p156 = pneg %p100
      %s157 = smul.u32 64, %s14
      %p158 = scmp.lt.s32.totalorder %s157, 127
      %s159 = scalar_select %p158, %s157, 127
      %s160 = smul.addr %s159, 4
      %s161 = scalar_lea.vmem %s3, %s160
      %s162 = smul.u32 64, %s14
      %p163 = scmp.lt.s32.totalorder %s162, 127
      %s164 = scalar_select %p163, %s162, 127
      %s165 = smul.addr %s164, 8
      %s166 = scalar_lea.vmem %s0, %s165
      %s167 = smul.u32 64, %s14
      %s168 = smul.u32 64, %s14
      %p169 = scmp.lt.s32.totalorder %s168, 127
      %s170 = scalar_select %p169, %s168, 127
      %s171 = smul.addr %s170, 4
      %s172 = scalar_lea.vmem %s3, %s171
      %s173 = smul.u32 64, %s14
      %v174 = vld [vmem:[%s166] sm:$0xff]
      %v175 = vld [vmem:[%s166 + $0x8] sm:$0xff]
      %v176 = vld [vmem:[%s166 + $0x10] sm:$0xff]
      %v177 = vld [vmem:[%s166 + $0x18] sm:$0xff]
      %v178 = vld [vmem:[%s166 + $0x20] sm:$0xff]
      %v179 = vld [vmem:[%s166 + $0x28] sm:$0xff]
      %v180 = vld [vmem:[%s166 + $0x30] sm:$0xff]
      %v181 = vld [vmem:[%s166 + $0x38] sm:$0xff]
      %v182 = vld [vmem:[%s166 + $0x40] sm:$0xff]
      %v183 = vld [vmem:[%s166 + $0x48] sm:$0xff]
      %v184 = vld [vmem:[%s166 + $0x50] sm:$0xff]
      %v185 = vld [vmem:[%s166 + $0x58] sm:$0xff]
      %v186 = vld [vmem:[%s166 + $0x60] sm:$0xff]
      %v187 = vld [vmem:[%s166 + $0x68] sm:$0xff]
      %v188 = vld [vmem:[%s166 + $0x70] sm:$0xff]
      %v189 = vld [vmem:[%s166 + $0x78] sm:$0xff]
      %v190 = vld [vmem:[%s166 + $0x80] sm:$0xff]
      %v191 = vld [vmem:[%s166 + $0x88] sm:$0xff]
      %v192 = vld [vmem:[%s166 + $0x90] sm:$0xff]
      %v193 = vld [vmem:[%s166 + $0x98] sm:$0xff]
      %v194 = vld [vmem:[%s166 + $0xa0] sm:$0xff]
      %v195 = vld [vmem:[%s166 + $0xa8] sm:$0xff]
      %v196 = vld [vmem:[%s166 + $0xb0] sm:$0xff]
      %v197 = vld [vmem:[%s166 + $0xb8] sm:$0xff]
      %v198 = vld [vmem:[%s166 + $0xc0] sm:$0xff]
      %v199 = vld [vmem:[%s166 + $0xc8] sm:$0xff]
      %v200 = vld [vmem:[%s166 + $0xd0] sm:$0xff]
      %v201 = vld [vmem:[%s166 + $0xd8] sm:$0xff]
      %v202 = vld [vmem:[%s166 + $0xe0] sm:$0xff]
      %v203 = vld [vmem:[%s166 + $0xe8] sm:$0xff]
      %v204 = vld [vmem:[%s166 + $0xf0] sm:$0xff]
      %v205 = vld [vmem:[%s166 + $0xf8] sm:$0xff]
      %v206 = vld [vmem:[%s166 + $0x100] sm:$0xff]
      %v207 = vld [vmem:[%s166 + $0x108] sm:$0xff]
      %v208 = vld [vmem:[%s166 + $0x110] sm:$0xff]
      %v209 = vld [vmem:[%s166 + $0x118] sm:$0xff]
      %v210 = vld [vmem:[%s166 + $0x120] sm:$0xff]
      %v211 = vld [vmem:[%s166 + $0x128] sm:$0xff]
      %v212 = vld [vmem:[%s166 + $0x130] sm:$0xff]
      %v213 = vld [vmem:[%s166 + $0x138] sm:$0xff]
      %v214 = vld [vmem:[%s166 + $0x140] sm:$0xff]
      %v215 = vld [vmem:[%s166 + $0x148] sm:$0xff]
      %v216 = vld [vmem:[%s166 + $0x150] sm:$0xff]
      %v217 = vld [vmem:[%s166 + $0x158] sm:$0xff]
      %v218 = vld [vmem:[%s166 + $0x160] sm:$0xff]
      %v219 = vld [vmem:[%s166 + $0x168] sm:$0xff]
      %v220 = vld [vmem:[%s166 + $0x170] sm:$0xff]
      %v221 = vld [vmem:[%s166 + $0x178] sm:$0xff]
      %v222 = vld [vmem:[%s166 + $0x180] sm:$0xff]
      %v223 = vld [vmem:[%s166 + $0x188] sm:$0xff]
      %v224 = vld [vmem:[%s166 + $0x190] sm:$0xff]
      %v225 = vld [vmem:[%s166 + $0x198] sm:$0xff]
      %v226 = vld [vmem:[%s166 + $0x1a0] sm:$0xff]
      %v227 = vld [vmem:[%s166 + $0x1a8] sm:$0xff]
      %v228 = vld [vmem:[%s166 + $0x1b0] sm:$0xff]
      %v229 = vld [vmem:[%s166 + $0x1b8] sm:$0xff]
      %v230 = vld [vmem:[%s166 + $0x1c0] sm:$0xff]
      %v231 = vld [vmem:[%s166 + $0x1c8] sm:$0xff]
      %v232 = vld [vmem:[%s166 + $0x1d0] sm:$0xff]
      %v233 = vld [vmem:[%s166 + $0x1d8] sm:$0xff]
      %v234 = vld [vmem:[%s166 + $0x1e0] sm:$0xff]
      %v235 = vld [vmem:[%s166 + $0x1e8] sm:$0xff]
      %v236 = vld [vmem:[%s166 + $0x1f0] sm:$0xff]
      %v237 = vld [vmem:[%s166 + $0x1f8] sm:$0xff]
      %v238 = vld [vmem:[%s1] sm:$0x1]
      %v240 = vperm.slane %v238, 0
      %v242 = vmul.f32 %v174, %v240
      %v243 = vmul.f32 %v175, %v240
      %v244 = vmul.f32 %v176, %v240
      %v245 = vmul.f32 %v177, %v240
      %v246 = vmul.f32 %v178, %v240
      %v247 = vmul.f32 %v179, %v240
      %v248 = vmul.f32 %v180, %v240
      %v249 = vmul.f32 %v181, %v240
      %v250 = vmul.f32 %v182, %v240
      %v251 = vmul.f32 %v183, %v240
      %v252 = vmul.f32 %v184, %v240
      %v253 = vmul.f32 %v185, %v240
      %v254 = vmul.f32 %v186, %v240
      %v255 = vmul.f32 %v187, %v240
      %v256 = vmul.f32 %v188, %v240
      %v257 = vmul.f32 %v189, %v240
      %v258 = vmul.f32 %v190, %v240
      %v259 = vmul.f32 %v191, %v240
      %v260 = vmul.f32 %v192, %v240
      %v261 = vmul.f32 %v193, %v240
      %v262 = vmul.f32 %v194, %v240
      %v263 = vmul.f32 %v195, %v240
      %v264 = vmul.f32 %v196, %v240
      %v265 = vmul.f32 %v197, %v240
      %v266 = vmul.f32 %v198, %v240
      %v267 = vmul.f32 %v199, %v240
      %v268 = vmul.f32 %v200, %v240
      %v269 = vmul.f32 %v201, %v240
      %v270 = vmul.f32 %v202, %v240
      %v271 = vmul.f32 %v203, %v240
      %v272 = vmul.f32 %v204, %v240
      %v273 = vmul.f32 %v205, %v240
      %v274 = vmul.f32 %v206, %v240
      %v275 = vmul.f32 %v207, %v240
      %v276 = vmul.f32 %v208, %v240
      %v277 = vmul.f32 %v209, %v240
      %v278 = vmul.f32 %v210, %v240
      %v279 = vmul.f32 %v211, %v240
      %v280 = vmul.f32 %v212, %v240
      %v281 = vmul.f32 %v213, %v240
      %v282 = vmul.f32 %v214, %v240
      %v283 = vmul.f32 %v215, %v240
      %v284 = vmul.f32 %v216, %v240
      %v285 = vmul.f32 %v217, %v240
      %v286 = vmul.f32 %v218, %v240
      %v287 = vmul.f32 %v219, %v240
      %v288 = vmul.f32 %v220, %v240
      %v289 = vmul.f32 %v221, %v240
      %v290 = vmul.f32 %v222, %v240
      %v291 = vmul.f32 %v223, %v240
      %v292 = vmul.f32 %v224, %v240
      %v293 = vmul.f32 %v225, %v240
      %v294 = vmul.f32 %v226, %v240
      %v295 = vmul.f32 %v227, %v240
      %v296 = vmul.f32 %v228, %v240
      %v297 = vmul.f32 %v229, %v240
      %v298 = vmul.f32 %v230, %v240
      %v299 = vmul.f32 %v231, %v240
      %v300 = vmul.f32 %v232, %v240
      %v301 = vmul.f32 %v233, %v240
      %v302 = vmul.f32 %v234, %v240
      %v303 = vmul.f32 %v235, %v240
      %v304 = vmul.f32 %v236, %v240
      %v305 = vmul.f32 %v237, %v240
      %v306 = vld [vmem:[%s2] sm:$0x1]
      %v308 = vperm.slane %v306, 0
      %v310 = vadd.f32 %v242, %v308
      %v311 = vadd.f32 %v243, %v308
      %v312 = vadd.f32 %v244, %v308
      %v313 = vadd.f32 %v245, %v308
      %v314 = vadd.f32 %v246, %v308
      %v315 = vadd.f32 %v247, %v308
      %v316 = vadd.f32 %v248, %v308
      %v317 = vadd.f32 %v249, %v308
      %v318 = vadd.f32 %v250, %v308
      %v319 = vadd.f32 %v251, %v308
      %v320 = vadd.f32 %v252, %v308
      %v321 = vadd.f32 %v253, %v308
      %v322 = vadd.f32 %v254, %v308
      %v323 = vadd.f32 %v255, %v308
      %v324 = vadd.f32 %v256, %v308
      %v325 = vadd.f32 %v257, %v308
      %v326 = vadd.f32 %v258, %v308
      %v327 = vadd.f32 %v259, %v308
      %v328 = vadd.f32 %v260, %v308
      %v329 = vadd.f32 %v261, %v308
      %v330 = vadd.f32 %v262, %v308
      %v331 = vadd.f32 %v263, %v308
      %v332 = vadd.f32 %v264, %v308
      %v333 = vadd.f32 %v265, %v308
      %v334 = vadd.f32 %v266, %v308
      %v335 = vadd.f32 %v267, %v308
      %v336 = vadd.f32 %v268, %v308
      %v337 = vadd.f32 %v269, %v308
      %v338 = vadd.f32 %v270, %v308
      %v339 = vadd.f32 %v271, %v308
      %v340 = vadd.f32 %v272, %v308
      %v341 = vadd.f32 %v273, %v308
      %v342 = vadd.f32 %v274, %v308
      %v343 = vadd.f32 %v275, %v308
      %v344 = vadd.f32 %v276, %v308
      %v345 = vadd.f32 %v277, %v308
      %v346 = vadd.f32 %v278, %v308
      %v347 = vadd.f32 %v279, %v308
      %v348 = vadd.f32 %v280, %v308
      %v349 = vadd.f32 %v281, %v308
      %v350 = vadd.f32 %v282, %v308
      %v351 = vadd.f32 %v283, %v308
      %v352 = vadd.f32 %v284, %v308
      %v353 = vadd.f32 %v285, %v308
      %v354 = vadd.f32 %v286, %v308
      %v355 = vadd.f32 %v287, %v308
      %v356 = vadd.f32 %v288, %v308
      %v357 = vadd.f32 %v289, %v308
      %v358 = vadd.f32 %v290, %v308
      %v359 = vadd.f32 %v291, %v308
      %v360 = vadd.f32 %v292, %v308
      %v361 = vadd.f32 %v293, %v308
      %v362 = vadd.f32 %v294, %v308
      %v363 = vadd.f32 %v295, %v308
      %v364 = vadd.f32 %v296, %v308
      %v365 = vadd.f32 %v297, %v308
      %v366 = vadd.f32 %v298, %v308
      %v367 = vadd.f32 %v299, %v308
      %v368 = vadd.f32 %v300, %v308
      %v369 = vadd.f32 %v301, %v308
      %v370 = vadd.f32 %v302, %v308
      %v371 = vadd.f32 %v303, %v308
      %v372 = vadd.f32 %v304, %v308
      %v373 = vadd.f32 %v305, %v308
      %vm374 = vcmp.gt.f32.partialorder %v310, 0.0
      %vm375 = vcmp.gt.f32.partialorder %v311, 0.0
      %vm376 = vcmp.gt.f32.partialorder %v312, 0.0
      %vm377 = vcmp.gt.f32.partialorder %v313, 0.0
      %vm378 = vcmp.gt.f32.partialorder %v314, 0.0
      %vm379 = vcmp.gt.f32.partialorder %v315, 0.0
      %vm380 = vcmp.gt.f32.partialorder %v316, 0.0
      %vm381 = vcmp.gt.f32.partialorder %v317, 0.0
      %vm382 = vcmp.gt.f32.partialorder %v318, 0.0
      %vm383 = vcmp.gt.f32.partialorder %v319, 0.0
      %vm384 = vcmp.gt.f32.partialorder %v320, 0.0
      %vm385 = vcmp.gt.f32.partialorder %v321, 0.0
      %vm386 = vcmp.gt.f32.partialorder %v322, 0.0
      %vm387 = vcmp.gt.f32.partialorder %v323, 0.0
      %vm388 = vcmp.gt.f32.partialorder %v324, 0.0
      %vm389 = vcmp.gt.f32.partialorder %v325, 0.0
      %vm390 = vcmp.gt.f32.partialorder %v326, 0.0
      %vm391 = vcmp.gt.f32.partialorder %v327, 0.0
      %vm392 = vcmp.gt.f32.partialorder %v328, 0.0
      %vm393 = vcmp.gt.f32.partialorder %v329, 0.0
      %vm394 = vcmp.gt.f32.partialorder %v330, 0.0
      %vm395 = vcmp.gt.f32.partialorder %v331, 0.0
      %vm396 = vcmp.gt.f32.partialorder %v332, 0.0
      %vm397 = vcmp.gt.f32.partialorder %v333, 0.0
      %vm398 = vcmp.gt.f32.partialorder %v334, 0.0
      %vm399 = vcmp.gt.f32.partialorder %v335, 0.0
      %vm400 = vcmp.gt.f32.partialorder %v336, 0.0
      %vm401 = vcmp.gt.f32.partialorder %v337, 0.0
      %vm402 = vcmp.gt.f32.partialorder %v338, 0.0
      %vm403 = vcmp.gt.f32.partialorder %v339, 0.0
      %vm404 = vcmp.gt.f32.partialorder %v340, 0.0
      %vm405 = vcmp.gt.f32.partialorder %v341, 0.0
      %vm406 = vcmp.gt.f32.partialorder %v342, 0.0
      %vm407 = vcmp.gt.f32.partialorder %v343, 0.0
      %vm408 = vcmp.gt.f32.partialorder %v344, 0.0
      %vm409 = vcmp.gt.f32.partialorder %v345, 0.0
      %vm410 = vcmp.gt.f32.partialorder %v346, 0.0
      %vm411 = vcmp.gt.f32.partialorder %v347, 0.0
      %vm412 = vcmp.gt.f32.partialorder %v348, 0.0
      %vm413 = vcmp.gt.f32.partialorder %v349, 0.0
      %vm414 = vcmp.gt.f32.partialorder %v350, 0.0
      %vm415 = vcmp.gt.f32.partialorder %v351, 0.0
      %vm416 = vcmp.gt.f32.partialorder %v352, 0.0
      %vm417 = vcmp.gt.f32.partialorder %v353, 0.0
      %vm418 = vcmp.gt.f32.partialorder %v354, 0.0
      %vm419 = vcmp.gt.f32.partialorder %v355, 0.0
      %vm420 = vcmp.gt.f32.partialorder %v356, 0.0
      %vm421 = vcmp.gt.f32.partialorder %v357, 0.0
      %vm422 = vcmp.gt.f32.partialorder %v358, 0.0
      %vm423 = vcmp.gt.f32.partialorder %v359, 0.0
      %vm424 = vcmp.gt.f32.partialorder %v360, 0.0
      %vm425 = vcmp.gt.f32.partialorder %v361, 0.0
      %vm426 = vcmp.gt.f32.partialorder %v362, 0.0
      %vm427 = vcmp.gt.f32.partialorder %v363, 0.0
      %vm428 = vcmp.gt.f32.partialorder %v364, 0.0
      %vm429 = vcmp.gt.f32.partialorder %v365, 0.0
      %vm430 = vcmp.gt.f32.partialorder %v366, 0.0
      %vm431 = vcmp.gt.f32.partialorder %v367, 0.0
      %vm432 = vcmp.gt.f32.partialorder %v368, 0.0
      %vm433 = vcmp.gt.f32.partialorder %v369, 0.0
      %vm434 = vcmp.gt.f32.partialorder %v370, 0.0
      %vm435 = vcmp.gt.f32.partialorder %v371, 0.0
      %vm436 = vcmp.gt.f32.partialorder %v372, 0.0
      %vm437 = vcmp.gt.f32.partialorder %v373, 0.0
      %v438 = vmul.f32 %v310, 0.0
      %v439 = vmul.f32 %v311, 0.0
      %v440 = vmul.f32 %v312, 0.0
      %v441 = vmul.f32 %v313, 0.0
      %v442 = vmul.f32 %v314, 0.0
      %v443 = vmul.f32 %v315, 0.0
      %v444 = vmul.f32 %v316, 0.0
      %v445 = vmul.f32 %v317, 0.0
      %v446 = vmul.f32 %v318, 0.0
      %v447 = vmul.f32 %v319, 0.0
      %v448 = vmul.f32 %v320, 0.0
      %v449 = vmul.f32 %v321, 0.0
      %v450 = vmul.f32 %v322, 0.0
      %v451 = vmul.f32 %v323, 0.0
      %v452 = vmul.f32 %v324, 0.0
      %v453 = vmul.f32 %v325, 0.0
      %v454 = vmul.f32 %v326, 0.0
      %v455 = vmul.f32 %v327, 0.0
      %v456 = vmul.f32 %v328, 0.0
      %v457 = vmul.f32 %v329, 0.0
      %v458 = vmul.f32 %v330, 0.0
      %v459 = vmul.f32 %v331, 0.0
      %v460 = vmul.f32 %v332, 0.0
      %v461 = vmul.f32 %v333, 0.0
      %v462 = vmul.f32 %v334, 0.0
      %v463 = vmul.f32 %v335, 0.0
      %v464 = vmul.f32 %v336, 0.0
      %v465 = vmul.f32 %v337, 0.0
      %v466 = vmul.f32 %v338, 0.0
      %v467 = vmul.f32 %v339, 0.0
      %v468 = vmul.f32 %v340, 0.0
      %v469 = vmul.f32 %v341, 0.0
      %v470 = vmul.f32 %v342, 0.0
      %v471 = vmul.f32 %v343, 0.0
      %v472 = vmul.f32 %v344, 0.0
      %v473 = vmul.f32 %v345, 0.0
      %v474 = vmul.f32 %v346, 0.0
      %v475 = vmul.f32 %v347, 0.0
      %v476 = vmul.f32 %v348, 0.0
      %v477 = vmul.f32 %v349, 0.0
      %v478 = vmul.f32 %v350, 0.0
      %v479 = vmul.f32 %v351, 0.0
      %v480 = vmul.f32 %v352, 0.0
      %v481 = vmul.f32 %v353, 0.0
      %v482 = vmul.f32 %v354, 0.0
      %v483 = vmul.f32 %v355, 0.0
      %v484 = vmul.f32 %v356, 0.0
      %v485 = vmul.f32 %v357, 0.0
      %v486 = vmul.f32 %v358, 0.0
      %v487 = vmul.f32 %v359, 0.0
      %v488 = vmul.f32 %v360, 0.0
      %v489 = vmul.f32 %v361, 0.0
      %v490 = vmul.f32 %v362, 0.0
      %v491 = vmul.f32 %v363, 0.0
      %v492 = vmul.f32 %v364, 0.0
      %v493 = vmul.f32 %v365, 0.0
      %v494 = vmul.f32 %v366, 0.0
      %v495 = vmul.f32 %v367, 0.0
      %v496 = vmul.f32 %v368, 0.0
      %v497 = vmul.f32 %v369, 0.0
      %v498 = vmul.f32 %v370, 0.0
      %v499 = vmul.f32 %v371, 0.0
      %v500 = vmul.f32 %v372, 0.0
      %v501 = vmul.f32 %v373, 0.0
      %v502 = vsel %vm374, %v310, %v438
      %v503 = vsel %vm375, %v311, %v439
      %v504 = vsel %vm376, %v312, %v440
      %v505 = vsel %vm377, %v313, %v441
      %v506 = vsel %vm378, %v314, %v442
      %v507 = vsel %vm379, %v315, %v443
      %v508 = vsel %vm380, %v316, %v444
      %v509 = vsel %vm381, %v317, %v445
      %v510 = vsel %vm382, %v318, %v446
      %v511 = vsel %vm383, %v319, %v447
      %v512 = vsel %vm384, %v320, %v448
      %v513 = vsel %vm385, %v321, %v449
      %v514 = vsel %vm386, %v322, %v450
      %v515 = vsel %vm387, %v323, %v451
      %v516 = vsel %vm388, %v324, %v452
      %v517 = vsel %vm389, %v325, %v453
      %v518 = vsel %vm390, %v326, %v454
      %v519 = vsel %vm391, %v327, %v455
      %v520 = vsel %vm392, %v328, %v456
      %v521 = vsel %vm393, %v329, %v457
      %v522 = vsel %vm394, %v330, %v458
      %v523 = vsel %vm395, %v331, %v459
      %v524 = vsel %vm396, %v332, %v460
      %v525 = vsel %vm397, %v333, %v461
      %v526 = vsel %vm398, %v334, %v462
      %v527 = vsel %vm399, %v335, %v463
      %v528 = vsel %vm400, %v336, %v464
      %v529 = vsel %vm401, %v337, %v465
      %v530 = vsel %vm402, %v338, %v466
      %v531 = vsel %vm403, %v339, %v467
      %v532 = vsel %vm404, %v340, %v468
      %v533 = vsel %vm405, %v341, %v469
      %v534 = vsel %vm406, %v342, %v470
      %v535 = vsel %vm407, %v343, %v471
      %v536 = vsel %vm408, %v344, %v472
      %v537 = vsel %vm409, %v345, %v473
      %v538 = vsel %vm410, %v346, %v474
      %v539 = vsel %vm411, %v347, %v475
      %v540 = vsel %vm412, %v348, %v476
      %v541 = vsel %vm413, %v349, %v477
      %v542 = vsel %vm414, %v350, %v478
      %v543 = vsel %vm415, %v351, %v479
      %v544 = vsel %vm416, %v352, %v480
      %v545 = vsel %vm417, %v353, %v481
      %v546 = vsel %vm418, %v354, %v482
      %v547 = vsel %vm419, %v355, %v483
      %v548 = vsel %vm420, %v356, %v484
      %v549 = vsel %vm421, %v357, %v485
      %v550 = vsel %vm422, %v358, %v486
      %v551 = vsel %vm423, %v359, %v487
      %v552 = vsel %vm424, %v360, %v488
      %v553 = vsel %vm425, %v361, %v489
      %v554 = vsel %vm426, %v362, %v490
      %v555 = vsel %vm427, %v363, %v491
      %v556 = vsel %vm428, %v364, %v492
      %v557 = vsel %vm429, %v365, %v493
      %v558 = vsel %vm430, %v366, %v494
      %v559 = vsel %vm431, %v367, %v495
      %v560 = vsel %vm432, %v368, %v496
      %v561 = vsel %vm433, %v369, %v497
      %v562 = vsel %vm434, %v370, %v498
      %v563 = vsel %vm435, %v371, %v499
      %v564 = vsel %vm436, %v372, %v500
      %v565 = vsel %vm437, %v373, %v501
      %v566 = vpack.c.bf16 %v502, %v502
      %v567 = vpack.c.bf16 %v503, %v503
      %v568 = vpack.c.bf16 %v504, %v504
      %v569 = vpack.c.bf16 %v505, %v505
      %v570 = vpack.c.bf16 %v506, %v506
      %v571 = vpack.c.bf16 %v507, %v507
      %v572 = vpack.c.bf16 %v508, %v508
      %v573 = vpack.c.bf16 %v509, %v509
      %v574 = vpack.c.bf16 %v510, %v510
      %v575 = vpack.c.bf16 %v511, %v511
      %v576 = vpack.c.bf16 %v512, %v512
      %v577 = vpack.c.bf16 %v513, %v513
      %v578 = vpack.c.bf16 %v514, %v514
      %v579 = vpack.c.bf16 %v515, %v515
      %v580 = vpack.c.bf16 %v516, %v516
      %v581 = vpack.c.bf16 %v517, %v517
      %v582 = vpack.c.bf16 %v518, %v518
      %v583 = vpack.c.bf16 %v519, %v519
      %v584 = vpack.c.bf16 %v520, %v520
      %v585 = vpack.c.bf16 %v521, %v521
      %v586 = vpack.c.bf16 %v522, %v522
      %v587 = vpack.c.bf16 %v523, %v523
      %v588 = vpack.c.bf16 %v524, %v524
      %v589 = vpack.c.bf16 %v525, %v525
      %v590 = vpack.c.bf16 %v526, %v526
      %v591 = vpack.c.bf16 %v527, %v527
      %v592 = vpack.c.bf16 %v528, %v528
      %v593 = vpack.c.bf16 %v529, %v529
      %v594 = vpack.c.bf16 %v530, %v530
      %v595 = vpack.c.bf16 %v531, %v531
      %v596 = vpack.c.bf16 %v532, %v532
      %v597 = vpack.c.bf16 %v533, %v533
      %v598 = vpack.c.bf16 %v534, %v534
      %v599 = vpack.c.bf16 %v535, %v535
      %v600 = vpack.c.bf16 %v536, %v536
      %v601 = vpack.c.bf16 %v537, %v537
      %v602 = vpack.c.bf16 %v538, %v538
      %v603 = vpack.c.bf16 %v539, %v539
      %v604 = vpack.c.bf16 %v540, %v540
      %v605 = vpack.c.bf16 %v541, %v541
      %v606 = vpack.c.bf16 %v542, %v542
      %v607 = vpack.c.bf16 %v543, %v543
      %v608 = vpack.c.bf16 %v544, %v544
      %v609 = vpack.c.bf16 %v545, %v545
      %v610 = vpack.c.bf16 %v546, %v546
      %v611 = vpack.c.bf16 %v547, %v547
      %v612 = vpack.c.bf16 %v548, %v548
      %v613 = vpack.c.bf16 %v549, %v549
      %v614 = vpack.c.bf16 %v550, %v550
      %v615 = vpack.c.bf16 %v551, %v551
      %v616 = vpack.c.bf16 %v552, %v552
      %v617 = vpack.c.bf16 %v553, %v553
      %v618 = vpack.c.bf16 %v554, %v554
      %v619 = vpack.c.bf16 %v555, %v555
      %v620 = vpack.c.bf16 %v556, %v556
      %v621 = vpack.c.bf16 %v557, %v557
      %v622 = vpack.c.bf16 %v558, %v558
      %v623 = vpack.c.bf16 %v559, %v559
      %v624 = vpack.c.bf16 %v560, %v560
      %v625 = vpack.c.bf16 %v561, %v561
      %v626 = vpack.c.bf16 %v562, %v562
      %v627 = vpack.c.bf16 %v563, %v563
      %v628 = vpack.c.bf16 %v564, %v564
      %v629 = vpack.c.bf16 %v565, %v565
      %630 = vst [vmem:[%s172] sm:$0xf] %v566
      %631 = vst [vmem:[%s172 + $0x4] sm:$0xf] %v567
      %632 = vst [vmem:[%s172 + $0x8] sm:$0xf] %v568
      %633 = vst [vmem:[%s172 + $0xc] sm:$0xf] %v569
      %634 = vst [vmem:[%s172 + $0x10] sm:$0xf] %v570
      %635 = vst [vmem:[%s172 + $0x14] sm:$0xf] %v571
      %636 = vst [vmem:[%s172 + $0x18] sm:$0xf] %v572
      %637 = vst [vmem:[%s172 + $0x1c] sm:$0xf] %v573
      %638 = vst [vmem:[%s172 + $0x20] sm:$0xf] %v574
      %639 = vst [vmem:[%s172 + $0x24] sm:$0xf] %v575
      %640 = vst [vmem:[%s172 + $0x28] sm:$0xf] %v576
      %641 = vst [vmem:[%s172 + $0x2c] sm:$0xf] %v577
      %642 = vst [vmem:[%s172 + $0x30] sm:$0xf] %v578
      %643 = vst [vmem:[%s172 + $0x34] sm:$0xf] %v579
      %644 = vst [vmem:[%s172 + $0x38] sm:$0xf] %v580
      %645 = vst [vmem:[%s172 + $0x3c] sm:$0xf] %v581
      %646 = vst [vmem:[%s172 + $0x40] sm:$0xf] %v582
      %647 = vst [vmem:[%s172 + $0x44] sm:$0xf] %v583
      %648 = vst [vmem:[%s172 + $0x48] sm:$0xf] %v584
      %649 = vst [vmem:[%s172 + $0x4c] sm:$0xf] %v585
      %650 = vst [vmem:[%s172 + $0x50] sm:$0xf] %v586
      %651 = vst [vmem:[%s172 + $0x54] sm:$0xf] %v587
      %652 = vst [vmem:[%s172 + $0x58] sm:$0xf] %v588
      %653 = vst [vmem:[%s172 + $0x5c] sm:$0xf] %v589
      %654 = vst [vmem:[%s172 + $0x60] sm:$0xf] %v590
      %655 = vst [vmem:[%s172 + $0x64] sm:$0xf] %v591
      %656 = vst [vmem:[%s172 + $0x68] sm:$0xf] %v592
      %657 = vst [vmem:[%s172 + $0x6c] sm:$0xf] %v593
      %658 = vst [vmem:[%s172 + $0x70] sm:$0xf] %v594
      %659 = vst [vmem:[%s172 + $0x74] sm:$0xf] %v595
      %660 = vst [vmem:[%s172 + $0x78] sm:$0xf] %v596
      %661 = vst [vmem:[%s172 + $0x7c] sm:$0xf] %v597
      %662 = vst [vmem:[%s172 + $0x80] sm:$0xf] %v598
      %663 = vst [vmem:[%s172 + $0x84] sm:$0xf] %v599
      %664 = vst [vmem:[%s172 + $0x88] sm:$0xf] %v600
      %665 = vst [vmem:[%s172 + $0x8c] sm:$0xf] %v601
      %666 = vst [vmem:[%s172 + $0x90] sm:$0xf] %v602
      %667 = vst [vmem:[%s172 + $0x94] sm:$0xf] %v603
      %668 = vst [vmem:[%s172 + $0x98] sm:$0xf] %v604
      %669 = vst [vmem:[%s172 + $0x9c] sm:$0xf] %v605
      %670 = vst [vmem:[%s172 + $0xa0] sm:$0xf] %v606
      %671 = vst [vmem:[%s172 + $0xa4] sm:$0xf] %v607
      %672 = vst [vmem:[%s172 + $0xa8] sm:$0xf] %v608
      %673 = vst [vmem:[%s172 + $0xac] sm:$0xf] %v609
      %674 = vst [vmem:[%s172 + $0xb0] sm:$0xf] %v610
      %675 = vst [vmem:[%s172 + $0xb4] sm:$0xf] %v611
      %676 = vst [vmem:[%s172 + $0xb8] sm:$0xf] %v612
      %677 = vst [vmem:[%s172 + $0xbc] sm:$0xf] %v613
      %678 = vst [vmem:[%s172 + $0xc0] sm:$0xf] %v614
      %679 = vst [vmem:[%s172 + $0xc4] sm:$0xf] %v615
      %680 = vst [vmem:[%s172 + $0xc8] sm:$0xf] %v616
      %681 = vst [vmem:[%s172 + $0xcc] sm:$0xf] %v617
      %682 = vst [vmem:[%s172 + $0xd0] sm:$0xf] %v618
      %683 = vst [vmem:[%s172 + $0xd4] sm:$0xf] %v619
      %684 = vst [vmem:[%s172 + $0xd8] sm:$0xf] %v620
      %685 = vst [vmem:[%s172 + $0xdc] sm:$0xf] %v621
      %686 = vst [vmem:[%s172 + $0xe0] sm:$0xf] %v622
      %687 = vst [vmem:[%s172 + $0xe4] sm:$0xf] %v623
      %688 = vst [vmem:[%s172 + $0xe8] sm:$0xf] %v624
      %689 = vst [vmem:[%s172 + $0xec] sm:$0xf] %v625
      %690 = vst [vmem:[%s172 + $0xf0] sm:$0xf] %v626
      %691 = vst [vmem:[%s172 + $0xf4] sm:$0xf] %v627
      %692 = vst [vmem:[%s172 + $0xf8] sm:$0xf] %v628
      %693 = vst [vmem:[%s172 + $0xfc] sm:$0xf] %v629
      %s694 = smul.u32 64, %s14
      %p695 = scmp.lt.s32.totalorder %s694, 127
      %s696 = scalar_select %p695, %s694, 127
      %s697 = smul.addr %s696, 4
      %s698 = scalar_lea.vmem %s3, %s697
      // Predicated region
      $region33: #{double_conv_pallas.5} parent=31 // pred_check
        %p699 = pneg %p100
      $region34: #{double_conv_pallas.5} parent=31 // pred_check_branch
        %701 = sbr.rel (%p699) target = $region36
      $region35: #{double_conv_pallas.5} parent=31 // pred_region
        %s702 = smul.u32 64, %s14
      $region36: #{double_conv_pallas.5} parent=31 // pred_fallthru
        _
    $region32: #{double_conv_pallas.5} parent=5 // pred_fallthru
      _
    %p703 = scmp.le.s32.totalorder 2, %s9
    // Predicated region
    $region37: #{double_conv_pallas.5} parent=5 // pred_check
      %p704 = pneg %p703
    $region38: #{double_conv_pallas.5} parent=5 // pred_check_branch
      %706 = sbr.rel (%p704) target = $region40
    $region39: #{double_conv_pallas.5} parent=5 // pred_region
      %s707 = ssub.s32 %s9, 2
      // Predicated region
      $region41: #{double_conv_pallas.5} parent=39 // pred_check
        %p708 = pneg %p106
      $region42: #{double_conv_pallas.5} parent=39 // pred_check_branch
        %710 = sbr.rel (%p708) target = $region44
      $region43: #{double_conv_pallas.5} parent=39 // pred_region
        %s711 = smul.u32 64, %s15
        %p712 = scmp.lt.s32.totalorder %s711, 127
        %s713 = scalar_select %p712, %s711, 127
        %s714 = smul.addr %s713, 4
        %s715 = scalar_lea.vmem %s3, %s714
      $region44: #{double_conv_pallas.5} parent=39 // pred_fallthru
        _
    $region40: #{double_conv_pallas.5} parent=5 // pred_fallthru
      _
  $region6: #{double_conv_pallas.5} parent=0 // loop_footer
    %s13 = sadd.s32 1, %s9
  $region7: #{double_conv_pallas.5} parent=0 // loop_footer_branch
    %8 = sbr.rel target = $region3
  $region8: #{double_conv_pallas.5} parent=0 // loop_exit
    _

// kernel: double_conv_pallas.4
$region0: #{double_conv_pallas.4}
  #allocation0 [shape = 'u32[]', space=smem, size = 0x4, offset = 0x4, fixed_abs, tag = 'smem constant byte address 0x4 - core index']
  #allocation1 [shape = 'u32[72,128]{1,0:T(1,128)}', space=vmem, size = 0x9000, scoped, tag = 'internal scratch']
  %s0 = inlined_call_operand.vmem [shape: bf16[1024,128], index: 0, kind: input, shape index: {}]
  %s1 = inlined_call_operand.vmem [shape: bf16[128,128], index: 1, kind: input, shape index: {}]
  %s2 = inlined_call_operand.vmem [shape: f32[1,128], index: 2, kind: input, shape index: {}]
  %s3 = inlined_call_operand.vmem [shape: f32[1024,128], index: 3, kind: output, shape index: {0}]
  %s4 = inlined_call_operand.vmem [shape: f32[2,2,128], index: 4, kind: output, shape index: {1}]
  %5 = xla_tuple %s3, %s4
  %s6 = sld [smem:[#allocation0]]
  $region53: #{double_conv_pallas.4} parent=0
    _
  %s8 = ssub.s32 1, %s6
  %s9 = scalar_select 0, %s8, %s6
  loop: start=0, step=1, limit=4
  $region2: #{double_conv_pallas.4} parent=0 // loop_pre_header
    _
  $region3: #{double_conv_pallas.4} parent=0 // loop_header
    %s11 = sphi 0, %s15
    %p12 = scmp.ge.s32.totalorder %s11, 4
    %s21 = sphi 0, %s23
    %s24 = sphi 0, %s21
    %s25 = sphi 0, %s24
    %s41 = sphi 0, %s25
    %s45 = sphi 0, %s45
    %s47 = sphi 0, %s45
    %s48 = sphi 0, %s47
    %s62 = sphi 0, %s48
    %s66 = sphi 0, %s66
    %s68 = sphi 0, %s66
    %s69 = sphi 0, %s68
    %s83 = sphi 0, %s69
    %s89 = sphi 0, %s91
    %s92 = sphi 0, %s89
    %s93 = sphi 0, %s92
    %s109 = sphi 0, %s93
    %s115 = sphi 0, %s117
    %s118 = sphi 0, %s115
    %s119 = sphi 0, %s118
    %s135 = sphi 0, %s119
  $region4: #{double_conv_pallas.4} parent=0 // loop_header_branch
    %14 = sbr.rel (%p12) target = $region8
  $region5: #{double_conv_pallas.4} parent=0 // loop_body
    %s16 = ssub.s32 %s11, 1
    %s17 = ssub.s32 %s11, 2
    %s18 = sadd.s32 %s11, 1
    %s19 = ssub.s32 %s11, %s18
    %p20 = scmp.eq.s32.totalorder %s19, 0
    %s22 = sadd.s32 %s21, 1
    %s23 = scalar_select %p20, %s21, %s22
    %p26 = pneg %p20
    %p27 = scmp.eq.s32.totalorder %s11, 1
    %p28 = por %p26, %p27
    %p29 = scmp.ne.s32.totalorder %s21, %s24
    %p30 = scmp.eq.s32.totalorder %s11, 0
    %p31 = por %p29, %p30
    %p32 = scmp.ne.s32.totalorder %s21, %s24
    %p33 = scmp.eq.s32.totalorder %s16, 1
    %p34 = por %p32, %p33
    %p35 = scmp.ne.s32.totalorder %s24, %s25
    %p36 = scmp.eq.s32.totalorder %s16, 0
    %p37 = por %p35, %p36
    %p38 = scmp.ne.s32.totalorder %s24, %s25
    %p39 = scmp.eq.s32.totalorder %s17, 1
    %p40 = por %p38, %p39
    %p42 = scmp.ne.s32.totalorder %s25, %s41
    %p43 = scmp.eq.s32.totalorder %s17, 0
    %p44 = por %p42, %p43
    %s46 = sadd.s32 %s45, 1
    %p49 = scmp.eq.s32.totalorder %s11, 1
    %p50 = scmp.ne.s32.totalorder %s45, %s47
    %p51 = scmp.eq.s32.totalorder %s11, 0
    %p52 = por %p50, %p51
    %p53 = scmp.ne.s32.totalorder %s45, %s47
    %p54 = scmp.eq.s32.totalorder %s16, 1
    %p55 = por %p53, %p54
    %p56 = scmp.ne.s32.totalorder %s47, %s48
    %p57 = scmp.eq.s32.totalorder %s16, 0
    %p58 = por %p56, %p57
    %p59 = scmp.ne.s32.totalorder %s47, %s48
    %p60 = scmp.eq.s32.totalorder %s17, 1
    %p61 = por %p59, %p60
    %p63 = scmp.ne.s32.totalorder %s48, %s62
    %p64 = scmp.eq.s32.totalorder %s17, 0
    %p65 = por %p63, %p64
    %s67 = sadd.s32 %s66, 1
    %p70 = scmp.eq.s32.totalorder %s11, 1
    %p71 = scmp.ne.s32.totalorder %s66, %s68
    %p72 = scmp.eq.s32.totalorder %s11, 0
    %p73 = por %p71, %p72
    %p74 = scmp.ne.s32.totalorder %s66, %s68
    %p75 = scmp.eq.s32.totalorder %s16, 1
    %p76 = por %p74, %p75
    %p77 = scmp.ne.s32.totalorder %s68, %s69
    %p78 = scmp.eq.s32.totalorder %s16, 0
    %p79 = por %p77, %p78
    %p80 = scmp.ne.s32.totalorder %s68, %s69
    %p81 = scmp.eq.s32.totalorder %s17, 1
    %p82 = por %p80, %p81
    %p84 = scmp.ne.s32.totalorder %s69, %s83
    %p85 = scmp.eq.s32.totalorder %s17, 0
    %p86 = por %p84, %p85
    %s87 = ssub.s32 %s11, %s18
    %p88 = scmp.eq.s32.totalorder %s87, 0
    %s90 = sadd.s32 %s89, 1
    %s91 = scalar_select %p88, %s89, %s90
    %p94 = pneg %p88
    %p95 = scmp.eq.s32.totalorder %s11, 1
    %p96 = por %p94, %p95
    %p97 = scmp.ne.s32.totalorder %s89, %s92
    %p98 = scmp.eq.s32.totalorder %s11, 0
    %p99 = por %p97, %p98
    %p100 = scmp.ne.s32.totalorder %s89, %s92
    %p101 = scmp.eq.s32.totalorder %s16, 1
    %p102 = por %p100, %p101
    %p103 = scmp.ne.s32.totalorder %s92, %s93
    %p104 = scmp.eq.s32.totalorder %s16, 0
    %p105 = por %p103, %p104
    %p106 = scmp.ne.s32.totalorder %s92, %s93
    %p107 = scmp.eq.s32.totalorder %s17, 1
    %p108 = por %p106, %p107
    %p110 = scmp.ne.s32.totalorder %s93, %s109
    %p111 = scmp.eq.s32.totalorder %s17, 0
    %p112 = por %p110, %p111
    %s113 = ssub.s32 %s11, %s18
    %p114 = scmp.eq.s32.totalorder %s113, 0
    %s116 = sadd.s32 %s115, 1
    %s117 = scalar_select %p114, %s115, %s116
    %p120 = pneg %p114
    %p121 = scmp.eq.s32.totalorder %s11, 1
    %p122 = por %p120, %p121
    %p123 = scmp.ne.s32.totalorder %s115, %s118
    %p124 = scmp.eq.s32.totalorder %s11, 0
    %p125 = por %p123, %p124
    %p126 = scmp.ne.s32.totalorder %s115, %s118
    %p127 = scmp.eq.s32.totalorder %s16, 1
    %p128 = por %p126, %p127
    %p129 = scmp.ne.s32.totalorder %s118, %s119
    %p130 = scmp.eq.s32.totalorder %s16, 0
    %p131 = por %p129, %p130
    %p132 = scmp.ne.s32.totalorder %s118, %s119
    %p133 = scmp.eq.s32.totalorder %s17, 1
    %p134 = por %p132, %p133
    %p136 = scmp.ne.s32.totalorder %s119, %s135
    %p137 = scmp.eq.s32.totalorder %s17, 0
    %p138 = por %p136, %p137
    %p139 = scmp.le.s32.totalorder 1, %s11
    %p140 = scmp.lt.s32.totalorder %s11, 3
    %p141 = pnand %p139, %p140
    %p142 = pneg %p141
    // Predicated region
    $region9: #{double_conv_pallas.4} parent=5 // pred_check
      _
    $region10: #{double_conv_pallas.4} parent=5 // pred_check_branch
      %144 = sbr.rel (%p141) target = $region12
    $region11: #{double_conv_pallas.4} parent=5 // pred_region
      %s145 = ssub.s32 %s11, 1
      // Predicated region
      $region13: #{double_conv_pallas.4} parent=11 // pred_check
        %p146 = pneg %p58
      $region14: #{double_conv_pallas.4} parent=11 // pred_check_branch
        %148 = sbr.rel (%p146) target = $region16
      $region15: #{double_conv_pallas.4} parent=11 // pred_region
        _
      $region16: #{double_conv_pallas.4} parent=11 // pred_fallthru
        _
      // Predicated region
      $region17: #{double_conv_pallas.4} parent=11 // pred_check
        %p149 = pneg %p79
      $region18: #{double_conv_pallas.4} parent=11 // pred_check_branch
        %151 = sbr.rel (%p149) target = $region20
      $region19: #{double_conv_pallas.4} parent=11 // pred_region
        _
      $region20: #{double_conv_pallas.4} parent=11 // pred_fallthru
        _
    $region12: #{double_conv_pallas.4} parent=5 // pred_fallthru
      _
    %p152 = scmp.lt.s32.totalorder %s11, 2
    // Predicated region
    $region21: #{double_conv_pallas.4} parent=5 // pred_check
      %p153 = pneg %p152
    $region22: #{double_conv_pallas.4} parent=5 // pred_check_branch
      %155 = sbr.rel (%p153) target = $region24
    $region23: #{double_conv_pallas.4} parent=5 // pred_region
      // Predicated region
      $region25: #{double_conv_pallas.4} parent=23 // pred_check
        %p156 = pneg %p31
      $region26: #{double_conv_pallas.4} parent=23 // pred_check_branch
        %158 = sbr.rel (%p156) target = $region28
      $region27: #{double_conv_pallas.4} parent=23 // pred_region
        %s159 = smul.u32 64, %s11
        %p160 = scmp.lt.s32.totalorder %s159, 127
        %s161 = scalar_select %p160, %s159, 127
        %s162 = smul.addr %s161, 4
        %s163 = scalar_lea.vmem %s0, %s162
        %s164 = smul.u32 64, %s11
      $region28: #{double_conv_pallas.4} parent=23 // pred_fallthru
        _
    $region24: #{double_conv_pallas.4} parent=5 // pred_fallthru
      _
    %p165 = scmp.le.s32.totalorder 1, %s11
    %p166 = scmp.lt.s32.totalorder %s11, 3
    %p167 = pnand %p165, %p166
    %p168 = pneg %p167
    // Predicated region
    $region29: #{double_conv_pallas.4} parent=5 // pred_check
      _
    $region30: #{double_conv_pallas.4} parent=5 // pred_check_branch
      %170 = sbr.rel (%p167) target = $region32
    $region31: #{double_conv_pallas.4} parent=5 // pred_region
      %s171 = ssub.s32 %s11, 1
      %s172 = smul.u32 64, %s16
      %p173 = scmp.lt.s32.totalorder %s172, 127
      %s174 = scalar_select %p173, %s172, 127
      %s175 = smul.addr %s174, 4
      %s176 = scalar_lea.vmem %s0, %s175
      %p177 = pneg %p37
      %p178 = pneg %p34
      %p179 = pneg %p58
      %p180 = pneg %p55
      %p181 = pneg %p79
      %p182 = pneg %p76
      %p183 = pneg %p105
      %p184 = pneg %p102
      %s185 = smul.u32 64, %s16
      %p186 = scmp.lt.s32.totalorder %s185, 127
      %s187 = scalar_select %p186, %s185, 127
      %s188 = smul.addr %s187, 8
      %s189 = scalar_lea.vmem %s3, %s188
      %p190 = pneg %p131
      %p191 = pneg %p128
      %p192 = scmp.lt.s32.totalorder %s16, 1
      %s193 = scalar_select %p192, %s16, 1
      %s194 = smul.addr %s193, 2
      %s195 = scalar_lea.vmem %s4, %s194
      %s196 = smul.u32 64, %s16
      %p197 = scmp.lt.s32.totalorder %s196, 127
      %s198 = scalar_select %p197, %s196, 127
      %s199 = smul.addr %s198, 4
      %s200 = scalar_lea.vmem %s0, %s199
      %s201 = smul.u32 64, %s16
      %s202 = smul.u32 64, %s16
      %p203 = scmp.lt.s32.totalorder %s202, 127
      %s204 = scalar_select %p203, %s202, 127
      %s205 = smul.addr %s204, 8
      %s206 = scalar_lea.vmem %s3, %s205
      %s207 = smul.u32 64, %s16
      %p208 = scmp.lt.s32.totalorder %s16, 1
      %s209 = scalar_select %p208, %s16, 1
      %s210 = smul.addr %s209, 2
      %s211 = scalar_lea.vmem %s4, %s210
      %v212 = vld [vmem:[%s200] sm:$0xf]
      %v213 = vld [vmem:[%s200 + $0x4] sm:$0xf]
      %v214 = vld [vmem:[%s200 + $0x8] sm:$0xf]
      %v215 = vld [vmem:[%s200 + $0xc] sm:$0xf]
      %v216 = vld [vmem:[%s200 + $0x10] sm:$0xf]
      %v217 = vld [vmem:[%s200 + $0x14] sm:$0xf]
      %v218 = vld [vmem:[%s200 + $0x18] sm:$0xf]
      %v219 = vld [vmem:[%s200 + $0x1c] sm:$0xf]
      %v220 = vld [vmem:[%s200 + $0x20] sm:$0xf]
      %v221 = vld [vmem:[%s200 + $0x24] sm:$0xf]
      %v222 = vld [vmem:[%s200 + $0x28] sm:$0xf]
      %v223 = vld [vmem:[%s200 + $0x2c] sm:$0xf]
      %v224 = vld [vmem:[%s200 + $0x30] sm:$0xf]
      %v225 = vld [vmem:[%s200 + $0x34] sm:$0xf]
      %v226 = vld [vmem:[%s200 + $0x38] sm:$0xf]
      %v227 = vld [vmem:[%s200 + $0x3c] sm:$0xf]
      %v228 = vld [vmem:[%s200 + $0x40] sm:$0xf]
      %v229 = vld [vmem:[%s200 + $0x44] sm:$0xf]
      %v230 = vld [vmem:[%s200 + $0x48] sm:$0xf]
      %v231 = vld [vmem:[%s200 + $0x4c] sm:$0xf]
      %v232 = vld [vmem:[%s200 + $0x50] sm:$0xf]
      %v233 = vld [vmem:[%s200 + $0x54] sm:$0xf]
      %v234 = vld [vmem:[%s200 + $0x58] sm:$0xf]
      %v235 = vld [vmem:[%s200 + $0x5c] sm:$0xf]
      %v236 = vld [vmem:[%s200 + $0x60] sm:$0xf]
      %v237 = vld [vmem:[%s200 + $0x64] sm:$0xf]
      %v238 = vld [vmem:[%s200 + $0x68] sm:$0xf]
      %v239 = vld [vmem:[%s200 + $0x6c] sm:$0xf]
      %v240 = vld [vmem:[%s200 + $0x70] sm:$0xf]
      %v241 = vld [vmem:[%s200 + $0x74] sm:$0xf]
      %v242 = vld [vmem:[%s200 + $0x78] sm:$0xf]
      %v243 = vld [vmem:[%s200 + $0x7c] sm:$0xf]
      %v244 = vld [vmem:[%s200 + $0x80] sm:$0xf]
      %v245 = vld [vmem:[%s200 + $0x84] sm:$0xf]
      %v246 = vld [vmem:[%s200 + $0x88] sm:$0xf]
      %v247 = vld [vmem:[%s200 + $0x8c] sm:$0xf]
      %v248 = vld [vmem:[%s200 + $0x90] sm:$0xf]
      %v249 = vld [vmem:[%s200 + $0x94] sm:$0xf]
      %v250 = vld [vmem:[%s200 + $0x98] sm:$0xf]
      %v251 = vld [vmem:[%s200 + $0x9c] sm:$0xf]
      %v252 = vld [vmem:[%s200 + $0xa0] sm:$0xf]
      %v253 = vld [vmem:[%s200 + $0xa4] sm:$0xf]
      %v254 = vld [vmem:[%s200 + $0xa8] sm:$0xf]
      %v255 = vld [vmem:[%s200 + $0xac] sm:$0xf]
      %v256 = vld [vmem:[%s200 + $0xb0] sm:$0xf]
      %v257 = vld [vmem:[%s200 + $0xb4] sm:$0xf]
      %v258 = vld [vmem:[%s200 + $0xb8] sm:$0xf]
      %v259 = vld [vmem:[%s200 + $0xbc] sm:$0xf]
      %v260 = vld [vmem:[%s200 + $0xc0] sm:$0xf]
      %v261 = vld [vmem:[%s200 + $0xc4] sm:$0xf]
      %v262 = vld [vmem:[%s200 + $0xc8] sm:$0xf]
      %v263 = vld [vmem:[%s200 + $0xcc] sm:$0xf]
      %v264 = vld [vmem:[%s200 + $0xd0] sm:$0xf]
      %v265 = vld [vmem:[%s200 + $0xd4] sm:$0xf]
      %v266 = vld [vmem:[%s200 + $0xd8] sm:$0xf]
      %v267 = vld [vmem:[%s200 + $0xdc] sm:$0xf]
      %v268 = vld [vmem:[%s200 + $0xe0] sm:$0xf]
      %v269 = vld [vmem:[%s200 + $0xe4] sm:$0xf]
      %v270 = vld [vmem:[%s200 + $0xe8] sm:$0xf]
      %v271 = vld [vmem:[%s200 + $0xec] sm:$0xf]
      %v272 = vld [vmem:[%s200 + $0xf0] sm:$0xf]
      %v273 = vld [vmem:[%s200 + $0xf4] sm:$0xf]
      %v274 = vld [vmem:[%s200 + $0xf8] sm:$0xf]
      %v275 = vld [vmem:[%s200 + $0xfc] sm:$0xf]
      %v276 = vld [vmem:[%s1] sm:$0xf]
      %v277 = vld [vmem:[%s1 + $0x4] sm:$0xf]
      %v278 = vld [vmem:[%s1 + $0x8] sm:$0xf]
      %v279 = vld [vmem:[%s1 + $0xc] sm:$0xf]
      %v280 = vld [vmem:[%s1 + $0x10] sm:$0xf]
      %v281 = vld [vmem:[%s1 + $0x14] sm:$0xf]
      %v282 = vld [vmem:[%s1 + $0x18] sm:$0xf]
      %v283 = vld [vmem:[%s1 + $0x1c] sm:$0xf]
      %v284 = vld [vmem:[%s1 + $0x20] sm:$0xf]
      %v285 = vld [vmem:[%s1 + $0x24] sm:$0xf]
      %v286 = vld [vmem:[%s1 + $0x28] sm:$0xf]
      %v287 = vld [vmem:[%s1 + $0x2c] sm:$0xf]
      %v288 = vld [vmem:[%s1 + $0x30] sm:$0xf]
      %v289 = vld [vmem:[%s1 + $0x34] sm:$0xf]
      %v290 = vld [vmem:[%s1 + $0x38] sm:$0xf]
      %v291 = vld [vmem:[%s1 + $0x3c] sm:$0xf]
      %v292 = vld [vmem:[%s2] sm:$0x1]
      %v294 = vperm.slane %v292, 0
      %v360 = vunpack.c.l.b16 %v212
      %v361 = vunpack.c.l.b16 %v213
      %v362 = vunpack.c.l.b16 %v214
      %v363 = vunpack.c.l.b16 %v215
      %v364 = vunpack.c.l.b16 %v216
      %v365 = vunpack.c.l.b16 %v217
      %v366 = vunpack.c.l.b16 %v218
      %v367 = vunpack.c.l.b16 %v219
      %v368 = vunpack.c.l.b16 %v220
      %v369 = vunpack.c.l.b16 %v221
      %v370 = vunpack.c.l.b16 %v222
      %v371 = vunpack.c.l.b16 %v223
      %v372 = vunpack.c.l.b16 %v224
      %v373 = vunpack.c.l.b16 %v225
      %v374 = vunpack.c.l.b16 %v226
      %v375 = vunpack.c.l.b16 %v227
      %v376 = vunpack.c.l.b16 %v228
      %v377 = vunpack.c.l.b16 %v229
      %v378 = vunpack.c.l.b16 %v230
      %v379 = vunpack.c.l.b16 %v231
      %v380 = vunpack.c.l.b16 %v232
      %v381 = vunpack.c.l.b16 %v233
      %v382 = vunpack.c.l.b16 %v234
      %v383 = vunpack.c.l.b16 %v235
      %v384 = vunpack.c.l.b16 %v236
      %v385 = vunpack.c.l.b16 %v237
      %v386 = vunpack.c.l.b16 %v238
      %v387 = vunpack.c.l.b16 %v239
      %v388 = vunpack.c.l.b16 %v240
      %v389 = vunpack.c.l.b16 %v241
      %v390 = vunpack.c.l.b16 %v242
      %v391 = vunpack.c.l.b16 %v243
      %v392 = vunpack.c.l.b16 %v244
      %v393 = vunpack.c.l.b16 %v245
      %v394 = vunpack.c.l.b16 %v246
      %v395 = vunpack.c.l.b16 %v247
      %v396 = vunpack.c.l.b16 %v248
      %v397 = vunpack.c.l.b16 %v249
      %v398 = vunpack.c.l.b16 %v250
      %v399 = vunpack.c.l.b16 %v251
      %v400 = vunpack.c.l.b16 %v252
      %v401 = vunpack.c.l.b16 %v253
      %v402 = vunpack.c.l.b16 %v254
      %v403 = vunpack.c.l.b16 %v255
      %v404 = vunpack.c.l.b16 %v256
      %v405 = vunpack.c.l.b16 %v257
      %v406 = vunpack.c.l.b16 %v258
      %v407 = vunpack.c.l.b16 %v259
      %v408 = vunpack.c.l.b16 %v260
      %v409 = vunpack.c.l.b16 %v261
      %v410 = vunpack.c.l.b16 %v262
      %v411 = vunpack.c.l.b16 %v263
      %v412 = vunpack.c.l.b16 %v264
      %v413 = vunpack.c.l.b16 %v265
      %v414 = vunpack.c.l.b16 %v266
      %v415 = vunpack.c.l.b16 %v267
      %v416 = vunpack.c.l.b16 %v268
      %v417 = vunpack.c.l.b16 %v269
      %v418 = vunpack.c.l.b16 %v270
      %v419 = vunpack.c.l.b16 %v271
      %v420 = vunpack.c.l.b16 %v272
      %v421 = vunpack.c.l.b16 %v273
      %v422 = vunpack.c.l.b16 %v274
      %v423 = vunpack.c.l.b16 %v275
      %v424 = vpack.c.b16 %v361, %v360
      %v425 = vpack.c.b16 %v363, %v362
      %v426 = vpack.c.b16 %v365, %v364
      %v427 = vpack.c.b16 %v367, %v366
      %v428 = vpack.c.b16 %v369, %v368
      %v429 = vpack.c.b16 %v371, %v370
      %v430 = vpack.c.b16 %v373, %v372
      %v431 = vpack.c.b16 %v375, %v374
      %v432 = vpack.c.b16 %v377, %v376
      %v433 = vpack.c.b16 %v379, %v378
      %v434 = vpack.c.b16 %v381, %v380
      %v435 = vpack.c.b16 %v383, %v382
      %v436 = vpack.c.b16 %v385, %v384
      %v437 = vpack.c.b16 %v387, %v386
      %v438 = vpack.c.b16 %v389, %v388
      %v439 = vpack.c.b16 %v391, %v390
      %v440 = vpack.c.b16 %v393, %v392
      %v441 = vpack.c.b16 %v395, %v394
      %v442 = vpack.c.b16 %v397, %v396
      %v443 = vpack.c.b16 %v399, %v398
      %v444 = vpack.c.b16 %v401, %v400
      %v445 = vpack.c.b16 %v403, %v402
      %v446 = vpack.c.b16 %v405, %v404
      %v447 = vpack.c.b16 %v407, %v406
      %v448 = vpack.c.b16 %v409, %v408
      %v449 = vpack.c.b16 %v411, %v410
      %v450 = vpack.c.b16 %v413, %v412
      %v451 = vpack.c.b16 %v415, %v414
      %v452 = vpack.c.b16 %v417, %v416
      %v453 = vpack.c.b16 %v419, %v418
      %v454 = vpack.c.b16 %v421, %v420
      %v455 = vpack.c.b16 %v423, %v422
      %v504 = vunpack.c.l.b16 %v276
      %v505 = vunpack.c.l.b16 %v277
      %v506 = vunpack.c.l.b16 %v278
      %v507 = vunpack.c.l.b16 %v279
      %v508 = vunpack.c.l.b16 %v280
      %v509 = vunpack.c.l.b16 %v281
      %v510 = vunpack.c.l.b16 %v282
      %v511 = vunpack.c.l.b16 %v283
      %v512 = vunpack.c.l.b16 %v284
      %v513 = vunpack.c.l.b16 %v285
      %v514 = vunpack.c.l.b16 %v286
      %v515 = vunpack.c.l.b16 %v287
      %v516 = vunpack.c.l.b16 %v288
      %v517 = vunpack.c.l.b16 %v289
      %v518 = vunpack.c.l.b16 %v290
      %v519 = vunpack.c.l.b16 %v291
      %v520 = vpack.c.b16 %v505, %v504
      %v521 = vpack.c.b16 %v507, %v506
      %v522 = vpack.c.b16 %v509, %v508
      %v523 = vpack.c.b16 %v511, %v510
      %v524 = vpack.c.b16 %v513, %v512
      %v525 = vpack.c.b16 %v515, %v514
      %v526 = vpack.c.b16 %v517, %v516
      %v527 = vpack.c.b16 %v519, %v518
      %536 = vmatpush.bf16.msra.mxu0 %v527
      %537 = vmatpush.bf16.msra.mxu0 %v526
      %538 = vmatpush.bf16.msra.mxu0 %v525
      %539 = vmatpush.bf16.msra.mxu0 %v524
      %540 = vmatpush.bf16.msra.mxu0 %v523
      %541 = vmatpush.bf16.msra.mxu0 %v522
      %542 = vmatpush.bf16.msra.mxu0 %v521
      %543 = vmatpush.bf16.msra.mxu0 %v520
      %544 = vmatmul.bf16.gmra.mxu0 %v424
      %v545 = vpop.f32.mrf.mxu0
      %v546 = vadd.f32 %v294, %v545
      %v547 = vpop.f32.mrf.mxu0
      %v548 = vadd.f32 %v294, %v547
      %549 = vmatmul.bf16.gmra.mxu0 %v425
      %v550 = vpop.f32.mrf.mxu0
      %v551 = vadd.f32 %v294, %v550
      %v552 = vpop.f32.mrf.mxu0
      %v553 = vadd.f32 %v294, %v552
      %554 = vmatmul.bf16.gmra.mxu0 %v426
      %v555 = vpop.f32.mrf.mxu0
      %v556 = vadd.f32 %v294, %v555
      %v557 = vpop.f32.mrf.mxu0
      %v558 = vadd.f32 %v294, %v557
      %559 = vmatmul.bf16.gmra.mxu0 %v427
      %v560 = vpop.f32.mrf.mxu0
      %v561 = vadd.f32 %v294, %v560
      %v562 = vpop.f32.mrf.mxu0
      %v563 = vadd.f32 %v294, %v562
      %564 = vmatmul.bf16.gmra.mxu0 %v428
      %v565 = vpop.f32.mrf.mxu0
      %v566 = vadd.f32 %v294, %v565
      %v567 = vpop.f32.mrf.mxu0
      %v568 = vadd.f32 %v294, %v567
      %569 = vmatmul.bf16.gmra.mxu0 %v429
      %v570 = vpop.f32.mrf.mxu0
      %v571 = vadd.f32 %v294, %v570
      %v572 = vpop.f32.mrf.mxu0
      %v573 = vadd.f32 %v294, %v572
      %574 = vmatmul.bf16.gmra.mxu0 %v430
      %v575 = vpop.f32.mrf.mxu0
      %v576 = vadd.f32 %v294, %v575
      %v577 = vpop.f32.mrf.mxu0
      %v578 = vadd.f32 %v294, %v577
      %579 = vmatmul.bf16.gmra.mxu0 %v431
      %v580 = vpop.f32.mrf.mxu0
      %v581 = vadd.f32 %v294, %v580
      %v582 = vpop.f32.mrf.mxu0
      %v583 = vadd.f32 %v294, %v582
      %584 = vmatmul.bf16.gmra.mxu0 %v432
      %v585 = vpop.f32.mrf.mxu0
      %v586 = vadd.f32 %v294, %v585
      %v587 = vpop.f32.mrf.mxu0
      %v588 = vadd.f32 %v294, %v587
      %589 = vmatmul.bf16.gmra.mxu0 %v433
      %v590 = vpop.f32.mrf.mxu0
      %v591 = vadd.f32 %v294, %v590
      %v592 = vpop.f32.mrf.mxu0
      %v593 = vadd.f32 %v294, %v592
      %594 = vmatmul.bf16.gmra.mxu0 %v434
      %v595 = vpop.f32.mrf.mxu0
      %v596 = vadd.f32 %v294, %v595
      %v597 = vpop.f32.mrf.mxu0
      %v598 = vadd.f32 %v294, %v597
      %599 = vmatmul.bf16.gmra.mxu0 %v435
      %v600 = vpop.f32.mrf.mxu0
      %v601 = vadd.f32 %v294, %v600
      %v602 = vpop.f32.mrf.mxu0
      %v603 = vadd.f32 %v294, %v602
      %604 = vmatmul.bf16.gmra.mxu0 %v436
      %v605 = vpop.f32.mrf.mxu0
      %v606 = vadd.f32 %v294, %v605
      %v607 = vpop.f32.mrf.mxu0
      %v608 = vadd.f32 %v294, %v607
      %609 = vmatmul.bf16.gmra.mxu0 %v437
      %v610 = vpop.f32.mrf.mxu0
      %v611 = vadd.f32 %v294, %v610
      %v612 = vpop.f32.mrf.mxu0
      %v613 = vadd.f32 %v294, %v612
      %614 = vmatmul.bf16.gmra.mxu0 %v438
      %v615 = vpop.f32.mrf.mxu0
      %v616 = vadd.f32 %v294, %v615
      %v617 = vpop.f32.mrf.mxu0
      %v618 = vadd.f32 %v294, %v617
      %619 = vmatmul.bf16.gmra.mxu0 %v439
      %v620 = vpop.f32.mrf.mxu0
      %v621 = vadd.f32 %v294, %v620
      %v622 = vpop.f32.mrf.mxu0
      %v623 = vadd.f32 %v294, %v622
      %624 = vmatmul.bf16.gmra.mxu0 %v440
      %v625 = vpop.f32.mrf.mxu0
      %v626 = vadd.f32 %v294, %v625
      %v627 = vpop.f32.mrf.mxu0
      %v628 = vadd.f32 %v294, %v627
      %629 = vmatmul.bf16.gmra.mxu0 %v441
      %v630 = vpop.f32.mrf.mxu0
      %v631 = vadd.f32 %v294, %v630
      %v632 = vpop.f32.mrf.mxu0
      %v633 = vadd.f32 %v294, %v632
      %634 = vmatmul.bf16.gmra.mxu0 %v442
      %v635 = vpop.f32.mrf.mxu0
      %v636 = vadd.f32 %v294, %v635
      %v637 = vpop.f32.mrf.mxu0
      %v638 = vadd.f32 %v294, %v637
      %639 = vmatmul.bf16.gmra.mxu0 %v443
      %v640 = vpop.f32.mrf.mxu0
      %v641 = vadd.f32 %v294, %v640
      %v642 = vpop.f32.mrf.mxu0
      %v643 = vadd.f32 %v294, %v642
      %644 = vmatmul.bf16.gmra.mxu0 %v444
      %v645 = vpop.f32.mrf.mxu0
      %v646 = vadd.f32 %v294, %v645
      %v647 = vpop.f32.mrf.mxu0
      %v648 = vadd.f32 %v294, %v647
      %649 = vmatmul.bf16.gmra.mxu0 %v445
      %v650 = vpop.f32.mrf.mxu0
      %v651 = vadd.f32 %v294, %v650
      %v652 = vpop.f32.mrf.mxu0
      %v653 = vadd.f32 %v294, %v652
      %654 = vmatmul.bf16.gmra.mxu0 %v446
      %v655 = vpop.f32.mrf.mxu0
      %v656 = vadd.f32 %v294, %v655
      %v657 = vpop.f32.mrf.mxu0
      %v658 = vadd.f32 %v294, %v657
      %659 = vmatmul.bf16.gmra.mxu0 %v447
      %v660 = vpop.f32.mrf.mxu0
      %v661 = vadd.f32 %v294, %v660
      %v662 = vpop.f32.mrf.mxu0
      %v663 = vadd.f32 %v294, %v662
      %664 = vmatmul.bf16.gmra.mxu0 %v448
      %v665 = vpop.f32.mrf.mxu0
      %v666 = vadd.f32 %v294, %v665
      %v667 = vpop.f32.mrf.mxu0
      %v668 = vadd.f32 %v294, %v667
      %669 = vmatmul.bf16.gmra.mxu0 %v449
      %v670 = vpop.f32.mrf.mxu0
      %v671 = vadd.f32 %v294, %v670
      %v672 = vpop.f32.mrf.mxu0
      %v673 = vadd.f32 %v294, %v672
      %674 = vmatmul.bf16.gmra.mxu0 %v450
      %v675 = vpop.f32.mrf.mxu0
      %v676 = vadd.f32 %v294, %v675
      %v677 = vpop.f32.mrf.mxu0
      %v678 = vadd.f32 %v294, %v677
      %679 = vmatmul.bf16.gmra.mxu0 %v451
      %v680 = vpop.f32.mrf.mxu0
      %v681 = vadd.f32 %v294, %v680
      %v682 = vpop.f32.mrf.mxu0
      %v683 = vadd.f32 %v294, %v682
      %684 = vmatmul.bf16.gmra.mxu0 %v452
      %v685 = vpop.f32.mrf.mxu0
      %v686 = vadd.f32 %v294, %v685
      %v687 = vpop.f32.mrf.mxu0
      %v688 = vadd.f32 %v294, %v687
      %689 = vmatmul.bf16.gmra.mxu0 %v453
      %v690 = vpop.f32.mrf.mxu0
      %v691 = vadd.f32 %v294, %v690
      %v692 = vpop.f32.mrf.mxu0
      %v693 = vadd.f32 %v294, %v692
      %694 = vmatmul.bf16.gmra.mxu0 %v454
      %v695 = vpop.f32.mrf.mxu0
      %v696 = vadd.f32 %v294, %v695
      %v697 = vpop.f32.mrf.mxu0
      %v698 = vadd.f32 %v294, %v697
      %699 = vmatmul.bf16.gmra.mxu0 %v455
      %v700 = vpop.f32.mrf.mxu0
      %v701 = vadd.f32 %v294, %v700
      %v702 = vpop.f32.mrf.mxu0
      %v703 = vadd.f32 %v294, %v702
      %704 = vdwg.mxu0
      %705 = vst [vmem:[%s206] sm:$0xff] %v546
      %706 = vst [vmem:[%s206 + $0x8] sm:$0xff] %v548
      %707 = vst [vmem:[%s206 + $0x10] sm:$0xff] %v551
      %708 = vst [vmem:[%s206 + $0x18] sm:$0xff] %v553
      %709 = vst [vmem:[%s206 + $0x20] sm:$0xff] %v556
      %710 = vst [vmem:[%s206 + $0x28] sm:$0xff] %v558
      %711 = vst [vmem:[%s206 + $0x30] sm:$0xff] %v561
      %712 = vst [vmem:[%s206 + $0x38] sm:$0xff] %v563
      %713 = vst [vmem:[%s206 + $0x40] sm:$0xff] %v566
      %714 = vst [vmem:[%s206 + $0x48] sm:$0xff] %v568
      %715 = vst [vmem:[%s206 + $0x50] sm:$0xff] %v571
      %716 = vst [vmem:[%s206 + $0x58] sm:$0xff] %v573
      %717 = vst [vmem:[%s206 + $0x60] sm:$0xff] %v576
      %718 = vst [vmem:[%s206 + $0x68] sm:$0xff] %v578
      %719 = vst [vmem:[%s206 + $0x70] sm:$0xff] %v581
      %720 = vst [vmem:[%s206 + $0x78] sm:$0xff] %v583
      %721 = vst [vmem:[%s206 + $0x80] sm:$0xff] %v586
      %722 = vst [vmem:[%s206 + $0x88] sm:$0xff] %v588
      %723 = vst [vmem:[%s206 + $0x90] sm:$0xff] %v591
      %724 = vst [vmem:[%s206 + $0x98] sm:$0xff] %v593
      %725 = vst [vmem:[%s206 + $0xa0] sm:$0xff] %v596
      %726 = vst [vmem:[%s206 + $0xa8] sm:$0xff] %v598
      %727 = vst [vmem:[%s206 + $0xb0] sm:$0xff] %v601
      %728 = vst [vmem:[%s206 + $0xb8] sm:$0xff] %v603
      %729 = vst [vmem:[%s206 + $0xc0] sm:$0xff] %v606
      %730 = vst [vmem:[%s206 + $0xc8] sm:$0xff] %v608
      %731 = vst [vmem:[%s206 + $0xd0] sm:$0xff] %v611
      %732 = vst [vmem:[%s206 + $0xd8] sm:$0xff] %v613
      %733 = vst [vmem:[%s206 + $0xe0] sm:$0xff] %v616
      %734 = vst [vmem:[%s206 + $0xe8] sm:$0xff] %v618
      %735 = vst [vmem:[%s206 + $0xf0] sm:$0xff] %v621
      %736 = vst [vmem:[%s206 + $0xf8] sm:$0xff] %v623
      %737 = vst [vmem:[%s206 + $0x100] sm:$0xff] %v626
      %738 = vst [vmem:[%s206 + $0x108] sm:$0xff] %v628
      %739 = vst [vmem:[%s206 + $0x110] sm:$0xff] %v631
      %740 = vst [vmem:[%s206 + $0x118] sm:$0xff] %v633
      %741 = vst [vmem:[%s206 + $0x120] sm:$0xff] %v636
      %742 = vst [vmem:[%s206 + $0x128] sm:$0xff] %v638
      %743 = vst [vmem:[%s206 + $0x130] sm:$0xff] %v641
      %744 = vst [vmem:[%s206 + $0x138] sm:$0xff] %v643
      %745 = vst [vmem:[%s206 + $0x140] sm:$0xff] %v646
      %746 = vst [vmem:[%s206 + $0x148] sm:$0xff] %v648
      %747 = vst [vmem:[%s206 + $0x150] sm:$0xff] %v651
      %748 = vst [vmem:[%s206 + $0x158] sm:$0xff] %v653
      %749 = vst [vmem:[%s206 + $0x160] sm:$0xff] %v656
      %750 = vst [vmem:[%s206 + $0x168] sm:$0xff] %v658
      %751 = vst [vmem:[%s206 + $0x170] sm:$0xff] %v661
      %752 = vst [vmem:[%s206 + $0x178] sm:$0xff] %v663
      %753 = vst [vmem:[%s206 + $0x180] sm:$0xff] %v666
      %754 = vst [vmem:[%s206 + $0x188] sm:$0xff] %v668
      %755 = vst [vmem:[%s206 + $0x190] sm:$0xff] %v671
      %756 = vst [vmem:[%s206 + $0x198] sm:$0xff] %v673
      %757 = vst [vmem:[%s206 + $0x1a0] sm:$0xff] %v676
      %758 = vst [vmem:[%s206 + $0x1a8] sm:$0xff] %v678
      %759 = vst [vmem:[%s206 + $0x1b0] sm:$0xff] %v681
      %760 = vst [vmem:[%s206 + $0x1b8] sm:$0xff] %v683
      %761 = vst [vmem:[%s206 + $0x1c0] sm:$0xff] %v686
      %762 = vst [vmem:[%s206 + $0x1c8] sm:$0xff] %v688
      %763 = vst [vmem:[%s206 + $0x1d0] sm:$0xff] %v691
      %764 = vst [vmem:[%s206 + $0x1d8] sm:$0xff] %v693
      %765 = vst [vmem:[%s206 + $0x1e0] sm:$0xff] %v696
      %766 = vst [vmem:[%s206 + $0x1e8] sm:$0xff] %v698
      %767 = vst [vmem:[%s206 + $0x1f0] sm:$0xff] %v701
      %768 = vst [vmem:[%s206 + $0x1f8] sm:$0xff] %v703
      %s769 = smul.u32 %s16, 512
      %v770 = vlaneseq
      %v771 = vshrl.u32 %v770, 7
      %v772 = vadd.s32 %v771, 8
      %v773 = vadd.s32 %v771, 16
      %v774 = vadd.s32 %v771, 24
      %v775 = vadd.s32 %v771, 32
      %v776 = vadd.s32 %v771, 40
      %v777 = vadd.s32 %v771, 48
      %v778 = vadd.s32 %v771, 56
      %v779 = vadd.s32 %v771, 64
      %v780 = vadd.s32 %v771, 72
      %v781 = vadd.s32 %v771, 80
      %v782 = vadd.s32 %v771, 88
      %v783 = vadd.s32 %v771, 96
      %v784 = vadd.s32 %v771, 104
      %v785 = vadd.s32 %v771, 112
      %v786 = vadd.s32 %v771, 120
      %v787 = vadd.s32 %v771, 128
      %v788 = vadd.s32 %v771, 136
      %v789 = vadd.s32 %v771, 144
      %v790 = vadd.s32 %v771, 152
      %v791 = vadd.s32 %v771, 160
      %v792 = vadd.s32 %v771, 168
      %v793 = vadd.s32 %v771, 176
      %v794 = vadd.s32 %v771, 184
      %v795 = vadd.s32 %v771, 192
      %v796 = vadd.s32 %v771, 200
      %v797 = vadd.s32 %v771, 208
      %v798 = vadd.s32 %v771, 216
      %v799 = vadd.s32 %v771, 224
      %v800 = vadd.s32 %v771, 232
      %v801 = vadd.s32 %v771, 240
      %v802 = vadd.s32 %v771, 248
      %v803 = vadd.s32 %v771, 256
      %v804 = vadd.s32 %v771, 264
      %v805 = vadd.s32 %v771, 272
      %v806 = vadd.s32 %v771, 280
      %v807 = vadd.s32 %v771, 288
      %v808 = vadd.s32 %v771, 296
      %v809 = vadd.s32 %v771, 304
      %v810 = vadd.s32 %v771, 312
      %v811 = vadd.s32 %v771, 320
      %v812 = vadd.s32 %v771, 328
      %v813 = vadd.s32 %v771, 336
      %v814 = vadd.s32 %v771, 344
      %v815 = vadd.s32 %v771, 352
      %v816 = vadd.s32 %v771, 360
      %v817 = vadd.s32 %v771, 368
      %v818 = vadd.s32 %v771, 376
      %v819 = vadd.s32 %v771, 384
      %v820 = vadd.s32 %v771, 392
      %v821 = vadd.s32 %v771, 400
      %v822 = vadd.s32 %v771, 408
      %v823 = vadd.s32 %v771, 416
      %v824 = vadd.s32 %v771, 424
      %v825 = vadd.s32 %v771, 432
      %v826 = vadd.s32 %v771, 440
      %v827 = vadd.s32 %v771, 448
      %v828 = vadd.s32 %v771, 456
      %v829 = vadd.s32 %v771, 464
      %v830 = vadd.s32 %v771, 472
      %v831 = vadd.s32 %v771, 480
      %v832 = vadd.s32 %v771, 488
      %v833 = vadd.s32 %v771, 496
      %v834 = vadd.s32 %v771, 504
      %v835 = vstv %s769
      %v836 = vadd.s32 %v835, %v771
      %v837 = vadd.s32 %v835, %v772
      %v838 = vadd.s32 %v835, %v773
      %v839 = vadd.s32 %v835, %v774
      %v840 = vadd.s32 %v835, %v775
      %v841 = vadd.s32 %v835, %v776
      %v842 = vadd.s32 %v835, %v777
      %v843 = vadd.s32 %v835, %v778
      %v844 = vadd.s32 %v835, %v779
      %v845 = vadd.s32 %v835, %v780
      %v846 = vadd.s32 %v835, %v781
      %v847 = vadd.s32 %v835, %v782
      %v848 = vadd.s32 %v835, %v783
      %v849 = vadd.s32 %v835, %v784
      %v850 = vadd.s32 %v835, %v785
      %v851 = vadd.s32 %v835, %v786
      %v852 = vadd.s32 %v835, %v787
      %v853 = vadd.s32 %v835, %v788
      %v854 = vadd.s32 %v835, %v789
      %v855 = vadd.s32 %v835, %v790
      %v856 = vadd.s32 %v835, %v791
      %v857 = vadd.s32 %v835, %v792
      %v858 = vadd.s32 %v835, %v793
      %v859 = vadd.s32 %v835, %v794
      %v860 = vadd.s32 %v835, %v795
      %v861 = vadd.s32 %v835, %v796
      %v862 = vadd.s32 %v835, %v797
      %v863 = vadd.s32 %v835, %v798
      %v864 = vadd.s32 %v835, %v799
      %v865 = vadd.s32 %v835, %v800
      %v866 = vadd.s32 %v835, %v801
      %v867 = vadd.s32 %v835, %v802
      %v868 = vadd.s32 %v835, %v803
      %v869 = vadd.s32 %v835, %v804
      %v870 = vadd.s32 %v835, %v805
      %v871 = vadd.s32 %v835, %v806
      %v872 = vadd.s32 %v835, %v807
      %v873 = vadd.s32 %v835, %v808
      %v874 = vadd.s32 %v835, %v809
      %v875 = vadd.s32 %v835, %v810
      %v876 = vadd.s32 %v835, %v811
      %v877 = vadd.s32 %v835, %v812
      %v878 = vadd.s32 %v835, %v813
      %v879 = vadd.s32 %v835, %v814
      %v880 = vadd.s32 %v835, %v815
      %v881 = vadd.s32 %v835, %v816
      %v882 = vadd.s32 %v835, %v817
      %v883 = vadd.s32 %v835, %v818
      %v884 = vadd.s32 %v835, %v819
      %v885 = vadd.s32 %v835, %v820
      %v886 = vadd.s32 %v835, %v821
      %v887 = vadd.s32 %v835, %v822
      %v888 = vadd.s32 %v835, %v823
      %v889 = vadd.s32 %v835, %v824
      %v890 = vadd.s32 %v835, %v825
      %v891 = vadd.s32 %v835, %v826
      %v892 = vadd.s32 %v835, %v827
      %v893 = vadd.s32 %v835, %v828
      %v894 = vadd.s32 %v835, %v829
      %v895 = vadd.s32 %v835, %v830
      %v896 = vadd.s32 %v835, %v831
      %v897 = vadd.s32 %v835, %v832
      %v898 = vadd.s32 %v835, %v833
      %v899 = vadd.s32 %v835, %v834
      %vm900 = vcmp.lt.s32.totalorder %v836, 1024
      %vm901 = vcmp.lt.s32.totalorder %v837, 1024
      %vm902 = vcmp.lt.s32.totalorder %v838, 1024
      %vm903 = vcmp.lt.s32.totalorder %v839, 1024
      %vm904 = vcmp.lt.s32.totalorder %v840, 1024
      %vm905 = vcmp.lt.s32.totalorder %v841, 1024
      %vm906 = vcmp.lt.s32.totalorder %v842, 1024
      %vm907 = vcmp.lt.s32.totalorder %v843, 1024
      %vm908 = vcmp.lt.s32.totalorder %v844, 1024
      %vm909 = vcmp.lt.s32.totalorder %v845, 1024
      %vm910 = vcmp.lt.s32.totalorder %v846, 1024
      %vm911 = vcmp.lt.s32.totalorder %v847, 1024
      %vm912 = vcmp.lt.s32.totalorder %v848, 1024
      %vm913 = vcmp.lt.s32.totalorder %v849, 1024
      %vm914 = vcmp.lt.s32.totalorder %v850, 1024
      %vm915 = vcmp.lt.s32.totalorder %v851, 1024
      %vm916 = vcmp.lt.s32.totalorder %v852, 1024
      %vm917 = vcmp.lt.s32.totalorder %v853, 1024
      %vm918 = vcmp.lt.s32.totalorder %v854, 1024
      %vm919 = vcmp.lt.s32.totalorder %v855, 1024
      %vm920 = vcmp.lt.s32.totalorder %v856, 1024
      %vm921 = vcmp.lt.s32.totalorder %v857, 1024
      %vm922 = vcmp.lt.s32.totalorder %v858, 1024
      %vm923 = vcmp.lt.s32.totalorder %v859, 1024
      %vm924 = vcmp.lt.s32.totalorder %v860, 1024
      %vm925 = vcmp.lt.s32.totalorder %v861, 1024
      %vm926 = vcmp.lt.s32.totalorder %v862, 1024
      %vm927 = vcmp.lt.s32.totalorder %v863, 1024
      %vm928 = vcmp.lt.s32.totalorder %v864, 1024
      %vm929 = vcmp.lt.s32.totalorder %v865, 1024
      %vm930 = vcmp.lt.s32.totalorder %v866, 1024
      %vm931 = vcmp.lt.s32.totalorder %v867, 1024
      %vm932 = vcmp.lt.s32.totalorder %v868, 1024
      %vm933 = vcmp.lt.s32.totalorder %v869, 1024
      %vm934 = vcmp.lt.s32.totalorder %v870, 1024
      %vm935 = vcmp.lt.s32.totalorder %v871, 1024
      %vm936 = vcmp.lt.s32.totalorder %v872, 1024
      %vm937 = vcmp.lt.s32.totalorder %v873, 1024
      %vm938 = vcmp.lt.s32.totalorder %v874, 1024
      %vm939 = vcmp.lt.s32.totalorder %v875, 1024
      %vm940 = vcmp.lt.s32.totalorder %v876, 1024
      %vm941 = vcmp.lt.s32.totalorder %v877, 1024
      %vm942 = vcmp.lt.s32.totalorder %v878, 1024
      %vm943 = vcmp.lt.s32.totalorder %v879, 1024
      %vm944 = vcmp.lt.s32.totalorder %v880, 1024
      %vm945 = vcmp.lt.s32.totalorder %v881, 1024
      %vm946 = vcmp.lt.s32.totalorder %v882, 1024
      %vm947 = vcmp.lt.s32.totalorder %v883, 1024
      %vm948 = vcmp.lt.s32.totalorder %v884, 1024
      %vm949 = vcmp.lt.s32.totalorder %v885, 1024
      %vm950 = vcmp.lt.s32.totalorder %v886, 1024
      %vm951 = vcmp.lt.s32.totalorder %v887, 1024
      %vm952 = vcmp.lt.s32.totalorder %v888, 1024
      %vm953 = vcmp.lt.s32.totalorder %v889, 1024
      %vm954 = vcmp.lt.s32.totalorder %v890, 1024
      %vm955 = vcmp.lt.s32.totalorder %v891, 1024
      %vm956 = vcmp.lt.s32.totalorder %v892, 1024
      %vm957 = vcmp.lt.s32.totalorder %v893, 1024
      %vm958 = vcmp.lt.s32.totalorder %v894, 1024
      %vm959 = vcmp.lt.s32.totalorder %v895, 1024
      %vm960 = vcmp.lt.s32.totalorder %v896, 1024
      %vm961 = vcmp.lt.s32.totalorder %v897, 1024
      %vm962 = vcmp.lt.s32.totalorder %v898, 1024
      %vm963 = vcmp.lt.s32.totalorder %v899, 1024
      %v964 = vsel %vm900, 1, 0
      %v965 = vsel %vm901, 1, 0
      %v966 = vsel %vm902, 1, 0
      %v967 = vsel %vm903, 1, 0
      %v968 = vsel %vm904, 1, 0
      %v969 = vsel %vm905, 1, 0
      %v970 = vsel %vm906, 1, 0
      %v971 = vsel %vm907, 1, 0
      %v972 = vsel %vm908, 1, 0
      %v973 = vsel %vm909, 1, 0
      %v974 = vsel %vm910, 1, 0
      %v975 = vsel %vm911, 1, 0
      %v976 = vsel %vm912, 1, 0
      %v977 = vsel %vm913, 1, 0
      %v978 = vsel %vm914, 1, 0
      %v979 = vsel %vm915, 1, 0
      %v980 = vsel %vm916, 1, 0
      %v981 = vsel %vm917, 1, 0
      %v982 = vsel %vm918, 1, 0
      %v983 = vsel %vm919, 1, 0
      %v984 = vsel %vm920, 1, 0
      %v985 = vsel %vm921, 1, 0
      %v986 = vsel %vm922, 1, 0
      %v987 = vsel %vm923, 1, 0
      %v988 = vsel %vm924, 1, 0
      %v989 = vsel %vm925, 1, 0
      %v990 = vsel %vm926, 1, 0
      %v991 = vsel %vm927, 1, 0
      %v992 = vsel %vm928, 1, 0
      %v993 = vsel %vm929, 1, 0
      %v994 = vsel %vm930, 1, 0
      %v995 = vsel %vm931, 1, 0
      %v996 = vsel %vm932, 1, 0
      %v997 = vsel %vm933, 1, 0
      %v998 = vsel %vm934, 1, 0
      %v999 = vsel %vm935, 1, 0
      %v1000 = vsel %vm936, 1, 0
      %v1001 = vsel %vm937, 1, 0
      %v1002 = vsel %vm938, 1, 0
      %v1003 = vsel %vm939, 1, 0
      %v1004 = vsel %vm940, 1, 0
      %v1005 = vsel %vm941, 1, 0
      %v1006 = vsel %vm942, 1, 0
      %v1007 = vsel %vm943, 1, 0
      %v1008 = vsel %vm944, 1, 0
      %v1009 = vsel %vm945, 1, 0
      %v1010 = vsel %vm946, 1, 0
      %v1011 = vsel %vm947, 1, 0
      %v1012 = vsel %vm948, 1, 0
      %v1013 = vsel %vm949, 1, 0
      %v1014 = vsel %vm950, 1, 0
      %v1015 = vsel %vm951, 1, 0
      %v1016 = vsel %vm952, 1, 0
      %v1017 = vsel %vm953, 1, 0
      %v1018 = vsel %vm954, 1, 0
      %v1019 = vsel %vm955, 1, 0
      %v1020 = vsel %vm956, 1, 0
      %v1021 = vsel %vm957, 1, 0
      %v1022 = vsel %vm958, 1, 0
      %v1023 = vsel %vm959, 1, 0
      %v1024 = vsel %vm960, 1, 0
      %v1025 = vsel %vm961, 1, 0
      %v1026 = vsel %vm962, 1, 0
      %v1027 = vsel %vm963, 1, 0
      %v1028 = vcvt.s32.f32 %v964
      %v1029 = vcvt.s32.f32 %v965
      %v1030 = vcvt.s32.f32 %v966
      %v1031 = vcvt.s32.f32 %v967
      %v1032 = vcvt.s32.f32 %v968
      %v1033 = vcvt.s32.f32 %v969
      %v1034 = vcvt.s32.f32 %v970
      %v1035 = vcvt.s32.f32 %v971
      %v1036 = vcvt.s32.f32 %v972
      %v1037 = vcvt.s32.f32 %v973
      %v1038 = vcvt.s32.f32 %v974
      %v1039 = vcvt.s32.f32 %v975
      %v1040 = vcvt.s32.f32 %v976
      %v1041 = vcvt.s32.f32 %v977
      %v1042 = vcvt.s32.f32 %v978
      %v1043 = vcvt.s32.f32 %v979
      %v1044 = vcvt.s32.f32 %v980
      %v1045 = vcvt.s32.f32 %v981
      %v1046 = vcvt.s32.f32 %v982
      %v1047 = vcvt.s32.f32 %v983
      %v1048 = vcvt.s32.f32 %v984
      %v1049 = vcvt.s32.f32 %v985
      %v1050 = vcvt.s32.f32 %v986
      %v1051 = vcvt.s32.f32 %v987
      %v1052 = vcvt.s32.f32 %v988
      %v1053 = vcvt.s32.f32 %v989
      %v1054 = vcvt.s32.f32 %v990
      %v1055 = vcvt.s32.f32 %v991
      %v1056 = vcvt.s32.f32 %v992
      %v1057 = vcvt.s32.f32 %v993
      %v1058 = vcvt.s32.f32 %v994
      %v1059 = vcvt.s32.f32 %v995
      %v1060 = vcvt.s32.f32 %v996
      %v1061 = vcvt.s32.f32 %v997
      %v1062 = vcvt.s32.f32 %v998
      %v1063 = vcvt.s32.f32 %v999
      %v1064 = vcvt.s32.f32 %v1000
      %v1065 = vcvt.s32.f32 %v1001
      %v1066 = vcvt.s32.f32 %v1002
      %v1067 = vcvt.s32.f32 %v1003
      %v1068 = vcvt.s32.f32 %v1004
      %v1069 = vcvt.s32.f32 %v1005
      %v1070 = vcvt.s32.f32 %v1006
      %v1071 = vcvt.s32.f32 %v1007
      %v1072 = vcvt.s32.f32 %v1008
      %v1073 = vcvt.s32.f32 %v1009
      %v1074 = vcvt.s32.f32 %v1010
      %v1075 = vcvt.s32.f32 %v1011
      %v1076 = vcvt.s32.f32 %v1012
      %v1077 = vcvt.s32.f32 %v1013
      %v1078 = vcvt.s32.f32 %v1014
      %v1079 = vcvt.s32.f32 %v1015
      %v1080 = vcvt.s32.f32 %v1016
      %v1081 = vcvt.s32.f32 %v1017
      %v1082 = vcvt.s32.f32 %v1018
      %v1083 = vcvt.s32.f32 %v1019
      %v1084 = vcvt.s32.f32 %v1020
      %v1085 = vcvt.s32.f32 %v1021
      %v1086 = vcvt.s32.f32 %v1022
      %v1087 = vcvt.s32.f32 %v1023
      %v1088 = vcvt.s32.f32 %v1024
      %v1089 = vcvt.s32.f32 %v1025
      %v1090 = vcvt.s32.f32 %v1026
      %v1091 = vcvt.s32.f32 %v1027
      %v1092 = vmul.f32 %v546, %v1028
      %v1093 = vmul.f32 %v548, %v1029
      %v1094 = vmul.f32 %v551, %v1030
      %v1095 = vmul.f32 %v553, %v1031
      %v1096 = vmul.f32 %v556, %v1032
      %v1097 = vmul.f32 %v558, %v1033
      %v1098 = vmul.f32 %v561, %v1034
      %v1099 = vmul.f32 %v563, %v1035
      %v1100 = vmul.f32 %v566, %v1036
      %v1101 = vmul.f32 %v568, %v1037
      %v1102 = vmul.f32 %v571, %v1038
      %v1103 = vmul.f32 %v573, %v1039
      %v1104 = vmul.f32 %v576, %v1040
      %v1105 = vmul.f32 %v578, %v1041
      %v1106 = vmul.f32 %v581, %v1042
      %v1107 = vmul.f32 %v583, %v1043
      %v1108 = vmul.f32 %v586, %v1044
      %v1109 = vmul.f32 %v588, %v1045
      %v1110 = vmul.f32 %v591, %v1046
      %v1111 = vmul.f32 %v593, %v1047
      %v1112 = vmul.f32 %v596, %v1048
      %v1113 = vmul.f32 %v598, %v1049
      %v1114 = vmul.f32 %v601, %v1050
      %v1115 = vmul.f32 %v603, %v1051
      %v1116 = vmul.f32 %v606, %v1052
      %v1117 = vmul.f32 %v608, %v1053
      %v1118 = vmul.f32 %v611, %v1054
      %v1119 = vmul.f32 %v613, %v1055
      %v1120 = vmul.f32 %v616, %v1056
      %v1121 = vmul.f32 %v618, %v1057
      %v1122 = vmul.f32 %v621, %v1058
      %v1123 = vmul.f32 %v623, %v1059
      %v1124 = vmul.f32 %v626, %v1060
      %v1125 = vmul.f32 %v628, %v1061
      %v1126 = vmul.f32 %v631, %v1062
      %v1127 = vmul.f32 %v633, %v1063
      %v1128 = vmul.f32 %v636, %v1064
      %v1129 = vmul.f32 %v638, %v1065
      %v1130 = vmul.f32 %v641, %v1066
      %v1131 = vmul.f32 %v643, %v1067
      %v1132 = vmul.f32 %v646, %v1068
      %v1133 = vmul.f32 %v648, %v1069
      %v1134 = vmul.f32 %v651, %v1070
      %v1135 = vmul.f32 %v653, %v1071
      %v1136 = vmul.f32 %v656, %v1072
      %v1137 = vmul.f32 %v658, %v1073
      %v1138 = vmul.f32 %v661, %v1074
      %v1139 = vmul.f32 %v663, %v1075
      %v1140 = vmul.f32 %v666, %v1076
      %v1141 = vmul.f32 %v668, %v1077
      %v1142 = vmul.f32 %v671, %v1078
      %v1143 = vmul.f32 %v673, %v1079
      %v1144 = vmul.f32 %v676, %v1080
      %v1145 = vmul.f32 %v678, %v1081
      %v1146 = vmul.f32 %v681, %v1082
      %v1147 = vmul.f32 %v683, %v1083
      %v1148 = vmul.f32 %v686, %v1084
      %v1149 = vmul.f32 %v688, %v1085
      %v1150 = vmul.f32 %v691, %v1086
      %v1151 = vmul.f32 %v693, %v1087
      %v1152 = vmul.f32 %v696, %v1088
      %v1153 = vmul.f32 %v698, %v1089
      %v1154 = vmul.f32 %v701, %v1090
      %v1155 = vmul.f32 %v703, %v1091
      %v1156 = vadd.f32 %v1092, %v1093
      %v1157 = vadd.f32 %v1156, %v1094
      %v1158 = vadd.f32 %v1157, %v1095
      %v1159 = vadd.f32 %v1158, %v1096
      %v1160 = vadd.f32 %v1159, %v1097
      %v1161 = vadd.f32 %v1160, %v1098
      %v1162 = vadd.f32 %v1161, %v1099
      %v1163 = vadd.f32 %v1162, %v1100
      %v1164 = vadd.f32 %v1163, %v1101
      %v1165 = vadd.f32 %v1164, %v1102
      %v1166 = vadd.f32 %v1165, %v1103
      %v1167 = vadd.f32 %v1166, %v1104
      %v1168 = vadd.f32 %v1167, %v1105
      %v1169 = vadd.f32 %v1168, %v1106
      %v1170 = vadd.f32 %v1169, %v1107
      %v1171 = vadd.f32 %v1170, %v1108
      %v1172 = vadd.f32 %v1171, %v1109
      %v1173 = vadd.f32 %v1172, %v1110
      %v1174 = vadd.f32 %v1173, %v1111
      %v1175 = vadd.f32 %v1174, %v1112
      %v1176 = vadd.f32 %v1175, %v1113
      %v1177 = vadd.f32 %v1176, %v1114
      %v1178 = vadd.f32 %v1177, %v1115
      %v1179 = vadd.f32 %v1178, %v1116
      %v1180 = vadd.f32 %v1179, %v1117
      %v1181 = vadd.f32 %v1180, %v1118
      %v1182 = vadd.f32 %v1181, %v1119
      %v1183 = vadd.f32 %v1182, %v1120
      %v1184 = vadd.f32 %v1183, %v1121
      %v1185 = vadd.f32 %v1184, %v1122
      %v1186 = vadd.f32 %v1185, %v1123
      %v1187 = vadd.f32 %v1186, %v1124
      %v1188 = vadd.f32 %v1187, %v1125
      %v1189 = vadd.f32 %v1188, %v1126
      %v1190 = vadd.f32 %v1189, %v1127
      %v1191 = vadd.f32 %v1190, %v1128
      %v1192 = vadd.f32 %v1191, %v1129
      %v1193 = vadd.f32 %v1192, %v1130
      %v1194 = vadd.f32 %v1193, %v1131
      %v1195 = vadd.f32 %v1194, %v1132
      %v1196 = vadd.f32 %v1195, %v1133
      %v1197 = vadd.f32 %v1196, %v1134
      %v1198 = vadd.f32 %v1197, %v1135
      %v1199 = vadd.f32 %v1198, %v1136
      %v1200 = vadd.f32 %v1199, %v1137
      %v1201 = vadd.f32 %v1200, %v1138
      %v1202 = vadd.f32 %v1201, %v1139
      %v1203 = vadd.f32 %v1202, %v1140
      %v1204 = vadd.f32 %v1203, %v1141
      %v1205 = vadd.f32 %v1204, %v1142
      %v1206 = vadd.f32 %v1205, %v1143
      %v1207 = vadd.f32 %v1206, %v1144
      %v1208 = vadd.f32 %v1207, %v1145
      %v1209 = vadd.f32 %v1208, %v1146
      %v1210 = vadd.f32 %v1209, %v1147
      %v1211 = vadd.f32 %v1210, %v1148
      %v1212 = vadd.f32 %v1211, %v1149
      %v1213 = vadd.f32 %v1212, %v1150
      %v1214 = vadd.f32 %v1213, %v1151
      %v1215 = vadd.f32 %v1214, %v1152
      %v1216 = vadd.f32 %v1215, %v1153
      %v1217 = vadd.f32 %v1216, %v1154
      %v1218 = vadd.f32 %v1217, %v1155
      %v1219 = vrot.slane %v1218, 4
      %v1220 = vadd.f32 %v1218, %v1219
      %v1221 = vrot.slane %v1220, 2
      %v1222 = vadd.f32 %v1220, %v1221
      %v1223 = vrot.slane %v1222, 1
      %v1224 = vadd.f32 %v1222, %v1223
      %v1225 = vmul.f32 %v1092, %v1092
      %v1226 = vmul.f32 %v1093, %v1093
      %v1227 = vmul.f32 %v1094, %v1094
      %v1228 = vmul.f32 %v1095, %v1095
      %v1229 = vmul.f32 %v1096, %v1096
      %v1230 = vmul.f32 %v1097, %v1097
      %v1231 = vmul.f32 %v1098, %v1098
      %v1232 = vmul.f32 %v1099, %v1099
      %v1233 = vmul.f32 %v1100, %v1100
      %v1234 = vmul.f32 %v1101, %v1101
      %v1235 = vmul.f32 %v1102, %v1102
      %v1236 = vmul.f32 %v1103, %v1103
      %v1237 = vmul.f32 %v1104, %v1104
      %v1238 = vmul.f32 %v1105, %v1105
      %v1239 = vmul.f32 %v1106, %v1106
      %v1240 = vmul.f32 %v1107, %v1107
      %v1241 = vmul.f32 %v1108, %v1108
      %v1242 = vmul.f32 %v1109, %v1109
      %v1243 = vmul.f32 %v1110, %v1110
      %v1244 = vmul.f32 %v1111, %v1111
      %v1245 = vmul.f32 %v1112, %v1112
      %v1246 = vmul.f32 %v1113, %v1113
      %v1247 = vmul.f32 %v1114, %v1114
      %v1248 = vmul.f32 %v1115, %v1115
      %v1249 = vmul.f32 %v1116, %v1116
      %v1250 = vmul.f32 %v1117, %v1117
      %v1251 = vmul.f32 %v1118, %v1118
      %v1252 = vmul.f32 %v1119, %v1119
      %v1253 = vmul.f32 %v1120, %v1120
      %v1254 = vmul.f32 %v1121, %v1121
      %v1255 = vmul.f32 %v1122, %v1122
      %v1256 = vmul.f32 %v1123, %v1123
      %v1257 = vmul.f32 %v1124, %v1124
      %v1258 = vmul.f32 %v1125, %v1125
      %v1259 = vmul.f32 %v1126, %v1126
      %v1260 = vmul.f32 %v1127, %v1127
      %v1261 = vmul.f32 %v1128, %v1128
      %v1262 = vmul.f32 %v1129, %v1129
      %v1263 = vmul.f32 %v1130, %v1130
      %v1264 = vmul.f32 %v1131, %v1131
      %v1265 = vmul.f32 %v1132, %v1132
      %v1266 = vmul.f32 %v1133, %v1133
      %v1267 = vmul.f32 %v1134, %v1134
      %v1268 = vmul.f32 %v1135, %v1135
      %v1269 = vmul.f32 %v1136, %v1136
      %v1270 = vmul.f32 %v1137, %v1137
      %v1271 = vmul.f32 %v1138, %v1138
      %v1272 = vmul.f32 %v1139, %v1139
      %v1273 = vmul.f32 %v1140, %v1140
      %v1274 = vmul.f32 %v1141, %v1141
      %v1275 = vmul.f32 %v1142, %v1142
      %v1276 = vmul.f32 %v1143, %v1143
      %v1277 = vmul.f32 %v1144, %v1144
      %v1278 = vmul.f32 %v1145, %v1145
      %v1279 = vmul.f32 %v1146, %v1146
      %v1280 = vmul.f32 %v1147, %v1147
      %v1281 = vmul.f32 %v1148, %v1148
      %v1282 = vmul.f32 %v1149, %v1149
      %v1283 = vmul.f32 %v1150, %v1150
      %v1284 = vmul.f32 %v1151, %v1151
      %v1285 = vmul.f32 %v1152, %v1152
      %v1286 = vmul.f32 %v1153, %v1153
      %v1287 = vmul.f32 %v1154, %v1154
      %v1288 = vmul.f32 %v1155, %v1155
      %v1289 = vadd.f32 %v1225, %v1226
      %v1290 = vadd.f32 %v1289, %v1227
      %v1291 = vadd.f32 %v1290, %v1228
      %v1292 = vadd.f32 %v1291, %v1229
      %v1293 = vadd.f32 %v1292, %v1230
      %v1294 = vadd.f32 %v1293, %v1231
      %v1295 = vadd.f32 %v1294, %v1232
      %v1296 = vadd.f32 %v1295, %v1233
      %v1297 = vadd.f32 %v1296, %v1234
      %v1298 = vadd.f32 %v1297, %v1235
      %v1299 = vadd.f32 %v1298, %v1236
      %v1300 = vadd.f32 %v1299, %v1237
      %v1301 = vadd.f32 %v1300, %v1238
      %v1302 = vadd.f32 %v1301, %v1239
      %v1303 = vadd.f32 %v1302, %v1240
      %v1304 = vadd.f32 %v1303, %v1241
      %v1305 = vadd.f32 %v1304, %v1242
      %v1306 = vadd.f32 %v1305, %v1243
      %v1307 = vadd.f32 %v1306, %v1244
      %v1308 = vadd.f32 %v1307, %v1245
      %v1309 = vadd.f32 %v1308, %v1246
      %v1310 = vadd.f32 %v1309, %v1247
      %v1311 = vadd.f32 %v1310, %v1248
      %v1312 = vadd.f32 %v1311, %v1249
      %v1313 = vadd.f32 %v1312, %v1250
      %v1314 = vadd.f32 %v1313, %v1251
      %v1315 = vadd.f32 %v1314, %v1252
      %v1316 = vadd.f32 %v1315, %v1253
      %v1317 = vadd.f32 %v1316, %v1254
      %v1318 = vadd.f32 %v1317, %v1255
      %v1319 = vadd.f32 %v1318, %v1256
      %v1320 = vadd.f32 %v1319, %v1257
      %v1321 = vadd.f32 %v1320, %v1258
      %v1322 = vadd.f32 %v1321, %v1259
      %v1323 = vadd.f32 %v1322, %v1260
      %v1324 = vadd.f32 %v1323, %v1261
      %v1325 = vadd.f32 %v1324, %v1262
      %v1326 = vadd.f32 %v1325, %v1263
      %v1327 = vadd.f32 %v1326, %v1264
      %v1328 = vadd.f32 %v1327, %v1265
      %v1329 = vadd.f32 %v1328, %v1266
      %v1330 = vadd.f32 %v1329, %v1267
      %v1331 = vadd.f32 %v1330, %v1268
      %v1332 = vadd.f32 %v1331, %v1269
      %v1333 = vadd.f32 %v1332, %v1270
      %v1334 = vadd.f32 %v1333, %v1271
      %v1335 = vadd.f32 %v1334, %v1272
      %v1336 = vadd.f32 %v1335, %v1273
      %v1337 = vadd.f32 %v1336, %v1274
      %v1338 = vadd.f32 %v1337, %v1275
      %v1339 = vadd.f32 %v1338, %v1276
      %v1340 = vadd.f32 %v1339, %v1277
      %v1341 = vadd.f32 %v1340, %v1278
      %v1342 = vadd.f32 %v1341, %v1279
      %v1343 = vadd.f32 %v1342, %v1280
      %v1344 = vadd.f32 %v1343, %v1281
      %v1345 = vadd.f32 %v1344, %v1282
      %v1346 = vadd.f32 %v1345, %v1283
      %v1347 = vadd.f32 %v1346, %v1284
      %v1348 = vadd.f32 %v1347, %v1285
      %v1349 = vadd.f32 %v1348, %v1286
      %v1350 = vadd.f32 %v1349, %v1287
      %v1351 = vadd.f32 %v1350, %v1288
      %v1352 = vrot.slane %v1351, 4
      %v1353 = vadd.f32 %v1351, %v1352
      %v1354 = vrot.slane %v1353, 2
      %v1355 = vadd.f32 %v1353, %v1354
      %v1356 = vrot.slane %v1355, 1
      %v1357 = vadd.f32 %v1355, %v1356
      %vm1358 = vcmask 1040384
      %v1359 = vsel %vm1358, %v1224, %v1357
      %1360 = vst [vmem:[%s211] sm:$0x3] %v1359
      %s1361 = smul.u32 64, %s16
      %p1362 = scmp.lt.s32.totalorder %s1361, 127
      %s1363 = scalar_select %p1362, %s1361, 127
      %s1364 = smul.addr %s1363, 8
      %s1365 = scalar_lea.vmem %s3, %s1364
      %p1366 = scmp.lt.s32.totalorder %s16, 1
      %s1367 = scalar_select %p1366, %s16, 1
      %s1368 = smul.addr %s1367, 2
      %s1369 = scalar_lea.vmem %s4, %s1368
      // Predicated region
      $region33: #{double_conv_pallas.4} parent=31 // pred_check
        %p1370 = pneg %p102
      $region34: #{double_conv_pallas.4} parent=31 // pred_check_branch
        %1372 = sbr.rel (%p1370) target = $region36
      $region35: #{double_conv_pallas.4} parent=31 // pred_region
        %s1373 = smul.u32 64, %s16
      $region36: #{double_conv_pallas.4} parent=31 // pred_fallthru
        _
      // Predicated region
      $region37: #{double_conv_pallas.4} parent=31 // pred_check
        %p1374 = pneg %p128
      $region38: #{double_conv_pallas.4} parent=31 // pred_check_branch
        %1376 = sbr.rel (%p1374) target = $region40
      $region39: #{double_conv_pallas.4} parent=31 // pred_region
        _
      $region40: #{double_conv_pallas.4} parent=31 // pred_fallthru
        _
    $region32: #{double_conv_pallas.4} parent=5 // pred_fallthru
      _
    %p1377 = scmp.le.s32.totalorder 2, %s11
    // Predicated region
    $region41: #{double_conv_pallas.4} parent=5 // pred_check
      %p1378 = pneg %p1377
    $region42: #{double_conv_pallas.4} parent=5 // pred_check_branch
      %1380 = sbr.rel (%p1378) target = $region44
    $region43: #{double_conv_pallas.4} parent=5 // pred_region
      %s1381 = ssub.s32 %s11, 2
      // Predicated region
      $region45: #{double_conv_pallas.4} parent=43 // pred_check
        %p1382 = pneg %p108
      $region46: #{double_conv_pallas.4} parent=43 // pred_check_branch
        %1384 = sbr.rel (%p1382) target = $region48
      $region47: #{double_conv_pallas.4} parent=43 // pred_region
        %s1385 = smul.u32 64, %s17
        %p1386 = scmp.lt.s32.totalorder %s1385, 127
        %s1387 = scalar_select %p1386, %s1385, 127
        %s1388 = smul.addr %s1387, 8
        %s1389 = scalar_lea.vmem %s3, %s1388
      $region48: #{double_conv_pallas.4} parent=43 // pred_fallthru
        _
      // Predicated region
      $region49: #{double_conv_pallas.4} parent=43 // pred_check
        %p1390 = pneg %p134
      $region50: #{double_conv_pallas.4} parent=43 // pred_check_branch
        %1392 = sbr.rel (%p1390) target = $region52
      $region51: #{double_conv_pallas.4} parent=43 // pred_region
        %p1393 = scmp.lt.s32.totalorder %s17, 1
        %s1394 = scalar_select %p1393, %s17, 1
        %s1395 = smul.addr %s1394, 2
        %s1396 = scalar_lea.vmem %s4, %s1395
      $region52: #{double_conv_pallas.4} parent=43 // pred_fallthru
        _
    $region44: #{double_conv_pallas.4} parent=5 // pred_fallthru
      _
  $region6: #{double_conv_pallas.4} parent=0 // loop_footer
    %s15 = sadd.s32 1, %s11
  $region7: #{double_conv_pallas.4} parent=0 // loop_footer_branch
    %10 = sbr.rel target = $region3
  $region8: #{double_conv_pallas.4} parent=0 // loop_exit
    _

// kernel: double_conv_pallas.7
$region0: #{double_conv_pallas.7}
  #allocation0 [shape = 'u32[]', space=smem, size = 0x4, offset = 0x4, fixed_abs, tag = 'smem constant byte address 0x4 - core index']
  #allocation1 [shape = 'u32[72,128]{1,0:T(1,128)}', space=vmem, size = 0x9000, scoped, tag = 'internal scratch']
  %s0 = inlined_call_operand.vmem [shape: f32[1024,128], index: 0, kind: input, shape index: {}]
  %s1 = inlined_call_operand.vmem [shape: f32[1,128], index: 1, kind: input, shape index: {}]
  %s2 = inlined_call_operand.vmem [shape: f32[1,128], index: 2, kind: input, shape index: {}]
  %s3 = inlined_call_operand.vmem [shape: f32[1024,128], index: 3, kind: output, shape index: {}]
  %s4 = sld [smem:[#allocation0]]
  $region45: #{double_conv_pallas.7} parent=0
    _
  %s6 = ssub.s32 1, %s4
  %s7 = scalar_select 0, %s6, %s4
  loop: start=0, step=1, limit=4
  $region2: #{double_conv_pallas.7} parent=0 // loop_pre_header
    _
  $region3: #{double_conv_pallas.7} parent=0 // loop_header
    %s9 = sphi 0, %s13
    %p10 = scmp.ge.s32.totalorder %s9, 4
    %s19 = sphi 0, %s21
    %s22 = sphi 0, %s19
    %s23 = sphi 0, %s22
    %s39 = sphi 0, %s23
    %s43 = sphi 0, %s43
    %s45 = sphi 0, %s43
    %s46 = sphi 0, %s45
    %s60 = sphi 0, %s46
    %s64 = sphi 0, %s64
    %s66 = sphi 0, %s64
    %s67 = sphi 0, %s66
    %s81 = sphi 0, %s67
    %s87 = sphi 0, %s89
    %s90 = sphi 0, %s87
    %s91 = sphi 0, %s90
    %s107 = sphi 0, %s91
  $region4: #{double_conv_pallas.7} parent=0 // loop_header_branch
    %12 = sbr.rel (%p10) target = $region8
  $region5: #{double_conv_pallas.7} parent=0 // loop_body
    %s14 = ssub.s32 %s9, 1
    %s15 = ssub.s32 %s9, 2
    %s16 = sadd.s32 %s9, 1
    %s17 = ssub.s32 %s9, %s16
    %p18 = scmp.eq.s32.totalorder %s17, 0
    %s20 = sadd.s32 %s19, 1
    %s21 = scalar_select %p18, %s19, %s20
    %p24 = pneg %p18
    %p25 = scmp.eq.s32.totalorder %s9, 1
    %p26 = por %p24, %p25
    %p27 = scmp.ne.s32.totalorder %s19, %s22
    %p28 = scmp.eq.s32.totalorder %s9, 0
    %p29 = por %p27, %p28
    %p30 = scmp.ne.s32.totalorder %s19, %s22
    %p31 = scmp.eq.s32.totalorder %s14, 1
    %p32 = por %p30, %p31
    %p33 = scmp.ne.s32.totalorder %s22, %s23
    %p34 = scmp.eq.s32.totalorder %s14, 0
    %p35 = por %p33, %p34
    %p36 = scmp.ne.s32.totalorder %s22, %s23
    %p37 = scmp.eq.s32.totalorder %s15, 1
    %p38 = por %p36, %p37
    %p40 = scmp.ne.s32.totalorder %s23, %s39
    %p41 = scmp.eq.s32.totalorder %s15, 0
    %p42 = por %p40, %p41
    %s44 = sadd.s32 %s43, 1
    %p47 = scmp.eq.s32.totalorder %s9, 1
    %p48 = scmp.ne.s32.totalorder %s43, %s45
    %p49 = scmp.eq.s32.totalorder %s9, 0
    %p50 = por %p48, %p49
    %p51 = scmp.ne.s32.totalorder %s43, %s45
    %p52 = scmp.eq.s32.totalorder %s14, 1
    %p53 = por %p51, %p52
    %p54 = scmp.ne.s32.totalorder %s45, %s46
    %p55 = scmp.eq.s32.totalorder %s14, 0
    %p56 = por %p54, %p55
    %p57 = scmp.ne.s32.totalorder %s45, %s46
    %p58 = scmp.eq.s32.totalorder %s15, 1
    %p59 = por %p57, %p58
    %p61 = scmp.ne.s32.totalorder %s46, %s60
    %p62 = scmp.eq.s32.totalorder %s15, 0
    %p63 = por %p61, %p62
    %s65 = sadd.s32 %s64, 1
    %p68 = scmp.eq.s32.totalorder %s9, 1
    %p69 = scmp.ne.s32.totalorder %s64, %s66
    %p70 = scmp.eq.s32.totalorder %s9, 0
    %p71 = por %p69, %p70
    %p72 = scmp.ne.s32.totalorder %s64, %s66
    %p73 = scmp.eq.s32.totalorder %s14, 1
    %p74 = por %p72, %p73
    %p75 = scmp.ne.s32.totalorder %s66, %s67
    %p76 = scmp.eq.s32.totalorder %s14, 0
    %p77 = por %p75, %p76
    %p78 = scmp.ne.s32.totalorder %s66, %s67
    %p79 = scmp.eq.s32.totalorder %s15, 1
    %p80 = por %p78, %p79
    %p82 = scmp.ne.s32.totalorder %s67, %s81
    %p83 = scmp.eq.s32.totalorder %s15, 0
    %p84 = por %p82, %p83
    %s85 = ssub.s32 %s9, %s16
    %p86 = scmp.eq.s32.totalorder %s85, 0
    %s88 = sadd.s32 %s87, 1
    %s89 = scalar_select %p86, %s87, %s88
    %p92 = pneg %p86
    %p93 = scmp.eq.s32.totalorder %s9, 1
    %p94 = por %p92, %p93
    %p95 = scmp.ne.s32.totalorder %s87, %s90
    %p96 = scmp.eq.s32.totalorder %s9, 0
    %p97 = por %p95, %p96
    %p98 = scmp.ne.s32.totalorder %s87, %s90
    %p99 = scmp.eq.s32.totalorder %s14, 1
    %p100 = por %p98, %p99
    %p101 = scmp.ne.s32.totalorder %s90, %s91
    %p102 = scmp.eq.s32.totalorder %s14, 0
    %p103 = por %p101, %p102
    %p104 = scmp.ne.s32.totalorder %s90, %s91
    %p105 = scmp.eq.s32.totalorder %s15, 1
    %p106 = por %p104, %p105
    %p108 = scmp.ne.s32.totalorder %s91, %s107
    %p109 = scmp.eq.s32.totalorder %s15, 0
    %p110 = por %p108, %p109
    %p111 = scmp.le.s32.totalorder 1, %s9
    %p112 = scmp.lt.s32.totalorder %s9, 3
    %p113 = pnand %p111, %p112
    %p114 = pneg %p113
    // Predicated region
    $region9: #{double_conv_pallas.7} parent=5 // pred_check
      _
    $region10: #{double_conv_pallas.7} parent=5 // pred_check_branch
      %116 = sbr.rel (%p113) target = $region12
    $region11: #{double_conv_pallas.7} parent=5 // pred_region
      %s117 = ssub.s32 %s9, 1
      // Predicated region
      $region13: #{double_conv_pallas.7} parent=11 // pred_check
        %p118 = pneg %p56
      $region14: #{double_conv_pallas.7} parent=11 // pred_check_branch
        %120 = sbr.rel (%p118) target = $region16
      $region15: #{double_conv_pallas.7} parent=11 // pred_region
        _
      $region16: #{double_conv_pallas.7} parent=11 // pred_fallthru
        _
      // Predicated region
      $region17: #{double_conv_pallas.7} parent=11 // pred_check
        %p121 = pneg %p77
      $region18: #{double_conv_pallas.7} parent=11 // pred_check_branch
        %123 = sbr.rel (%p121) target = $region20
      $region19: #{double_conv_pallas.7} parent=11 // pred_region
        _
      $region20: #{double_conv_pallas.7} parent=11 // pred_fallthru
        _
    $region12: #{double_conv_pallas.7} parent=5 // pred_fallthru
      _
    %p124 = scmp.lt.s32.totalorder %s9, 2
    // Predicated region
    $region21: #{double_conv_pallas.7} parent=5 // pred_check
      %p125 = pneg %p124
    $region22: #{double_conv_pallas.7} parent=5 // pred_check_branch
      %127 = sbr.rel (%p125) target = $region24
    $region23: #{double_conv_pallas.7} parent=5 // pred_region
      // Predicated region
      $region25: #{double_conv_pallas.7} parent=23 // pred_check
        %p128 = pneg %p29
      $region26: #{double_conv_pallas.7} parent=23 // pred_check_branch
        %130 = sbr.rel (%p128) target = $region28
      $region27: #{double_conv_pallas.7} parent=23 // pred_region
        %s131 = smul.u32 64, %s9
        %p132 = scmp.lt.s32.totalorder %s131, 127
        %s133 = scalar_select %p132, %s131, 127
        %s134 = smul.addr %s133, 8
        %s135 = scalar_lea.vmem %s0, %s134
        %s136 = smul.u32 64, %s9
      $region28: #{double_conv_pallas.7} parent=23 // pred_fallthru
        _
    $region24: #{double_conv_pallas.7} parent=5 // pred_fallthru
      _
    %p137 = scmp.le.s32.totalorder 1, %s9
    %p138 = scmp.lt.s32.totalorder %s9, 3
    %p139 = pnand %p137, %p138
    %p140 = pneg %p139
    // Predicated region
    $region29: #{double_conv_pallas.7} parent=5 // pred_check
      _
    $region30: #{double_conv_pallas.7} parent=5 // pred_check_branch
      %142 = sbr.rel (%p139) target = $region32
    $region31: #{double_conv_pallas.7} parent=5 // pred_region
      %s143 = ssub.s32 %s9, 1
      %s144 = smul.u32 64, %s14
      %p145 = scmp.lt.s32.totalorder %s144, 127
      %s146 = scalar_select %p145, %s144, 127
      %s147 = smul.addr %s146, 8
      %s148 = scalar_lea.vmem %s0, %s147
      %p149 = pneg %p35
      %p150 = pneg %p32
      %p151 = pneg %p56
      %p152 = pneg %p53
      %p153 = pneg %p77
      %p154 = pneg %p74
      %p155 = pneg %p103
      %p156 = pneg %p100
      %s157 = smul.u32 64, %s14
      %p158 = scmp.lt.s32.totalorder %s157, 127
      %s159 = scalar_select %p158, %s157, 127
      %s160 = smul.addr %s159, 8
      %s161 = scalar_lea.vmem %s3, %s160
      %s162 = smul.u32 64, %s14
      %p163 = scmp.lt.s32.totalorder %s162, 127
      %s164 = scalar_select %p163, %s162, 127
      %s165 = smul.addr %s164, 8
      %s166 = scalar_lea.vmem %s0, %s165
      %s167 = smul.u32 64, %s14
      %s168 = smul.u32 64, %s14
      %p169 = scmp.lt.s32.totalorder %s168, 127
      %s170 = scalar_select %p169, %s168, 127
      %s171 = smul.addr %s170, 8
      %s172 = scalar_lea.vmem %s3, %s171
      %s173 = smul.u32 64, %s14
      %v174 = vld [vmem:[%s166] sm:$0xff]
      %v175 = vld [vmem:[%s166 + $0x8] sm:$0xff]
      %v176 = vld [vmem:[%s166 + $0x10] sm:$0xff]
      %v177 = vld [vmem:[%s166 + $0x18] sm:$0xff]
      %v178 = vld [vmem:[%s166 + $0x20] sm:$0xff]
      %v179 = vld [vmem:[%s166 + $0x28] sm:$0xff]
      %v180 = vld [vmem:[%s166 + $0x30] sm:$0xff]
      %v181 = vld [vmem:[%s166 + $0x38] sm:$0xff]
      %v182 = vld [vmem:[%s166 + $0x40] sm:$0xff]
      %v183 = vld [vmem:[%s166 + $0x48] sm:$0xff]
      %v184 = vld [vmem:[%s166 + $0x50] sm:$0xff]
      %v185 = vld [vmem:[%s166 + $0x58] sm:$0xff]
      %v186 = vld [vmem:[%s166 + $0x60] sm:$0xff]
      %v187 = vld [vmem:[%s166 + $0x68] sm:$0xff]
      %v188 = vld [vmem:[%s166 + $0x70] sm:$0xff]
      %v189 = vld [vmem:[%s166 + $0x78] sm:$0xff]
      %v190 = vld [vmem:[%s166 + $0x80] sm:$0xff]
      %v191 = vld [vmem:[%s166 + $0x88] sm:$0xff]
      %v192 = vld [vmem:[%s166 + $0x90] sm:$0xff]
      %v193 = vld [vmem:[%s166 + $0x98] sm:$0xff]
      %v194 = vld [vmem:[%s166 + $0xa0] sm:$0xff]
      %v195 = vld [vmem:[%s166 + $0xa8] sm:$0xff]
      %v196 = vld [vmem:[%s166 + $0xb0] sm:$0xff]
      %v197 = vld [vmem:[%s166 + $0xb8] sm:$0xff]
      %v198 = vld [vmem:[%s166 + $0xc0] sm:$0xff]
      %v199 = vld [vmem:[%s166 + $0xc8] sm:$0xff]
      %v200 = vld [vmem:[%s166 + $0xd0] sm:$0xff]
      %v201 = vld [vmem:[%s166 + $0xd8] sm:$0xff]
      %v202 = vld [vmem:[%s166 + $0xe0] sm:$0xff]
      %v203 = vld [vmem:[%s166 + $0xe8] sm:$0xff]
      %v204 = vld [vmem:[%s166 + $0xf0] sm:$0xff]
      %v205 = vld [vmem:[%s166 + $0xf8] sm:$0xff]
      %v206 = vld [vmem:[%s166 + $0x100] sm:$0xff]
      %v207 = vld [vmem:[%s166 + $0x108] sm:$0xff]
      %v208 = vld [vmem:[%s166 + $0x110] sm:$0xff]
      %v209 = vld [vmem:[%s166 + $0x118] sm:$0xff]
      %v210 = vld [vmem:[%s166 + $0x120] sm:$0xff]
      %v211 = vld [vmem:[%s166 + $0x128] sm:$0xff]
      %v212 = vld [vmem:[%s166 + $0x130] sm:$0xff]
      %v213 = vld [vmem:[%s166 + $0x138] sm:$0xff]
      %v214 = vld [vmem:[%s166 + $0x140] sm:$0xff]
      %v215 = vld [vmem:[%s166 + $0x148] sm:$0xff]
      %v216 = vld [vmem:[%s166 + $0x150] sm:$0xff]
      %v217 = vld [vmem:[%s166 + $0x158] sm:$0xff]
      %v218 = vld [vmem:[%s166 + $0x160] sm:$0xff]
      %v219 = vld [vmem:[%s166 + $0x168] sm:$0xff]
      %v220 = vld [vmem:[%s166 + $0x170] sm:$0xff]
      %v221 = vld [vmem:[%s166 + $0x178] sm:$0xff]
      %v222 = vld [vmem:[%s166 + $0x180] sm:$0xff]
      %v223 = vld [vmem:[%s166 + $0x188] sm:$0xff]
      %v224 = vld [vmem:[%s166 + $0x190] sm:$0xff]
      %v225 = vld [vmem:[%s166 + $0x198] sm:$0xff]
      %v226 = vld [vmem:[%s166 + $0x1a0] sm:$0xff]
      %v227 = vld [vmem:[%s166 + $0x1a8] sm:$0xff]
      %v228 = vld [vmem:[%s166 + $0x1b0] sm:$0xff]
      %v229 = vld [vmem:[%s166 + $0x1b8] sm:$0xff]
      %v230 = vld [vmem:[%s166 + $0x1c0] sm:$0xff]
      %v231 = vld [vmem:[%s166 + $0x1c8] sm:$0xff]
      %v232 = vld [vmem:[%s166 + $0x1d0] sm:$0xff]
      %v233 = vld [vmem:[%s166 + $0x1d8] sm:$0xff]
      %v234 = vld [vmem:[%s166 + $0x1e0] sm:$0xff]
      %v235 = vld [vmem:[%s166 + $0x1e8] sm:$0xff]
      %v236 = vld [vmem:[%s166 + $0x1f0] sm:$0xff]
      %v237 = vld [vmem:[%s166 + $0x1f8] sm:$0xff]
      %v238 = vld [vmem:[%s1] sm:$0x1]
      %v240 = vperm.slane %v238, 0
      %v242 = vmul.f32 %v174, %v240
      %v243 = vmul.f32 %v175, %v240
      %v244 = vmul.f32 %v176, %v240
      %v245 = vmul.f32 %v177, %v240
      %v246 = vmul.f32 %v178, %v240
      %v247 = vmul.f32 %v179, %v240
      %v248 = vmul.f32 %v180, %v240
      %v249 = vmul.f32 %v181, %v240
      %v250 = vmul.f32 %v182, %v240
      %v251 = vmul.f32 %v183, %v240
      %v252 = vmul.f32 %v184, %v240
      %v253 = vmul.f32 %v185, %v240
      %v254 = vmul.f32 %v186, %v240
      %v255 = vmul.f32 %v187, %v240
      %v256 = vmul.f32 %v188, %v240
      %v257 = vmul.f32 %v189, %v240
      %v258 = vmul.f32 %v190, %v240
      %v259 = vmul.f32 %v191, %v240
      %v260 = vmul.f32 %v192, %v240
      %v261 = vmul.f32 %v193, %v240
      %v262 = vmul.f32 %v194, %v240
      %v263 = vmul.f32 %v195, %v240
      %v264 = vmul.f32 %v196, %v240
      %v265 = vmul.f32 %v197, %v240
      %v266 = vmul.f32 %v198, %v240
      %v267 = vmul.f32 %v199, %v240
      %v268 = vmul.f32 %v200, %v240
      %v269 = vmul.f32 %v201, %v240
      %v270 = vmul.f32 %v202, %v240
      %v271 = vmul.f32 %v203, %v240
      %v272 = vmul.f32 %v204, %v240
      %v273 = vmul.f32 %v205, %v240
      %v274 = vmul.f32 %v206, %v240
      %v275 = vmul.f32 %v207, %v240
      %v276 = vmul.f32 %v208, %v240
      %v277 = vmul.f32 %v209, %v240
      %v278 = vmul.f32 %v210, %v240
      %v279 = vmul.f32 %v211, %v240
      %v280 = vmul.f32 %v212, %v240
      %v281 = vmul.f32 %v213, %v240
      %v282 = vmul.f32 %v214, %v240
      %v283 = vmul.f32 %v215, %v240
      %v284 = vmul.f32 %v216, %v240
      %v285 = vmul.f32 %v217, %v240
      %v286 = vmul.f32 %v218, %v240
      %v287 = vmul.f32 %v219, %v240
      %v288 = vmul.f32 %v220, %v240
      %v289 = vmul.f32 %v221, %v240
      %v290 = vmul.f32 %v222, %v240
      %v291 = vmul.f32 %v223, %v240
      %v292 = vmul.f32 %v224, %v240
      %v293 = vmul.f32 %v225, %v240
      %v294 = vmul.f32 %v226, %v240
      %v295 = vmul.f32 %v227, %v240
      %v296 = vmul.f32 %v228, %v240
      %v297 = vmul.f32 %v229, %v240
      %v298 = vmul.f32 %v230, %v240
      %v299 = vmul.f32 %v231, %v240
      %v300 = vmul.f32 %v232, %v240
      %v301 = vmul.f32 %v233, %v240
      %v302 = vmul.f32 %v234, %v240
      %v303 = vmul.f32 %v235, %v240
      %v304 = vmul.f32 %v236, %v240
      %v305 = vmul.f32 %v237, %v240
      %v306 = vld [vmem:[%s2] sm:$0x1]
      %v308 = vperm.slane %v306, 0
      %v310 = vadd.f32 %v242, %v308
      %v311 = vadd.f32 %v243, %v308
      %v312 = vadd.f32 %v244, %v308
      %v313 = vadd.f32 %v245, %v308
      %v314 = vadd.f32 %v246, %v308
      %v315 = vadd.f32 %v247, %v308
      %v316 = vadd.f32 %v248, %v308
      %v317 = vadd.f32 %v249, %v308
      %v318 = vadd.f32 %v250, %v308
      %v319 = vadd.f32 %v251, %v308
      %v320 = vadd.f32 %v252, %v308
      %v321 = vadd.f32 %v253, %v308
      %v322 = vadd.f32 %v254, %v308
      %v323 = vadd.f32 %v255, %v308
      %v324 = vadd.f32 %v256, %v308
      %v325 = vadd.f32 %v257, %v308
      %v326 = vadd.f32 %v258, %v308
      %v327 = vadd.f32 %v259, %v308
      %v328 = vadd.f32 %v260, %v308
      %v329 = vadd.f32 %v261, %v308
      %v330 = vadd.f32 %v262, %v308
      %v331 = vadd.f32 %v263, %v308
      %v332 = vadd.f32 %v264, %v308
      %v333 = vadd.f32 %v265, %v308
      %v334 = vadd.f32 %v266, %v308
      %v335 = vadd.f32 %v267, %v308
      %v336 = vadd.f32 %v268, %v308
      %v337 = vadd.f32 %v269, %v308
      %v338 = vadd.f32 %v270, %v308
      %v339 = vadd.f32 %v271, %v308
      %v340 = vadd.f32 %v272, %v308
      %v341 = vadd.f32 %v273, %v308
      %v342 = vadd.f32 %v274, %v308
      %v343 = vadd.f32 %v275, %v308
      %v344 = vadd.f32 %v276, %v308
      %v345 = vadd.f32 %v277, %v308
      %v346 = vadd.f32 %v278, %v308
      %v347 = vadd.f32 %v279, %v308
      %v348 = vadd.f32 %v280, %v308
      %v349 = vadd.f32 %v281, %v308
      %v350 = vadd.f32 %v282, %v308
      %v351 = vadd.f32 %v283, %v308
      %v352 = vadd.f32 %v284, %v308
      %v353 = vadd.f32 %v285, %v308
      %v354 = vadd.f32 %v286, %v308
      %v355 = vadd.f32 %v287, %v308
      %v356 = vadd.f32 %v288, %v308
      %v357 = vadd.f32 %v289, %v308
      %v358 = vadd.f32 %v290, %v308
      %v359 = vadd.f32 %v291, %v308
      %v360 = vadd.f32 %v292, %v308
      %v361 = vadd.f32 %v293, %v308
      %v362 = vadd.f32 %v294, %v308
      %v363 = vadd.f32 %v295, %v308
      %v364 = vadd.f32 %v296, %v308
      %v365 = vadd.f32 %v297, %v308
      %v366 = vadd.f32 %v298, %v308
      %v367 = vadd.f32 %v299, %v308
      %v368 = vadd.f32 %v300, %v308
      %v369 = vadd.f32 %v301, %v308
      %v370 = vadd.f32 %v302, %v308
      %v371 = vadd.f32 %v303, %v308
      %v372 = vadd.f32 %v304, %v308
      %v373 = vadd.f32 %v305, %v308
      %vm374 = vcmp.gt.f32.partialorder %v310, 0.0
      %vm375 = vcmp.gt.f32.partialorder %v311, 0.0
      %vm376 = vcmp.gt.f32.partialorder %v312, 0.0
      %vm377 = vcmp.gt.f32.partialorder %v313, 0.0
      %vm378 = vcmp.gt.f32.partialorder %v314, 0.0
      %vm379 = vcmp.gt.f32.partialorder %v315, 0.0
      %vm380 = vcmp.gt.f32.partialorder %v316, 0.0
      %vm381 = vcmp.gt.f32.partialorder %v317, 0.0
      %vm382 = vcmp.gt.f32.partialorder %v318, 0.0
      %vm383 = vcmp.gt.f32.partialorder %v319, 0.0
      %vm384 = vcmp.gt.f32.partialorder %v320, 0.0
      %vm385 = vcmp.gt.f32.partialorder %v321, 0.0
      %vm386 = vcmp.gt.f32.partialorder %v322, 0.0
      %vm387 = vcmp.gt.f32.partialorder %v323, 0.0
      %vm388 = vcmp.gt.f32.partialorder %v324, 0.0
      %vm389 = vcmp.gt.f32.partialorder %v325, 0.0
      %vm390 = vcmp.gt.f32.partialorder %v326, 0.0
      %vm391 = vcmp.gt.f32.partialorder %v327, 0.0
      %vm392 = vcmp.gt.f32.partialorder %v328, 0.0
      %vm393 = vcmp.gt.f32.partialorder %v329, 0.0
      %vm394 = vcmp.gt.f32.partialorder %v330, 0.0
      %vm395 = vcmp.gt.f32.partialorder %v331, 0.0
      %vm396 = vcmp.gt.f32.partialorder %v332, 0.0
      %vm397 = vcmp.gt.f32.partialorder %v333, 0.0
      %vm398 = vcmp.gt.f32.partialorder %v334, 0.0
      %vm399 = vcmp.gt.f32.partialorder %v335, 0.0
      %vm400 = vcmp.gt.f32.partialorder %v336, 0.0
      %vm401 = vcmp.gt.f32.partialorder %v337, 0.0
      %vm402 = vcmp.gt.f32.partialorder %v338, 0.0
      %vm403 = vcmp.gt.f32.partialorder %v339, 0.0
      %vm404 = vcmp.gt.f32.partialorder %v340, 0.0
      %vm405 = vcmp.gt.f32.partialorder %v341, 0.0
      %vm406 = vcmp.gt.f32.partialorder %v342, 0.0
      %vm407 = vcmp.gt.f32.partialorder %v343, 0.0
      %vm408 = vcmp.gt.f32.partialorder %v344, 0.0
      %vm409 = vcmp.gt.f32.partialorder %v345, 0.0
      %vm410 = vcmp.gt.f32.partialorder %v346, 0.0
      %vm411 = vcmp.gt.f32.partialorder %v347, 0.0
      %vm412 = vcmp.gt.f32.partialorder %v348, 0.0
      %vm413 = vcmp.gt.f32.partialorder %v349, 0.0
      %vm414 = vcmp.gt.f32.partialorder %v350, 0.0
      %vm415 = vcmp.gt.f32.partialorder %v351, 0.0
      %vm416 = vcmp.gt.f32.partialorder %v352, 0.0
      %vm417 = vcmp.gt.f32.partialorder %v353, 0.0
      %vm418 = vcmp.gt.f32.partialorder %v354, 0.0
      %vm419 = vcmp.gt.f32.partialorder %v355, 0.0
      %vm420 = vcmp.gt.f32.partialorder %v356, 0.0
      %vm421 = vcmp.gt.f32.partialorder %v357, 0.0
      %vm422 = vcmp.gt.f32.partialorder %v358, 0.0
      %vm423 = vcmp.gt.f32.partialorder %v359, 0.0
      %vm424 = vcmp.gt.f32.partialorder %v360, 0.0
      %vm425 = vcmp.gt.f32.partialorder %v361, 0.0
      %vm426 = vcmp.gt.f32.partialorder %v362, 0.0
      %vm427 = vcmp.gt.f32.partialorder %v363, 0.0
      %vm428 = vcmp.gt.f32.partialorder %v364, 0.0
      %vm429 = vcmp.gt.f32.partialorder %v365, 0.0
      %vm430 = vcmp.gt.f32.partialorder %v366, 0.0
      %vm431 = vcmp.gt.f32.partialorder %v367, 0.0
      %vm432 = vcmp.gt.f32.partialorder %v368, 0.0
      %vm433 = vcmp.gt.f32.partialorder %v369, 0.0
      %vm434 = vcmp.gt.f32.partialorder %v370, 0.0
      %vm435 = vcmp.gt.f32.partialorder %v371, 0.0
      %vm436 = vcmp.gt.f32.partialorder %v372, 0.0
      %vm437 = vcmp.gt.f32.partialorder %v373, 0.0
      %v438 = vmul.f32 %v310, 0.01
      %v439 = vmul.f32 %v311, 0.01
      %v440 = vmul.f32 %v312, 0.01
      %v441 = vmul.f32 %v313, 0.01
      %v442 = vmul.f32 %v314, 0.01
      %v443 = vmul.f32 %v315, 0.01
      %v444 = vmul.f32 %v316, 0.01
      %v445 = vmul.f32 %v317, 0.01
      %v446 = vmul.f32 %v318, 0.01
      %v447 = vmul.f32 %v319, 0.01
      %v448 = vmul.f32 %v320, 0.01
      %v449 = vmul.f32 %v321, 0.01
      %v450 = vmul.f32 %v322, 0.01
      %v451 = vmul.f32 %v323, 0.01
      %v452 = vmul.f32 %v324, 0.01
      %v453 = vmul.f32 %v325, 0.01
      %v454 = vmul.f32 %v326, 0.01
      %v455 = vmul.f32 %v327, 0.01
      %v456 = vmul.f32 %v328, 0.01
      %v457 = vmul.f32 %v329, 0.01
      %v458 = vmul.f32 %v330, 0.01
      %v459 = vmul.f32 %v331, 0.01
      %v460 = vmul.f32 %v332, 0.01
      %v461 = vmul.f32 %v333, 0.01
      %v462 = vmul.f32 %v334, 0.01
      %v463 = vmul.f32 %v335, 0.01
      %v464 = vmul.f32 %v336, 0.01
      %v465 = vmul.f32 %v337, 0.01
      %v466 = vmul.f32 %v338, 0.01
      %v467 = vmul.f32 %v339, 0.01
      %v468 = vmul.f32 %v340, 0.01
      %v469 = vmul.f32 %v341, 0.01
      %v470 = vmul.f32 %v342, 0.01
      %v471 = vmul.f32 %v343, 0.01
      %v472 = vmul.f32 %v344, 0.01
      %v473 = vmul.f32 %v345, 0.01
      %v474 = vmul.f32 %v346, 0.01
      %v475 = vmul.f32 %v347, 0.01
      %v476 = vmul.f32 %v348, 0.01
      %v477 = vmul.f32 %v349, 0.01
      %v478 = vmul.f32 %v350, 0.01
      %v479 = vmul.f32 %v351, 0.01
      %v480 = vmul.f32 %v352, 0.01
      %v481 = vmul.f32 %v353, 0.01
      %v482 = vmul.f32 %v354, 0.01
      %v483 = vmul.f32 %v355, 0.01
      %v484 = vmul.f32 %v356, 0.01
      %v485 = vmul.f32 %v357, 0.01
      %v486 = vmul.f32 %v358, 0.01
      %v487 = vmul.f32 %v359, 0.01
      %v488 = vmul.f32 %v360, 0.01
      %v489 = vmul.f32 %v361, 0.01
      %v490 = vmul.f32 %v362, 0.01
      %v491 = vmul.f32 %v363, 0.01
      %v492 = vmul.f32 %v364, 0.01
      %v493 = vmul.f32 %v365, 0.01
      %v494 = vmul.f32 %v366, 0.01
      %v495 = vmul.f32 %v367, 0.01
      %v496 = vmul.f32 %v368, 0.01
      %v497 = vmul.f32 %v369, 0.01
      %v498 = vmul.f32 %v370, 0.01
      %v499 = vmul.f32 %v371, 0.01
      %v500 = vmul.f32 %v372, 0.01
      %v501 = vmul.f32 %v373, 0.01
      %v502 = vsel %vm374, %v310, %v438
      %v503 = vsel %vm375, %v311, %v439
      %v504 = vsel %vm376, %v312, %v440
      %v505 = vsel %vm377, %v313, %v441
      %v506 = vsel %vm378, %v314, %v442
      %v507 = vsel %vm379, %v315, %v443
      %v508 = vsel %vm380, %v316, %v444
      %v509 = vsel %vm381, %v317, %v445
      %v510 = vsel %vm382, %v318, %v446
      %v511 = vsel %vm383, %v319, %v447
      %v512 = vsel %vm384, %v320, %v448
      %v513 = vsel %vm385, %v321, %v449
      %v514 = vsel %vm386, %v322, %v450
      %v515 = vsel %vm387, %v323, %v451
      %v516 = vsel %vm388, %v324, %v452
      %v517 = vsel %vm389, %v325, %v453
      %v518 = vsel %vm390, %v326, %v454
      %v519 = vsel %vm391, %v327, %v455
      %v520 = vsel %vm392, %v328, %v456
      %v521 = vsel %vm393, %v329, %v457
      %v522 = vsel %vm394, %v330, %v458
      %v523 = vsel %vm395, %v331, %v459
      %v524 = vsel %vm396, %v332, %v460
      %v525 = vsel %vm397, %v333, %v461
      %v526 = vsel %vm398, %v334, %v462
      %v527 = vsel %vm399, %v335, %v463
      %v528 = vsel %vm400, %v336, %v464
      %v529 = vsel %vm401, %v337, %v465
      %v530 = vsel %vm402, %v338, %v466
      %v531 = vsel %vm403, %v339, %v467
      %v532 = vsel %vm404, %v340, %v468
      %v533 = vsel %vm405, %v341, %v469
      %v534 = vsel %vm406, %v342, %v470
      %v535 = vsel %vm407, %v343, %v471
      %v536 = vsel %vm408, %v344, %v472
      %v537 = vsel %vm409, %v345, %v473
      %v538 = vsel %vm410, %v346, %v474
      %v539 = vsel %vm411, %v347, %v475
      %v540 = vsel %vm412, %v348, %v476
      %v541 = vsel %vm413, %v349, %v477
      %v542 = vsel %vm414, %v350, %v478
      %v543 = vsel %vm415, %v351, %v479
      %v544 = vsel %vm416, %v352, %v480
      %v545 = vsel %vm417, %v353, %v481
      %v546 = vsel %vm418, %v354, %v482
      %v547 = vsel %vm419, %v355, %v483
      %v548 = vsel %vm420, %v356, %v484
      %v549 = vsel %vm421, %v357, %v485
      %v550 = vsel %vm422, %v358, %v486
      %v551 = vsel %vm423, %v359, %v487
      %v552 = vsel %vm424, %v360, %v488
      %v553 = vsel %vm425, %v361, %v489
      %v554 = vsel %vm426, %v362, %v490
      %v555 = vsel %vm427, %v363, %v491
      %v556 = vsel %vm428, %v364, %v492
      %v557 = vsel %vm429, %v365, %v493
      %v558 = vsel %vm430, %v366, %v494
      %v559 = vsel %vm431, %v367, %v495
      %v560 = vsel %vm432, %v368, %v496
      %v561 = vsel %vm433, %v369, %v497
      %v562 = vsel %vm434, %v370, %v498
      %v563 = vsel %vm435, %v371, %v499
      %v564 = vsel %vm436, %v372, %v500
      %v565 = vsel %vm437, %v373, %v501
      %566 = vst [vmem:[%s172] sm:$0xff] %v502
      %567 = vst [vmem:[%s172 + $0x8] sm:$0xff] %v503
      %568 = vst [vmem:[%s172 + $0x10] sm:$0xff] %v504
      %569 = vst [vmem:[%s172 + $0x18] sm:$0xff] %v505
      %570 = vst [vmem:[%s172 + $0x20] sm:$0xff] %v506
      %571 = vst [vmem:[%s172 + $0x28] sm:$0xff] %v507
      %572 = vst [vmem:[%s172 + $0x30] sm:$0xff] %v508
      %573 = vst [vmem:[%s172 + $0x38] sm:$0xff] %v509
      %574 = vst [vmem:[%s172 + $0x40] sm:$0xff] %v510
      %575 = vst [vmem:[%s172 + $0x48] sm:$0xff] %v511
      %576 = vst [vmem:[%s172 + $0x50] sm:$0xff] %v512
      %577 = vst [vmem:[%s172 + $0x58] sm:$0xff] %v513
      %578 = vst [vmem:[%s172 + $0x60] sm:$0xff] %v514
      %579 = vst [vmem:[%s172 + $0x68] sm:$0xff] %v515
      %580 = vst [vmem:[%s172 + $0x70] sm:$0xff] %v516
      %581 = vst [vmem:[%s172 + $0x78] sm:$0xff] %v517
      %582 = vst [vmem:[%s172 + $0x80] sm:$0xff] %v518
      %583 = vst [vmem:[%s172 + $0x88] sm:$0xff] %v519
      %584 = vst [vmem:[%s172 + $0x90] sm:$0xff] %v520
      %585 = vst [vmem:[%s172 + $0x98] sm:$0xff] %v521
      %586 = vst [vmem:[%s172 + $0xa0] sm:$0xff] %v522
      %587 = vst [vmem:[%s172 + $0xa8] sm:$0xff] %v523
      %588 = vst [vmem:[%s172 + $0xb0] sm:$0xff] %v524
      %589 = vst [vmem:[%s172 + $0xb8] sm:$0xff] %v525
      %590 = vst [vmem:[%s172 + $0xc0] sm:$0xff] %v526
      %591 = vst [vmem:[%s172 + $0xc8] sm:$0xff] %v527
      %592 = vst [vmem:[%s172 + $0xd0] sm:$0xff] %v528
      %593 = vst [vmem:[%s172 + $0xd8] sm:$0xff] %v529
      %594 = vst [vmem:[%s172 + $0xe0] sm:$0xff] %v530
      %595 = vst [vmem:[%s172 + $0xe8] sm:$0xff] %v531
      %596 = vst [vmem:[%s172 + $0xf0] sm:$0xff] %v532
      %597 = vst [vmem:[%s172 + $0xf8] sm:$0xff] %v533
      %598 = vst [vmem:[%s172 + $0x100] sm:$0xff] %v534
      %599 = vst [vmem:[%s172 + $0x108] sm:$0xff] %v535
      %600 = vst [vmem:[%s172 + $0x110] sm:$0xff] %v536
      %601 = vst [vmem:[%s172 + $0x118] sm:$0xff] %v537
      %602 = vst [vmem:[%s172 + $0x120] sm:$0xff] %v538
      %603 = vst [vmem:[%s172 + $0x128] sm:$0xff] %v539
      %604 = vst [vmem:[%s172 + $0x130] sm:$0xff] %v540
      %605 = vst [vmem:[%s172 + $0x138] sm:$0xff] %v541
      %606 = vst [vmem:[%s172 + $0x140] sm:$0xff] %v542
      %607 = vst [vmem:[%s172 + $0x148] sm:$0xff] %v543
      %608 = vst [vmem:[%s172 + $0x150] sm:$0xff] %v544
      %609 = vst [vmem:[%s172 + $0x158] sm:$0xff] %v545
      %610 = vst [vmem:[%s172 + $0x160] sm:$0xff] %v546
      %611 = vst [vmem:[%s172 + $0x168] sm:$0xff] %v547
      %612 = vst [vmem:[%s172 + $0x170] sm:$0xff] %v548
      %613 = vst [vmem:[%s172 + $0x178] sm:$0xff] %v549
      %614 = vst [vmem:[%s172 + $0x180] sm:$0xff] %v550
      %615 = vst [vmem:[%s172 + $0x188] sm:$0xff] %v551
      %616 = vst [vmem:[%s172 + $0x190] sm:$0xff] %v552
      %617 = vst [vmem:[%s172 + $0x198] sm:$0xff] %v553
      %618 = vst [vmem:[%s172 + $0x1a0] sm:$0xff] %v554
      %619 = vst [vmem:[%s172 + $0x1a8] sm:$0xff] %v555
      %620 = vst [vmem:[%s172 + $0x1b0] sm:$0xff] %v556
      %621 = vst [vmem:[%s172 + $0x1b8] sm:$0xff] %v557
      %622 = vst [vmem:[%s172 + $0x1c0] sm:$0xff] %v558
      %623 = vst [vmem:[%s172 + $0x1c8] sm:$0xff] %v559
      %624 = vst [vmem:[%s172 + $0x1d0] sm:$0xff] %v560
      %625 = vst [vmem:[%s172 + $0x1d8] sm:$0xff] %v561
      %626 = vst [vmem:[%s172 + $0x1e0] sm:$0xff] %v562
      %627 = vst [vmem:[%s172 + $0x1e8] sm:$0xff] %v563
      %628 = vst [vmem:[%s172 + $0x1f0] sm:$0xff] %v564
      %629 = vst [vmem:[%s172 + $0x1f8] sm:$0xff] %v565
      %s630 = smul.u32 64, %s14
      %p631 = scmp.lt.s32.totalorder %s630, 127
      %s632 = scalar_select %p631, %s630, 127
      %s633 = smul.addr %s632, 8
      %s634 = scalar_lea.vmem %s3, %s633
      // Predicated region
      $region33: #{double_conv_pallas.7} parent=31 // pred_check
        %p635 = pneg %p100
      $region34: #{double_conv_pallas.7} parent=31 // pred_check_branch
        %637 = sbr.rel (%p635) target = $region36
      $region35: #{double_conv_pallas.7} parent=31 // pred_region
        %s638 = smul.u32 64, %s14
      $region36: #{double_conv_pallas.7} parent=31 // pred_fallthru
        _
    $region32: #{double_conv_pallas.7} parent=5 // pred_fallthru
      _
    %p639 = scmp.le.s32.totalorder 2, %s9
    // Predicated region
    $region37: #{double_conv_pallas.7} parent=5 // pred_check
      %p640 = pneg %p639
    $region38: #{double_conv_pallas.7} parent=5 // pred_check_branch
      %642 = sbr.rel (%p640) target = $region40
    $region39: #{double_conv_pallas.7} parent=5 // pred_region
      %s643 = ssub.s32 %s9, 2
      // Predicated region
      $region41: #{double_conv_pallas.7} parent=39 // pred_check
        %p644 = pneg %p106
      $region42: #{double_conv_pallas.7} parent=39 // pred_check_branch
        %646 = sbr.rel (%p644) target = $region44
      $region43: #{double_conv_pallas.7} parent=39 // pred_region
        %s647 = smul.u32 64, %s15
        %p648 = scmp.lt.s32.totalorder %s647, 127
        %s649 = scalar_select %p648, %s647, 127
        %s650 = smul.addr %s649, 8
        %s651 = scalar_lea.vmem %s3, %s650
      $region44: #{double_conv_pallas.7} parent=39 // pred_fallthru
        _
    $region40: #{double_conv_pallas.7} parent=5 // pred_fallthru
      _
  $region6: #{double_conv_pallas.7} parent=0 // loop_footer
    %s13 = sadd.s32 1, %s9
  $region7: #{double_conv_pallas.7} parent=0 // loop_footer_branch
    %8 = sbr.rel target = $region3
  $region8: #{double_conv_pallas.7} parent=0 // loop_exit
    _

// kernel: double_conv_pallas.6
$region0: #{double_conv_pallas.6}
  #allocation0 [shape = 'u32[]', space=smem, size = 0x4, offset = 0x4, fixed_abs, tag = 'smem constant byte address 0x4 - core index']
  #allocation1 [shape = 'u32[72,128]{1,0:T(1,128)}', space=vmem, size = 0x9000, scoped, tag = 'internal scratch']
  %s0 = inlined_call_operand.vmem [shape: bf16[1024,256], index: 0, kind: input, shape index: {}]
  %s1 = inlined_call_operand.vmem [shape: bf16[256,128], index: 1, kind: input, shape index: {}]
  %s2 = inlined_call_operand.vmem [shape: f32[1,128], index: 2, kind: input, shape index: {}]
  %s3 = inlined_call_operand.vmem [shape: f32[1024,128], index: 3, kind: output, shape index: {0}]
  %s4 = inlined_call_operand.vmem [shape: f32[2,2,128], index: 4, kind: output, shape index: {1}]
  %5 = xla_tuple %s3, %s4
  %s6 = sld [smem:[#allocation0]]
  $region53: #{double_conv_pallas.6} parent=0
    _
  %s8 = ssub.s32 1, %s6
  %s9 = scalar_select 0, %s8, %s6
  loop: start=0, step=1, limit=4
  $region2: #{double_conv_pallas.6} parent=0 // loop_pre_header
    _
  $region3: #{double_conv_pallas.6} parent=0 // loop_header
    %s11 = sphi 0, %s15
    %p12 = scmp.ge.s32.totalorder %s11, 4
    %s21 = sphi 0, %s23
    %s24 = sphi 0, %s21
    %s25 = sphi 0, %s24
    %s41 = sphi 0, %s25
    %s45 = sphi 0, %s45
    %s47 = sphi 0, %s45
    %s48 = sphi 0, %s47
    %s62 = sphi 0, %s48
    %s66 = sphi 0, %s66
    %s68 = sphi 0, %s66
    %s69 = sphi 0, %s68
    %s83 = sphi 0, %s69
    %s89 = sphi 0, %s91
    %s92 = sphi 0, %s89
    %s93 = sphi 0, %s92
    %s109 = sphi 0, %s93
    %s115 = sphi 0, %s117
    %s118 = sphi 0, %s115
    %s119 = sphi 0, %s118
    %s135 = sphi 0, %s119
  $region4: #{double_conv_pallas.6} parent=0 // loop_header_branch
    %14 = sbr.rel (%p12) target = $region8
  $region5: #{double_conv_pallas.6} parent=0 // loop_body
    %s16 = ssub.s32 %s11, 1
    %s17 = ssub.s32 %s11, 2
    %s18 = sadd.s32 %s11, 1
    %s19 = ssub.s32 %s11, %s18
    %p20 = scmp.eq.s32.totalorder %s19, 0
    %s22 = sadd.s32 %s21, 1
    %s23 = scalar_select %p20, %s21, %s22
    %p26 = pneg %p20
    %p27 = scmp.eq.s32.totalorder %s11, 1
    %p28 = por %p26, %p27
    %p29 = scmp.ne.s32.totalorder %s21, %s24
    %p30 = scmp.eq.s32.totalorder %s11, 0
    %p31 = por %p29, %p30
    %p32 = scmp.ne.s32.totalorder %s21, %s24
    %p33 = scmp.eq.s32.totalorder %s16, 1
    %p34 = por %p32, %p33
    %p35 = scmp.ne.s32.totalorder %s24, %s25
    %p36 = scmp.eq.s32.totalorder %s16, 0
    %p37 = por %p35, %p36
    %p38 = scmp.ne.s32.totalorder %s24, %s25
    %p39 = scmp.eq.s32.totalorder %s17, 1
    %p40 = por %p38, %p39
    %p42 = scmp.ne.s32.totalorder %s25, %s41
    %p43 = scmp.eq.s32.totalorder %s17, 0
    %p44 = por %p42, %p43
    %s46 = sadd.s32 %s45, 1
    %p49 = scmp.eq.s32.totalorder %s11, 1
    %p50 = scmp.ne.s32.totalorder %s45, %s47
    %p51 = scmp.eq.s32.totalorder %s11, 0
    %p52 = por %p50, %p51
    %p53 = scmp.ne.s32.totalorder %s45, %s47
    %p54 = scmp.eq.s32.totalorder %s16, 1
    %p55 = por %p53, %p54
    %p56 = scmp.ne.s32.totalorder %s47, %s48
    %p57 = scmp.eq.s32.totalorder %s16, 0
    %p58 = por %p56, %p57
    %p59 = scmp.ne.s32.totalorder %s47, %s48
    %p60 = scmp.eq.s32.totalorder %s17, 1
    %p61 = por %p59, %p60
    %p63 = scmp.ne.s32.totalorder %s48, %s62
    %p64 = scmp.eq.s32.totalorder %s17, 0
    %p65 = por %p63, %p64
    %s67 = sadd.s32 %s66, 1
    %p70 = scmp.eq.s32.totalorder %s11, 1
    %p71 = scmp.ne.s32.totalorder %s66, %s68
    %p72 = scmp.eq.s32.totalorder %s11, 0
    %p73 = por %p71, %p72
    %p74 = scmp.ne.s32.totalorder %s66, %s68
    %p75 = scmp.eq.s32.totalorder %s16, 1
    %p76 = por %p74, %p75
    %p77 = scmp.ne.s32.totalorder %s68, %s69
    %p78 = scmp.eq.s32.totalorder %s16, 0
    %p79 = por %p77, %p78
    %p80 = scmp.ne.s32.totalorder %s68, %s69
    %p81 = scmp.eq.s32.totalorder %s17, 1
    %p82 = por %p80, %p81
    %p84 = scmp.ne.s32.totalorder %s69, %s83
    %p85 = scmp.eq.s32.totalorder %s17, 0
    %p86 = por %p84, %p85
    %s87 = ssub.s32 %s11, %s18
    %p88 = scmp.eq.s32.totalorder %s87, 0
    %s90 = sadd.s32 %s89, 1
    %s91 = scalar_select %p88, %s89, %s90
    %p94 = pneg %p88
    %p95 = scmp.eq.s32.totalorder %s11, 1
    %p96 = por %p94, %p95
    %p97 = scmp.ne.s32.totalorder %s89, %s92
    %p98 = scmp.eq.s32.totalorder %s11, 0
    %p99 = por %p97, %p98
    %p100 = scmp.ne.s32.totalorder %s89, %s92
    %p101 = scmp.eq.s32.totalorder %s16, 1
    %p102 = por %p100, %p101
    %p103 = scmp.ne.s32.totalorder %s92, %s93
    %p104 = scmp.eq.s32.totalorder %s16, 0
    %p105 = por %p103, %p104
    %p106 = scmp.ne.s32.totalorder %s92, %s93
    %p107 = scmp.eq.s32.totalorder %s17, 1
    %p108 = por %p106, %p107
    %p110 = scmp.ne.s32.totalorder %s93, %s109
    %p111 = scmp.eq.s32.totalorder %s17, 0
    %p112 = por %p110, %p111
    %s113 = ssub.s32 %s11, %s18
    %p114 = scmp.eq.s32.totalorder %s113, 0
    %s116 = sadd.s32 %s115, 1
    %s117 = scalar_select %p114, %s115, %s116
    %p120 = pneg %p114
    %p121 = scmp.eq.s32.totalorder %s11, 1
    %p122 = por %p120, %p121
    %p123 = scmp.ne.s32.totalorder %s115, %s118
    %p124 = scmp.eq.s32.totalorder %s11, 0
    %p125 = por %p123, %p124
    %p126 = scmp.ne.s32.totalorder %s115, %s118
    %p127 = scmp.eq.s32.totalorder %s16, 1
    %p128 = por %p126, %p127
    %p129 = scmp.ne.s32.totalorder %s118, %s119
    %p130 = scmp.eq.s32.totalorder %s16, 0
    %p131 = por %p129, %p130
    %p132 = scmp.ne.s32.totalorder %s118, %s119
    %p133 = scmp.eq.s32.totalorder %s17, 1
    %p134 = por %p132, %p133
    %p136 = scmp.ne.s32.totalorder %s119, %s135
    %p137 = scmp.eq.s32.totalorder %s17, 0
    %p138 = por %p136, %p137
    %p139 = scmp.le.s32.totalorder 1, %s11
    %p140 = scmp.lt.s32.totalorder %s11, 3
    %p141 = pnand %p139, %p140
    %p142 = pneg %p141
    // Predicated region
    $region9: #{double_conv_pallas.6} parent=5 // pred_check
      _
    $region10: #{double_conv_pallas.6} parent=5 // pred_check_branch
      %144 = sbr.rel (%p141) target = $region12
    $region11: #{double_conv_pallas.6} parent=5 // pred_region
      %s145 = ssub.s32 %s11, 1
      // Predicated region
      $region13: #{double_conv_pallas.6} parent=11 // pred_check
        %p146 = pneg %p58
      $region14: #{double_conv_pallas.6} parent=11 // pred_check_branch
        %148 = sbr.rel (%p146) target = $region16
      $region15: #{double_conv_pallas.6} parent=11 // pred_region
        _
      $region16: #{double_conv_pallas.6} parent=11 // pred_fallthru
        _
      // Predicated region
      $region17: #{double_conv_pallas.6} parent=11 // pred_check
        %p149 = pneg %p79
      $region18: #{double_conv_pallas.6} parent=11 // pred_check_branch
        %151 = sbr.rel (%p149) target = $region20
      $region19: #{double_conv_pallas.6} parent=11 // pred_region
        _
      $region20: #{double_conv_pallas.6} parent=11 // pred_fallthru
        _
    $region12: #{double_conv_pallas.6} parent=5 // pred_fallthru
      _
    %p152 = scmp.lt.s32.totalorder %s11, 2
    // Predicated region
    $region21: #{double_conv_pallas.6} parent=5 // pred_check
      %p153 = pneg %p152
    $region22: #{double_conv_pallas.6} parent=5 // pred_check_branch
      %155 = sbr.rel (%p153) target = $region24
    $region23: #{double_conv_pallas.6} parent=5 // pred_region
      // Predicated region
      $region25: #{double_conv_pallas.6} parent=23 // pred_check
        %p156 = pneg %p31
      $region26: #{double_conv_pallas.6} parent=23 // pred_check_branch
        %158 = sbr.rel (%p156) target = $region28
      $region27: #{double_conv_pallas.6} parent=23 // pred_region
        %s159 = smul.u32 64, %s11
        %p160 = scmp.lt.s32.totalorder %s159, 127
        %s161 = scalar_select %p160, %s159, 127
        %s162 = smul.addr %s161, 2
        %s163 = smul.addr %s162, 4
        %s164 = scalar_lea.vmem %s0, %s163
        %s165 = smul.u32 64, %s11
      $region28: #{double_conv_pallas.6} parent=23 // pred_fallthru
        _
    $region24: #{double_conv_pallas.6} parent=5 // pred_fallthru
      _
    %p166 = scmp.le.s32.totalorder 1, %s11
    %p167 = scmp.lt.s32.totalorder %s11, 3
    %p168 = pnand %p166, %p167
    %p169 = pneg %p168
    // Predicated region
    $region29: #{double_conv_pallas.6} parent=5 // pred_check
      _
    $region30: #{double_conv_pallas.6} parent=5 // pred_check_branch
      %171 = sbr.rel (%p168) target = $region32
    $region31: #{double_conv_pallas.6} parent=5 // pred_region
      %s172 = ssub.s32 %s11, 1
      %s173 = smul.u32 64, %s16
      %p174 = scmp.lt.s32.totalorder %s173, 127
      %s175 = scalar_select %p174, %s173, 127
      %s176 = smul.addr %s175, 2
      %s177 = smul.addr %s176, 4
      %s178 = scalar_lea.vmem %s0, %s177
      %p179 = pneg %p37
      %p180 = pneg %p34
      %p181 = pneg %p58
      %p182 = pneg %p55
      %p183 = pneg %p79
      %p184 = pneg %p76
      %p185 = pneg %p105
      %p186 = pneg %p102
      %s187 = smul.u32 64, %s16
      %p188 = scmp.lt.s32.totalorder %s187, 127
      %s189 = scalar_select %p188, %s187, 127
      %s190 = smul.addr %s189, 8
      %s191 = scalar_lea.vmem %s3, %s190
      %p192 = pneg %p131
      %p193 = pneg %p128
      %p194 = scmp.lt.s32.totalorder %s16, 1
      %s195 = scalar_select %p194, %s16, 1
      %s196 = smul.addr %s195, 2
      %s197 = scalar_lea.vmem %s4, %s196
      %s198 = smul.u32 64, %s16
      %p199 = scmp.lt.s32.totalorder %s198, 127
      %s200 = scalar_select %p199, %s198, 127
      %s201 = smul.addr %s200, 2
      %s202 = smul.addr %s201, 4
      %s203 = scalar_lea.vmem %s0, %s202
      %s204 = smul.u32 64, %s16
      %s205 = smul.u32 64, %s16
      %p206 = scmp.lt.s32.totalorder %s205, 127
      %s207 = scalar_select %p206, %s205, 127
      %s208 = smul.addr %s207, 8
      %s209 = scalar_lea.vmem %s3, %s208
      %s210 = smul.u32 64, %s16
      %p211 = scmp.lt.s32.totalorder %s16, 1
      %s212 = scalar_select %p211, %s16, 1
      %s213 = smul.addr %s212, 2
      %s214 = scalar_lea.vmem %s4, %s213
      %v215 = vld [vmem:[%s203] sm:$0xff]
      %v216 = vld [vmem:[%s203 + $0x8] sm:$0xff]
      %v217 = vld [vmem:[%s203 + $0x10] sm:$0xff]
      %v218 = vld [vmem:[%s203 + $0x18] sm:$0xff]
      %v219 = vld [vmem:[%s203 + $0x20] sm:$0xff]
      %v220 = vld [vmem:[%s203 + $0x28] sm:$0xff]
      %v221 = vld [vmem:[%s203 + $0x30] sm:$0xff]
      %v222 = vld [vmem:[%s203 + $0x38] sm:$0xff]
      %v223 = vld [vmem:[%s203 + $0x40] sm:$0xff]
      %v224 = vld [vmem:[%s203 + $0x48] sm:$0xff]
      %v225 = vld [vmem:[%s203 + $0x50] sm:$0xff]
      %v226 = vld [vmem:[%s203 + $0x58] sm:$0xff]
      %v227 = vld [vmem:[%s203 + $0x60] sm:$0xff]
      %v228 = vld [vmem:[%s203 + $0x68] sm:$0xff]
      %v229 = vld [vmem:[%s203 + $0x70] sm:$0xff]
      %v230 = vld [vmem:[%s203 + $0x78] sm:$0xff]
      %v231 = vld [vmem:[%s203 + $0x80] sm:$0xff]
      %v232 = vld [vmem:[%s203 + $0x88] sm:$0xff]
      %v233 = vld [vmem:[%s203 + $0x90] sm:$0xff]
      %v234 = vld [vmem:[%s203 + $0x98] sm:$0xff]
      %v235 = vld [vmem:[%s203 + $0xa0] sm:$0xff]
      %v236 = vld [vmem:[%s203 + $0xa8] sm:$0xff]
      %v237 = vld [vmem:[%s203 + $0xb0] sm:$0xff]
      %v238 = vld [vmem:[%s203 + $0xb8] sm:$0xff]
      %v239 = vld [vmem:[%s203 + $0xc0] sm:$0xff]
      %v240 = vld [vmem:[%s203 + $0xc8] sm:$0xff]
      %v241 = vld [vmem:[%s203 + $0xd0] sm:$0xff]
      %v242 = vld [vmem:[%s203 + $0xd8] sm:$0xff]
      %v243 = vld [vmem:[%s203 + $0xe0] sm:$0xff]
      %v244 = vld [vmem:[%s203 + $0xe8] sm:$0xff]
      %v245 = vld [vmem:[%s203 + $0xf0] sm:$0xff]
      %v246 = vld [vmem:[%s203 + $0xf8] sm:$0xff]
      %v247 = vld [vmem:[%s203 + $0x100] sm:$0xff]
      %v248 = vld [vmem:[%s203 + $0x108] sm:$0xff]
      %v249 = vld [vmem:[%s203 + $0x110] sm:$0xff]
      %v250 = vld [vmem:[%s203 + $0x118] sm:$0xff]
      %v251 = vld [vmem:[%s203 + $0x120] sm:$0xff]
      %v252 = vld [vmem:[%s203 + $0x128] sm:$0xff]
      %v253 = vld [vmem:[%s203 + $0x130] sm:$0xff]
      %v254 = vld [vmem:[%s203 + $0x138] sm:$0xff]
      %v255 = vld [vmem:[%s203 + $0x140] sm:$0xff]
      %v256 = vld [vmem:[%s203 + $0x148] sm:$0xff]
      %v257 = vld [vmem:[%s203 + $0x150] sm:$0xff]
      %v258 = vld [vmem:[%s203 + $0x158] sm:$0xff]
      %v259 = vld [vmem:[%s203 + $0x160] sm:$0xff]
      %v260 = vld [vmem:[%s203 + $0x168] sm:$0xff]
      %v261 = vld [vmem:[%s203 + $0x170] sm:$0xff]
      %v262 = vld [vmem:[%s203 + $0x178] sm:$0xff]
      %v263 = vld [vmem:[%s203 + $0x180] sm:$0xff]
      %v264 = vld [vmem:[%s203 + $0x188] sm:$0xff]
      %v265 = vld [vmem:[%s203 + $0x190] sm:$0xff]
      %v266 = vld [vmem:[%s203 + $0x198] sm:$0xff]
      %v267 = vld [vmem:[%s203 + $0x1a0] sm:$0xff]
      %v268 = vld [vmem:[%s203 + $0x1a8] sm:$0xff]
      %v269 = vld [vmem:[%s203 + $0x1b0] sm:$0xff]
      %v270 = vld [vmem:[%s203 + $0x1b8] sm:$0xff]
      %v271 = vld [vmem:[%s203 + $0x1c0] sm:$0xff]
      %v272 = vld [vmem:[%s203 + $0x1c8] sm:$0xff]
      %v273 = vld [vmem:[%s203 + $0x1d0] sm:$0xff]
      %v274 = vld [vmem:[%s203 + $0x1d8] sm:$0xff]
      %v275 = vld [vmem:[%s203 + $0x1e0] sm:$0xff]
      %v276 = vld [vmem:[%s203 + $0x1e8] sm:$0xff]
      %v277 = vld [vmem:[%s203 + $0x1f0] sm:$0xff]
      %v278 = vld [vmem:[%s203 + $0x1f8] sm:$0xff]
      %v279 = vld [vmem:[%s1] sm:$0xf]
      %v280 = vld [vmem:[%s1 + $0x4] sm:$0xf]
      %v281 = vld [vmem:[%s1 + $0x8] sm:$0xf]
      %v282 = vld [vmem:[%s1 + $0xc] sm:$0xf]
      %v283 = vld [vmem:[%s1 + $0x10] sm:$0xf]
      %v284 = vld [vmem:[%s1 + $0x14] sm:$0xf]
      %v285 = vld [vmem:[%s1 + $0x18] sm:$0xf]
      %v286 = vld [vmem:[%s1 + $0x1c] sm:$0xf]
      %v287 = vld [vmem:[%s1 + $0x20] sm:$0xf]
      %v288 = vld [vmem:[%s1 + $0x24] sm:$0xf]
      %v289 = vld [vmem:[%s1 + $0x28] sm:$0xf]
      %v290 = vld [vmem:[%s1 + $0x2c] sm:$0xf]
      %v291 = vld [vmem:[%s1 + $0x30] sm:$0xf]
      %v292 = vld [vmem:[%s1 + $0x34] sm:$0xf]
      %v293 = vld [vmem:[%s1 + $0x38] sm:$0xf]
      %v294 = vld [vmem:[%s1 + $0x3c] sm:$0xf]
      %v295 = vld [vmem:[%s1 + $0x40] sm:$0xf]
      %v296 = vld [vmem:[%s1 + $0x44] sm:$0xf]
      %v297 = vld [vmem:[%s1 + $0x48] sm:$0xf]
      %v298 = vld [vmem:[%s1 + $0x4c] sm:$0xf]
      %v299 = vld [vmem:[%s1 + $0x50] sm:$0xf]
      %v300 = vld [vmem:[%s1 + $0x54] sm:$0xf]
      %v301 = vld [vmem:[%s1 + $0x58] sm:$0xf]
      %v302 = vld [vmem:[%s1 + $0x5c] sm:$0xf]
      %v303 = vld [vmem:[%s1 + $0x60] sm:$0xf]
      %v304 = vld [vmem:[%s1 + $0x64] sm:$0xf]
      %v305 = vld [vmem:[%s1 + $0x68] sm:$0xf]
      %v306 = vld [vmem:[%s1 + $0x6c] sm:$0xf]
      %v307 = vld [vmem:[%s1 + $0x70] sm:$0xf]
      %v308 = vld [vmem:[%s1 + $0x74] sm:$0xf]
      %v309 = vld [vmem:[%s1 + $0x78] sm:$0xf]
      %v310 = vld [vmem:[%s1 + $0x7c] sm:$0xf]
      %v311 = vld [vmem:[%s2] sm:$0x1]
      %v313 = vperm.slane %v311, 0
      %v379 = vunpack.c.l.b16 %v215
      %v380 = vunpack.c.h.b16 %v215
      %v381 = vunpack.c.l.b16 %v216
      %v382 = vunpack.c.h.b16 %v216
      %v383 = vunpack.c.l.b16 %v217
      %v384 = vunpack.c.h.b16 %v217
      %v385 = vunpack.c.l.b16 %v218
      %v386 = vunpack.c.h.b16 %v218
      %v387 = vunpack.c.l.b16 %v219
      %v388 = vunpack.c.h.b16 %v219
      %v389 = vunpack.c.l.b16 %v220
      %v390 = vunpack.c.h.b16 %v220
      %v391 = vunpack.c.l.b16 %v221
      %v392 = vunpack.c.h.b16 %v221
      %v393 = vunpack.c.l.b16 %v222
      %v394 = vunpack.c.h.b16 %v222
      %v395 = vunpack.c.l.b16 %v223
      %v396 = vunpack.c.h.b16 %v223
      %v397 = vunpack.c.l.b16 %v224
      %v398 = vunpack.c.h.b16 %v224
      %v399 = vunpack.c.l.b16 %v225
      %v400 = vunpack.c.h.b16 %v225
      %v401 = vunpack.c.l.b16 %v226
      %v402 = vunpack.c.h.b16 %v226
      %v403 = vunpack.c.l.b16 %v227
      %v404 = vunpack.c.h.b16 %v227
      %v405 = vunpack.c.l.b16 %v228
      %v406 = vunpack.c.h.b16 %v228
      %v407 = vunpack.c.l.b16 %v229
      %v408 = vunpack.c.h.b16 %v229
      %v409 = vunpack.c.l.b16 %v230
      %v410 = vunpack.c.h.b16 %v230
      %v411 = vunpack.c.l.b16 %v231
      %v412 = vunpack.c.h.b16 %v231
      %v413 = vunpack.c.l.b16 %v232
      %v414 = vunpack.c.h.b16 %v232
      %v415 = vunpack.c.l.b16 %v233
      %v416 = vunpack.c.h.b16 %v233
      %v417 = vunpack.c.l.b16 %v234
      %v418 = vunpack.c.h.b16 %v234
      %v419 = vunpack.c.l.b16 %v235
      %v420 = vunpack.c.h.b16 %v235
      %v421 = vunpack.c.l.b16 %v236
      %v422 = vunpack.c.h.b16 %v236
      %v423 = vunpack.c.l.b16 %v237
      %v424 = vunpack.c.h.b16 %v237
      %v425 = vunpack.c.l.b16 %v238
      %v426 = vunpack.c.h.b16 %v238
      %v427 = vunpack.c.l.b16 %v239
      %v428 = vunpack.c.h.b16 %v239
      %v429 = vunpack.c.l.b16 %v240
      %v430 = vunpack.c.h.b16 %v240
      %v431 = vunpack.c.l.b16 %v241
      %v432 = vunpack.c.h.b16 %v241
      %v433 = vunpack.c.l.b16 %v242
      %v434 = vunpack.c.h.b16 %v242
      %v435 = vunpack.c.l.b16 %v243
      %v436 = vunpack.c.h.b16 %v243
      %v437 = vunpack.c.l.b16 %v244
      %v438 = vunpack.c.h.b16 %v244
      %v439 = vunpack.c.l.b16 %v245
      %v440 = vunpack.c.h.b16 %v245
      %v441 = vunpack.c.l.b16 %v246
      %v442 = vunpack.c.h.b16 %v246
      %v443 = vunpack.c.l.b16 %v247
      %v444 = vunpack.c.h.b16 %v247
      %v445 = vunpack.c.l.b16 %v248
      %v446 = vunpack.c.h.b16 %v248
      %v447 = vunpack.c.l.b16 %v249
      %v448 = vunpack.c.h.b16 %v249
      %v449 = vunpack.c.l.b16 %v250
      %v450 = vunpack.c.h.b16 %v250
      %v451 = vunpack.c.l.b16 %v251
      %v452 = vunpack.c.h.b16 %v251
      %v453 = vunpack.c.l.b16 %v252
      %v454 = vunpack.c.h.b16 %v252
      %v455 = vunpack.c.l.b16 %v253
      %v456 = vunpack.c.h.b16 %v253
      %v457 = vunpack.c.l.b16 %v254
      %v458 = vunpack.c.h.b16 %v254
      %v459 = vunpack.c.l.b16 %v255
      %v460 = vunpack.c.h.b16 %v255
      %v461 = vunpack.c.l.b16 %v256
      %v462 = vunpack.c.h.b16 %v256
      %v463 = vunpack.c.l.b16 %v257
      %v464 = vunpack.c.h.b16 %v257
      %v465 = vunpack.c.l.b16 %v258
      %v466 = vunpack.c.h.b16 %v258
      %v467 = vunpack.c.l.b16 %v259
      %v468 = vunpack.c.h.b16 %v259
      %v469 = vunpack.c.l.b16 %v260
      %v470 = vunpack.c.h.b16 %v260
      %v471 = vunpack.c.l.b16 %v261
      %v472 = vunpack.c.h.b16 %v261
      %v473 = vunpack.c.l.b16 %v262
      %v474 = vunpack.c.h.b16 %v262
      %v475 = vunpack.c.l.b16 %v263
      %v476 = vunpack.c.h.b16 %v263
      %v477 = vunpack.c.l.b16 %v264
      %v478 = vunpack.c.h.b16 %v264
      %v479 = vunpack.c.l.b16 %v265
      %v480 = vunpack.c.h.b16 %v265
      %v481 = vunpack.c.l.b16 %v266
      %v482 = vunpack.c.h.b16 %v266
      %v483 = vunpack.c.l.b16 %v267
      %v484 = vunpack.c.h.b16 %v267
      %v485 = vunpack.c.l.b16 %v268
      %v486 = vunpack.c.h.b16 %v268
      %v487 = vunpack.c.l.b16 %v269
      %v488 = vunpack.c.h.b16 %v269
      %v489 = vunpack.c.l.b16 %v270
      %v490 = vunpack.c.h.b16 %v270
      %v491 = vunpack.c.l.b16 %v271
      %v492 = vunpack.c.h.b16 %v271
      %v493 = vunpack.c.l.b16 %v272
      %v494 = vunpack.c.h.b16 %v272
      %v495 = vunpack.c.l.b16 %v273
      %v496 = vunpack.c.h.b16 %v273
      %v497 = vunpack.c.l.b16 %v274
      %v498 = vunpack.c.h.b16 %v274
      %v499 = vunpack.c.l.b16 %v275
      %v500 = vunpack.c.h.b16 %v275
      %v501 = vunpack.c.l.b16 %v276
      %v502 = vunpack.c.h.b16 %v276
      %v503 = vunpack.c.l.b16 %v277
      %v504 = vunpack.c.h.b16 %v277
      %v505 = vunpack.c.l.b16 %v278
      %v506 = vunpack.c.h.b16 %v278
      %v507 = vpack.c.b16 %v381, %v379
      %v508 = vpack.c.b16 %v382, %v380
      %v509 = vpack.c.b16 %v385, %v383
      %v510 = vpack.c.b16 %v386, %v384
      %v511 = vpack.c.b16 %v389, %v387
      %v512 = vpack.c.b16 %v390, %v388
      %v513 = vpack.c.b16 %v393, %v391
      %v514 = vpack.c.b16 %v394, %v392
      %v515 = vpack.c.b16 %v397, %v395
      %v516 = vpack.c.b16 %v398, %v396
      %v517 = vpack.c.b16 %v401, %v399
      %v518 = vpack.c.b16 %v402, %v400
      %v519 = vpack.c.b16 %v405, %v403
      %v520 = vpack.c.b16 %v406, %v404
      %v521 = vpack.c.b16 %v409, %v407
      %v522 = vpack.c.b16 %v410, %v408
      %v523 = vpack.c.b16 %v413, %v411
      %v524 = vpack.c.b16 %v414, %v412
      %v525 = vpack.c.b16 %v417, %v415
      %v526 = vpack.c.b16 %v418, %v416
      %v527 = vpack.c.b16 %v421, %v419
      %v528 = vpack.c.b16 %v422, %v420
      %v529 = vpack.c.b16 %v425, %v423
      %v530 = vpack.c.b16 %v426, %v424
      %v531 = vpack.c.b16 %v429, %v427
      %v532 = vpack.c.b16 %v430, %v428
      %v533 = vpack.c.b16 %v433, %v431
      %v534 = vpack.c.b16 %v434, %v432
      %v535 = vpack.c.b16 %v437, %v435
      %v536 = vpack.c.b16 %v438, %v436
      %v537 = vpack.c.b16 %v441, %v439
      %v538 = vpack.c.b16 %v442, %v440
      %v539 = vpack.c.b16 %v445, %v443
      %v540 = vpack.c.b16 %v446, %v444
      %v541 = vpack.c.b16 %v449, %v447
      %v542 = vpack.c.b16 %v450, %v448
      %v543 = vpack.c.b16 %v453, %v451
      %v544 = vpack.c.b16 %v454, %v452
      %v545 = vpack.c.b16 %v457, %v455
      %v546 = vpack.c.b16 %v458, %v456
      %v547 = vpack.c.b16 %v461, %v459
      %v548 = vpack.c.b16 %v462, %v460
      %v549 = vpack.c.b16 %v465, %v463
      %v550 = vpack.c.b16 %v466, %v464
      %v551 = vpack.c.b16 %v469, %v467
      %v552 = vpack.c.b16 %v470, %v468
      %v553 = vpack.c.b16 %v473, %v471
      %v554 = vpack.c.b16 %v474, %v472
      %v555 = vpack.c.b16 %v477, %v475
      %v556 = vpack.c.b16 %v478, %v476
      %v557 = vpack.c.b16 %v481, %v479
      %v558 = vpack.c.b16 %v482, %v480
      %v559 = vpack.c.b16 %v485, %v483
      %v560 = vpack.c.b16 %v486, %v484
      %v561 = vpack.c.b16 %v489, %v487
      %v562 = vpack.c.b16 %v490, %v488
      %v563 = vpack.c.b16 %v493, %v491
      %v564 = vpack.c.b16 %v494, %v492
      %v565 = vpack.c.b16 %v497, %v495
      %v566 = vpack.c.b16 %v498, %v496
      %v567 = vpack.c.b16 %v501, %v499
      %v568 = vpack.c.b16 %v502, %v500
      %v569 = vpack.c.b16 %v505, %v503
      %v570 = vpack.c.b16 %v506, %v504
      %v667 = vunpack.c.l.b16 %v279
      %v668 = vunpack.c.l.b16 %v280
      %v669 = vunpack.c.l.b16 %v281
      %v670 = vunpack.c.l.b16 %v282
      %v671 = vunpack.c.l.b16 %v283
      %v672 = vunpack.c.l.b16 %v284
      %v673 = vunpack.c.l.b16 %v285
      %v674 = vunpack.c.l.b16 %v286
      %v675 = vunpack.c.l.b16 %v287
      %v676 = vunpack.c.l.b16 %v288
      %v677 = vunpack.c.l.b16 %v289
      %v678 = vunpack.c.l.b16 %v290
      %v679 = vunpack.c.l.b16 %v291
      %v680 = vunpack.c.l.b16 %v292
      %v681 = vunpack.c.l.b16 %v293
      %v682 = vunpack.c.l.b16 %v294
      %v683 = vunpack.c.l.b16 %v295
      %v684 = vunpack.c.l.b16 %v296
      %v685 = vunpack.c.l.b16 %v297
      %v686 = vunpack.c.l.b16 %v298
      %v687 = vunpack.c.l.b16 %v299
      %v688 = vunpack.c.l.b16 %v300
      %v689 = vunpack.c.l.b16 %v301
      %v690 = vunpack.c.l.b16 %v302
      %v691 = vunpack.c.l.b16 %v303
      %v692 = vunpack.c.l.b16 %v304
      %v693 = vunpack.c.l.b16 %v305
      %v694 = vunpack.c.l.b16 %v306
      %v695 = vunpack.c.l.b16 %v307
      %v696 = vunpack.c.l.b16 %v308
      %v697 = vunpack.c.l.b16 %v309
      %v698 = vunpack.c.l.b16 %v310
      %v699 = vpack.c.b16 %v668, %v667
      %v700 = vpack.c.b16 %v670, %v669
      %v701 = vpack.c.b16 %v672, %v671
      %v702 = vpack.c.b16 %v674, %v673
      %v703 = vpack.c.b16 %v676, %v675
      %v704 = vpack.c.b16 %v678, %v677
      %v705 = vpack.c.b16 %v680, %v679
      %v706 = vpack.c.b16 %v682, %v681
      %v707 = vpack.c.b16 %v684, %v683
      %v708 = vpack.c.b16 %v686, %v685
      %v709 = vpack.c.b16 %v688, %v687
      %v710 = vpack.c.b16 %v690, %v689
      %v711 = vpack.c.b16 %v692, %v691
      %v712 = vpack.c.b16 %v694, %v693
      %v713 = vpack.c.b16 %v696, %v695
      %v714 = vpack.c.b16 %v698, %v697
      %731 = vmatpush.bf16.msra.mxu0 %v706
      %732 = vmatpush.bf16.msra.mxu0 %v705
      %733 = vmatpush.bf16.msra.mxu0 %v704
      %734 = vmatpush.bf16.msra.mxu0 %v703
      %735 = vmatpush.bf16.msra.mxu0 %v702
      %736 = vmatpush.bf16.msra.mxu0 %v701
      %737 = vmatpush.bf16.msra.mxu0 %v700
      %738 = vmatpush.bf16.msra.mxu0 %v699
      %739 = vmatmul.bf16.gmra.mxu0 %v507
      %v740 = vpop.f32.mrf.mxu0
      %v741 = vadd.f32 %v313, %v740
      %v742 = vpop.f32.mrf.mxu0
      %v743 = vadd.f32 %v313, %v742
      %744 = vmatmul.bf16.gmra.mxu0 %v509
      %v745 = vpop.f32.mrf.mxu0
      %v746 = vadd.f32 %v313, %v745
      %v747 = vpop.f32.mrf.mxu0
      %v748 = vadd.f32 %v313, %v747
      %749 = vmatmul.bf16.gmra.mxu0 %v511
      %v750 = vpop.f32.mrf.mxu0
      %v751 = vadd.f32 %v313, %v750
      %v752 = vpop.f32.mrf.mxu0
      %v753 = vadd.f32 %v313, %v752
      %754 = vmatmul.bf16.gmra.mxu0 %v513
      %v755 = vpop.f32.mrf.mxu0
      %v756 = vadd.f32 %v313, %v755
      %v757 = vpop.f32.mrf.mxu0
      %v758 = vadd.f32 %v313, %v757
      %759 = vmatmul.bf16.gmra.mxu0 %v515
      %v760 = vpop.f32.mrf.mxu0
      %v761 = vadd.f32 %v313, %v760
      %v762 = vpop.f32.mrf.mxu0
      %v763 = vadd.f32 %v313, %v762
      %764 = vmatmul.bf16.gmra.mxu0 %v517
      %v765 = vpop.f32.mrf.mxu0
      %v766 = vadd.f32 %v313, %v765
      %v767 = vpop.f32.mrf.mxu0
      %v768 = vadd.f32 %v313, %v767
      %769 = vmatmul.bf16.gmra.mxu0 %v519
      %v770 = vpop.f32.mrf.mxu0
      %v771 = vadd.f32 %v313, %v770
      %v772 = vpop.f32.mrf.mxu0
      %v773 = vadd.f32 %v313, %v772
      %774 = vmatmul.bf16.gmra.mxu0 %v521
      %v775 = vpop.f32.mrf.mxu0
      %v776 = vadd.f32 %v313, %v775
      %v777 = vpop.f32.mrf.mxu0
      %v778 = vadd.f32 %v313, %v777
      %779 = vmatmul.bf16.gmra.mxu0 %v523
      %v780 = vpop.f32.mrf.mxu0
      %v781 = vadd.f32 %v313, %v780
      %v782 = vpop.f32.mrf.mxu0
      %v783 = vadd.f32 %v313, %v782
      %784 = vmatmul.bf16.gmra.mxu0 %v525
      %v785 = vpop.f32.mrf.mxu0
      %v786 = vadd.f32 %v313, %v785
      %v787 = vpop.f32.mrf.mxu0
      %v788 = vadd.f32 %v313, %v787
      %789 = vmatmul.bf16.gmra.mxu0 %v527
      %v790 = vpop.f32.mrf.mxu0
      %v791 = vadd.f32 %v313, %v790
      %v792 = vpop.f32.mrf.mxu0
      %v793 = vadd.f32 %v313, %v792
      %794 = vmatmul.bf16.gmra.mxu0 %v529
      %v795 = vpop.f32.mrf.mxu0
      %v796 = vadd.f32 %v313, %v795
      %v797 = vpop.f32.mrf.mxu0
      %v798 = vadd.f32 %v313, %v797
      %799 = vmatmul.bf16.gmra.mxu0 %v531
      %v800 = vpop.f32.mrf.mxu0
      %v801 = vadd.f32 %v313, %v800
      %v802 = vpop.f32.mrf.mxu0
      %v803 = vadd.f32 %v313, %v802
      %804 = vmatmul.bf16.gmra.mxu0 %v533
      %v805 = vpop.f32.mrf.mxu0
      %v806 = vadd.f32 %v313, %v805
      %v807 = vpop.f32.mrf.mxu0
      %v808 = vadd.f32 %v313, %v807
      %809 = vmatmul.bf16.gmra.mxu0 %v535
      %v810 = vpop.f32.mrf.mxu0
      %v811 = vadd.f32 %v313, %v810
      %v812 = vpop.f32.mrf.mxu0
      %v813 = vadd.f32 %v313, %v812
      %814 = vmatmul.bf16.gmra.mxu0 %v537
      %v815 = vpop.f32.mrf.mxu0
      %v816 = vadd.f32 %v313, %v815
      %v817 = vpop.f32.mrf.mxu0
      %v818 = vadd.f32 %v313, %v817
      %819 = vmatmul.bf16.gmra.mxu0 %v539
      %v820 = vpop.f32.mrf.mxu0
      %v821 = vadd.f32 %v313, %v820
      %v822 = vpop.f32.mrf.mxu0
      %v823 = vadd.f32 %v313, %v822
      %824 = vmatmul.bf16.gmra.mxu0 %v541
      %v825 = vpop.f32.mrf.mxu0
      %v826 = vadd.f32 %v313, %v825
      %v827 = vpop.f32.mrf.mxu0
      %v828 = vadd.f32 %v313, %v827
      %829 = vmatmul.bf16.gmra.mxu0 %v543
      %v830 = vpop.f32.mrf.mxu0
      %v831 = vadd.f32 %v313, %v830
      %v832 = vpop.f32.mrf.mxu0
      %v833 = vadd.f32 %v313, %v832
      %834 = vmatmul.bf16.gmra.mxu0 %v545
      %v835 = vpop.f32.mrf.mxu0
      %v836 = vadd.f32 %v313, %v835
      %v837 = vpop.f32.mrf.mxu0
      %v838 = vadd.f32 %v313, %v837
      %839 = vmatmul.bf16.gmra.mxu0 %v547
      %v840 = vpop.f32.mrf.mxu0
      %v841 = vadd.f32 %v313, %v840
      %v842 = vpop.f32.mrf.mxu0
      %v843 = vadd.f32 %v313, %v842
      %844 = vmatmul.bf16.gmra.mxu0 %v549
      %v845 = vpop.f32.mrf.mxu0
      %v846 = vadd.f32 %v313, %v845
      %v847 = vpop.f32.mrf.mxu0
      %v848 = vadd.f32 %v313, %v847
      %849 = vmatmul.bf16.gmra.mxu0 %v551
      %v850 = vpop.f32.mrf.mxu0
      %v851 = vadd.f32 %v313, %v850
      %v852 = vpop.f32.mrf.mxu0
      %v853 = vadd.f32 %v313, %v852
      %854 = vmatmul.bf16.gmra.mxu0 %v553
      %v855 = vpop.f32.mrf.mxu0
      %v856 = vadd.f32 %v313, %v855
      %v857 = vpop.f32.mrf.mxu0
      %v858 = vadd.f32 %v313, %v857
      %859 = vmatmul.bf16.gmra.mxu0 %v555
      %v860 = vpop.f32.mrf.mxu0
      %v861 = vadd.f32 %v313, %v860
      %v862 = vpop.f32.mrf.mxu0
      %v863 = vadd.f32 %v313, %v862
      %864 = vmatmul.bf16.gmra.mxu0 %v557
      %v865 = vpop.f32.mrf.mxu0
      %v866 = vadd.f32 %v313, %v865
      %v867 = vpop.f32.mrf.mxu0
      %v868 = vadd.f32 %v313, %v867
      %869 = vmatmul.bf16.gmra.mxu0 %v559
      %v870 = vpop.f32.mrf.mxu0
      %v871 = vadd.f32 %v313, %v870
      %v872 = vpop.f32.mrf.mxu0
      %v873 = vadd.f32 %v313, %v872
      %874 = vmatmul.bf16.gmra.mxu0 %v561
      %v875 = vpop.f32.mrf.mxu0
      %v876 = vadd.f32 %v313, %v875
      %v877 = vpop.f32.mrf.mxu0
      %v878 = vadd.f32 %v313, %v877
      %879 = vmatmul.bf16.gmra.mxu0 %v563
      %v880 = vpop.f32.mrf.mxu0
      %v881 = vadd.f32 %v313, %v880
      %v882 = vpop.f32.mrf.mxu0
      %v883 = vadd.f32 %v313, %v882
      %884 = vmatmul.bf16.gmra.mxu0 %v565
      %v885 = vpop.f32.mrf.mxu0
      %v886 = vadd.f32 %v313, %v885
      %v887 = vpop.f32.mrf.mxu0
      %v888 = vadd.f32 %v313, %v887
      %889 = vmatmul.bf16.gmra.mxu0 %v567
      %v890 = vpop.f32.mrf.mxu0
      %v891 = vadd.f32 %v313, %v890
      %v892 = vpop.f32.mrf.mxu0
      %v893 = vadd.f32 %v313, %v892
      %894 = vmatmul.bf16.gmra.mxu0 %v569
      %v895 = vpop.f32.mrf.mxu0
      %v896 = vadd.f32 %v313, %v895
      %v897 = vpop.f32.mrf.mxu0
      %v898 = vadd.f32 %v313, %v897
      %899 = vdwg.mxu0
      %900 = vmatpush.bf16.msra.mxu0 %v714
      %901 = vmatpush.bf16.msra.mxu0 %v713
      %902 = vmatpush.bf16.msra.mxu0 %v712
      %903 = vmatpush.bf16.msra.mxu0 %v711
      %904 = vmatpush.bf16.msra.mxu0 %v710
      %905 = vmatpush.bf16.msra.mxu0 %v709
      %906 = vmatpush.bf16.msra.mxu0 %v708
      %907 = vmatpush.bf16.msra.mxu0 %v707
      %908 = vmatmul.bf16.gmra.mxu0 %v508
      %v909 = vpop.f32.mrf.mxu0
      %v910 = vadd.f32 %v741, %v909
      %v911 = vpop.f32.mrf.mxu0
      %v912 = vadd.f32 %v743, %v911
      %913 = vmatmul.bf16.gmra.mxu0 %v510
      %v914 = vpop.f32.mrf.mxu0
      %v915 = vadd.f32 %v746, %v914
      %v916 = vpop.f32.mrf.mxu0
      %v917 = vadd.f32 %v748, %v916
      %918 = vmatmul.bf16.gmra.mxu0 %v512
      %v919 = vpop.f32.mrf.mxu0
      %v920 = vadd.f32 %v751, %v919
      %v921 = vpop.f32.mrf.mxu0
      %v922 = vadd.f32 %v753, %v921
      %923 = vmatmul.bf16.gmra.mxu0 %v514
      %v924 = vpop.f32.mrf.mxu0
      %v925 = vadd.f32 %v756, %v924
      %v926 = vpop.f32.mrf.mxu0
      %v927 = vadd.f32 %v758, %v926
      %928 = vmatmul.bf16.gmra.mxu0 %v516
      %v929 = vpop.f32.mrf.mxu0
      %v930 = vadd.f32 %v761, %v929
      %v931 = vpop.f32.mrf.mxu0
      %v932 = vadd.f32 %v763, %v931
      %933 = vmatmul.bf16.gmra.mxu0 %v518
      %v934 = vpop.f32.mrf.mxu0
      %v935 = vadd.f32 %v766, %v934
      %v936 = vpop.f32.mrf.mxu0
      %v937 = vadd.f32 %v768, %v936
      %938 = vmatmul.bf16.gmra.mxu0 %v520
      %v939 = vpop.f32.mrf.mxu0
      %v940 = vadd.f32 %v771, %v939
      %v941 = vpop.f32.mrf.mxu0
      %v942 = vadd.f32 %v773, %v941
      %943 = vmatmul.bf16.gmra.mxu0 %v522
      %v944 = vpop.f32.mrf.mxu0
      %v945 = vadd.f32 %v776, %v944
      %v946 = vpop.f32.mrf.mxu0
      %v947 = vadd.f32 %v778, %v946
      %948 = vmatmul.bf16.gmra.mxu0 %v524
      %v949 = vpop.f32.mrf.mxu0
      %v950 = vadd.f32 %v781, %v949
      %v951 = vpop.f32.mrf.mxu0
      %v952 = vadd.f32 %v783, %v951
      %953 = vmatmul.bf16.gmra.mxu0 %v526
      %v954 = vpop.f32.mrf.mxu0
      %v955 = vadd.f32 %v786, %v954
      %v956 = vpop.f32.mrf.mxu0
      %v957 = vadd.f32 %v788, %v956
      %958 = vmatmul.bf16.gmra.mxu0 %v528
      %v959 = vpop.f32.mrf.mxu0
      %v960 = vadd.f32 %v791, %v959
      %v961 = vpop.f32.mrf.mxu0
      %v962 = vadd.f32 %v793, %v961
      %963 = vmatmul.bf16.gmra.mxu0 %v530
      %v964 = vpop.f32.mrf.mxu0
      %v965 = vadd.f32 %v796, %v964
      %v966 = vpop.f32.mrf.mxu0
      %v967 = vadd.f32 %v798, %v966
      %968 = vmatmul.bf16.gmra.mxu0 %v532
      %v969 = vpop.f32.mrf.mxu0
      %v970 = vadd.f32 %v801, %v969
      %v971 = vpop.f32.mrf.mxu0
      %v972 = vadd.f32 %v803, %v971
      %973 = vmatmul.bf16.gmra.mxu0 %v534
      %v974 = vpop.f32.mrf.mxu0
      %v975 = vadd.f32 %v806, %v974
      %v976 = vpop.f32.mrf.mxu0
      %v977 = vadd.f32 %v808, %v976
      %978 = vmatmul.bf16.gmra.mxu0 %v536
      %v979 = vpop.f32.mrf.mxu0
      %v980 = vadd.f32 %v811, %v979
      %v981 = vpop.f32.mrf.mxu0
      %v982 = vadd.f32 %v813, %v981
      %983 = vmatmul.bf16.gmra.mxu0 %v538
      %v984 = vpop.f32.mrf.mxu0
      %v985 = vadd.f32 %v816, %v984
      %v986 = vpop.f32.mrf.mxu0
      %v987 = vadd.f32 %v818, %v986
      %988 = vmatmul.bf16.gmra.mxu0 %v540
      %v989 = vpop.f32.mrf.mxu0
      %v990 = vadd.f32 %v821, %v989
      %v991 = vpop.f32.mrf.mxu0
      %v992 = vadd.f32 %v823, %v991
      %993 = vmatmul.bf16.gmra.mxu0 %v542
      %v994 = vpop.f32.mrf.mxu0
      %v995 = vadd.f32 %v826, %v994
      %v996 = vpop.f32.mrf.mxu0
      %v997 = vadd.f32 %v828, %v996
      %998 = vmatmul.bf16.gmra.mxu0 %v544
      %v999 = vpop.f32.mrf.mxu0
      %v1000 = vadd.f32 %v831, %v999
      %v1001 = vpop.f32.mrf.mxu0
      %v1002 = vadd.f32 %v833, %v1001
      %1003 = vmatmul.bf16.gmra.mxu0 %v546
      %v1004 = vpop.f32.mrf.mxu0
      %v1005 = vadd.f32 %v836, %v1004
      %v1006 = vpop.f32.mrf.mxu0
      %v1007 = vadd.f32 %v838, %v1006
      %1008 = vmatmul.bf16.gmra.mxu0 %v548
      %v1009 = vpop.f32.mrf.mxu0
      %v1010 = vadd.f32 %v841, %v1009
      %v1011 = vpop.f32.mrf.mxu0
      %v1012 = vadd.f32 %v843, %v1011
      %1013 = vmatmul.bf16.gmra.mxu0 %v550
      %v1014 = vpop.f32.mrf.mxu0
      %v1015 = vadd.f32 %v846, %v1014
      %v1016 = vpop.f32.mrf.mxu0
      %v1017 = vadd.f32 %v848, %v1016
      %1018 = vmatmul.bf16.gmra.mxu0 %v552
      %v1019 = vpop.f32.mrf.mxu0
      %v1020 = vadd.f32 %v851, %v1019
      %v1021 = vpop.f32.mrf.mxu0
      %v1022 = vadd.f32 %v853, %v1021
      %1023 = vmatmul.bf16.gmra.mxu0 %v554
      %v1024 = vpop.f32.mrf.mxu0
      %v1025 = vadd.f32 %v856, %v1024
      %v1026 = vpop.f32.mrf.mxu0
      %v1027 = vadd.f32 %v858, %v1026
      %1028 = vmatmul.bf16.gmra.mxu0 %v556
      %v1029 = vpop.f32.mrf.mxu0
      %v1030 = vadd.f32 %v861, %v1029
      %v1031 = vpop.f32.mrf.mxu0
      %v1032 = vadd.f32 %v863, %v1031
      %1033 = vmatmul.bf16.gmra.mxu0 %v558
      %v1034 = vpop.f32.mrf.mxu0
      %v1035 = vadd.f32 %v866, %v1034
      %v1036 = vpop.f32.mrf.mxu0
      %v1037 = vadd.f32 %v868, %v1036
      %1038 = vmatmul.bf16.gmra.mxu0 %v560
      %v1039 = vpop.f32.mrf.mxu0
      %v1040 = vadd.f32 %v871, %v1039
      %v1041 = vpop.f32.mrf.mxu0
      %v1042 = vadd.f32 %v873, %v1041
      %1043 = vmatmul.bf16.gmra.mxu0 %v562
      %v1044 = vpop.f32.mrf.mxu0
      %v1045 = vadd.f32 %v876, %v1044
      %v1046 = vpop.f32.mrf.mxu0
      %v1047 = vadd.f32 %v878, %v1046
      %1048 = vmatmul.bf16.gmra.mxu0 %v564
      %v1049 = vpop.f32.mrf.mxu0
      %v1050 = vadd.f32 %v881, %v1049
      %v1051 = vpop.f32.mrf.mxu0
      %v1052 = vadd.f32 %v883, %v1051
      %1053 = vmatmul.bf16.gmra.mxu0 %v566
      %v1054 = vpop.f32.mrf.mxu0
      %v1055 = vadd.f32 %v886, %v1054
      %v1056 = vpop.f32.mrf.mxu0
      %v1057 = vadd.f32 %v888, %v1056
      %1058 = vmatmul.bf16.gmra.mxu0 %v568
      %v1059 = vpop.f32.mrf.mxu0
      %v1060 = vadd.f32 %v891, %v1059
      %v1061 = vpop.f32.mrf.mxu0
      %v1062 = vadd.f32 %v893, %v1061
      %1063 = vmatmul.bf16.gmra.mxu0 %v570
      %v1064 = vpop.f32.mrf.mxu0
      %v1065 = vadd.f32 %v896, %v1064
      %v1066 = vpop.f32.mrf.mxu0
      %v1067 = vadd.f32 %v898, %v1066
      %1068 = vdwg.mxu0
      %1069 = vst [vmem:[%s209] sm:$0xff] %v910
      %1070 = vst [vmem:[%s209 + $0x8] sm:$0xff] %v912
      %1071 = vst [vmem:[%s209 + $0x10] sm:$0xff] %v915
      %1072 = vst [vmem:[%s209 + $0x18] sm:$0xff] %v917
      %1073 = vst [vmem:[%s209 + $0x20] sm:$0xff] %v920
      %1074 = vst [vmem:[%s209 + $0x28] sm:$0xff] %v922
      %1075 = vst [vmem:[%s209 + $0x30] sm:$0xff] %v925
      %1076 = vst [vmem:[%s209 + $0x38] sm:$0xff] %v927
      %1077 = vst [vmem:[%s209 + $0x40] sm:$0xff] %v930
      %1078 = vst [vmem:[%s209 + $0x48] sm:$0xff] %v932
      %1079 = vst [vmem:[%s209 + $0x50] sm:$0xff] %v935
      %1080 = vst [vmem:[%s209 + $0x58] sm:$0xff] %v937
      %1081 = vst [vmem:[%s209 + $0x60] sm:$0xff] %v940
      %1082 = vst [vmem:[%s209 + $0x68] sm:$0xff] %v942
      %1083 = vst [vmem:[%s209 + $0x70] sm:$0xff] %v945
      %1084 = vst [vmem:[%s209 + $0x78] sm:$0xff] %v947
      %1085 = vst [vmem:[%s209 + $0x80] sm:$0xff] %v950
      %1086 = vst [vmem:[%s209 + $0x88] sm:$0xff] %v952
      %1087 = vst [vmem:[%s209 + $0x90] sm:$0xff] %v955
      %1088 = vst [vmem:[%s209 + $0x98] sm:$0xff] %v957
      %1089 = vst [vmem:[%s209 + $0xa0] sm:$0xff] %v960
      %1090 = vst [vmem:[%s209 + $0xa8] sm:$0xff] %v962
      %1091 = vst [vmem:[%s209 + $0xb0] sm:$0xff] %v965
      %1092 = vst [vmem:[%s209 + $0xb8] sm:$0xff] %v967
      %1093 = vst [vmem:[%s209 + $0xc0] sm:$0xff] %v970
      %1094 = vst [vmem:[%s209 + $0xc8] sm:$0xff] %v972
      %1095 = vst [vmem:[%s209 + $0xd0] sm:$0xff] %v975
      %1096 = vst [vmem:[%s209 + $0xd8] sm:$0xff] %v977
      %1097 = vst [vmem:[%s209 + $0xe0] sm:$0xff] %v980
      %1098 = vst [vmem:[%s209 + $0xe8] sm:$0xff] %v982
      %1099 = vst [vmem:[%s209 + $0xf0] sm:$0xff] %v985
      %1100 = vst [vmem:[%s209 + $0xf8] sm:$0xff] %v987
      %1101 = vst [vmem:[%s209 + $0x100] sm:$0xff] %v990
      %1102 = vst [vmem:[%s209 + $0x108] sm:$0xff] %v992
      %1103 = vst [vmem:[%s209 + $0x110] sm:$0xff] %v995
      %1104 = vst [vmem:[%s209 + $0x118] sm:$0xff] %v997
      %1105 = vst [vmem:[%s209 + $0x120] sm:$0xff] %v1000
      %1106 = vst [vmem:[%s209 + $0x128] sm:$0xff] %v1002
      %1107 = vst [vmem:[%s209 + $0x130] sm:$0xff] %v1005
      %1108 = vst [vmem:[%s209 + $0x138] sm:$0xff] %v1007
      %1109 = vst [vmem:[%s209 + $0x140] sm:$0xff] %v1010
      %1110 = vst [vmem:[%s209 + $0x148] sm:$0xff] %v1012
      %1111 = vst [vmem:[%s209 + $0x150] sm:$0xff] %v1015
      %1112 = vst [vmem:[%s209 + $0x158] sm:$0xff] %v1017
      %1113 = vst [vmem:[%s209 + $0x160] sm:$0xff] %v1020
      %1114 = vst [vmem:[%s209 + $0x168] sm:$0xff] %v1022
      %1115 = vst [vmem:[%s209 + $0x170] sm:$0xff] %v1025
      %1116 = vst [vmem:[%s209 + $0x178] sm:$0xff] %v1027
      %1117 = vst [vmem:[%s209 + $0x180] sm:$0xff] %v1030
      %1118 = vst [vmem:[%s209 + $0x188] sm:$0xff] %v1032
      %1119 = vst [vmem:[%s209 + $0x190] sm:$0xff] %v1035
      %1120 = vst [vmem:[%s209 + $0x198] sm:$0xff] %v1037
      %1121 = vst [vmem:[%s209 + $0x1a0] sm:$0xff] %v1040
      %1122 = vst [vmem:[%s209 + $0x1a8] sm:$0xff] %v1042
      %1123 = vst [vmem:[%s209 + $0x1b0] sm:$0xff] %v1045
      %1124 = vst [vmem:[%s209 + $0x1b8] sm:$0xff] %v1047
      %1125 = vst [vmem:[%s209 + $0x1c0] sm:$0xff] %v1050
      %1126 = vst [vmem:[%s209 + $0x1c8] sm:$0xff] %v1052
      %1127 = vst [vmem:[%s209 + $0x1d0] sm:$0xff] %v1055
      %1128 = vst [vmem:[%s209 + $0x1d8] sm:$0xff] %v1057
      %1129 = vst [vmem:[%s209 + $0x1e0] sm:$0xff] %v1060
      %1130 = vst [vmem:[%s209 + $0x1e8] sm:$0xff] %v1062
      %1131 = vst [vmem:[%s209 + $0x1f0] sm:$0xff] %v1065
      %1132 = vst [vmem:[%s209 + $0x1f8] sm:$0xff] %v1067
      %s1133 = smul.u32 %s16, 512
      %v1134 = vlaneseq
      %v1135 = vshrl.u32 %v1134, 7
      %v1136 = vadd.s32 %v1135, 8
      %v1137 = vadd.s32 %v1135, 16
      %v1138 = vadd.s32 %v1135, 24
      %v1139 = vadd.s32 %v1135, 32
      %v1140 = vadd.s32 %v1135, 40
      %v1141 = vadd.s32 %v1135, 48
      %v1142 = vadd.s32 %v1135, 56
      %v1143 = vadd.s32 %v1135, 64
      %v1144 = vadd.s32 %v1135, 72
      %v1145 = vadd.s32 %v1135, 80
      %v1146 = vadd.s32 %v1135, 88
      %v1147 = vadd.s32 %v1135, 96
      %v1148 = vadd.s32 %v1135, 104
      %v1149 = vadd.s32 %v1135, 112
      %v1150 = vadd.s32 %v1135, 120
      %v1151 = vadd.s32 %v1135, 128
      %v1152 = vadd.s32 %v1135, 136
      %v1153 = vadd.s32 %v1135, 144
      %v1154 = vadd.s32 %v1135, 152
      %v1155 = vadd.s32 %v1135, 160
      %v1156 = vadd.s32 %v1135, 168
      %v1157 = vadd.s32 %v1135, 176
      %v1158 = vadd.s32 %v1135, 184
      %v1159 = vadd.s32 %v1135, 192
      %v1160 = vadd.s32 %v1135, 200
      %v1161 = vadd.s32 %v1135, 208
      %v1162 = vadd.s32 %v1135, 216
      %v1163 = vadd.s32 %v1135, 224
      %v1164 = vadd.s32 %v1135, 232
      %v1165 = vadd.s32 %v1135, 240
      %v1166 = vadd.s32 %v1135, 248
      %v1167 = vadd.s32 %v1135, 256
      %v1168 = vadd.s32 %v1135, 264
      %v1169 = vadd.s32 %v1135, 272
      %v1170 = vadd.s32 %v1135, 280
      %v1171 = vadd.s32 %v1135, 288
      %v1172 = vadd.s32 %v1135, 296
      %v1173 = vadd.s32 %v1135, 304
      %v1174 = vadd.s32 %v1135, 312
      %v1175 = vadd.s32 %v1135, 320
      %v1176 = vadd.s32 %v1135, 328
      %v1177 = vadd.s32 %v1135, 336
      %v1178 = vadd.s32 %v1135, 344
      %v1179 = vadd.s32 %v1135, 352
      %v1180 = vadd.s32 %v1135, 360
      %v1181 = vadd.s32 %v1135, 368
      %v1182 = vadd.s32 %v1135, 376
      %v1183 = vadd.s32 %v1135, 384
      %v1184 = vadd.s32 %v1135, 392
      %v1185 = vadd.s32 %v1135, 400
      %v1186 = vadd.s32 %v1135, 408
      %v1187 = vadd.s32 %v1135, 416
      %v1188 = vadd.s32 %v1135, 424
      %v1189 = vadd.s32 %v1135, 432
      %v1190 = vadd.s32 %v1135, 440
      %v1191 = vadd.s32 %v1135, 448
      %v1192 = vadd.s32 %v1135, 456
      %v1193 = vadd.s32 %v1135, 464
      %v1194 = vadd.s32 %v1135, 472
      %v1195 = vadd.s32 %v1135, 480
      %v1196 = vadd.s32 %v1135, 488
      %v1197 = vadd.s32 %v1135, 496
      %v1198 = vadd.s32 %v1135, 504
      %v1199 = vstv %s1133
      %v1200 = vadd.s32 %v1199, %v1135
      %v1201 = vadd.s32 %v1199, %v1136
      %v1202 = vadd.s32 %v1199, %v1137
      %v1203 = vadd.s32 %v1199, %v1138
      %v1204 = vadd.s32 %v1199, %v1139
      %v1205 = vadd.s32 %v1199, %v1140
      %v1206 = vadd.s32 %v1199, %v1141
      %v1207 = vadd.s32 %v1199, %v1142
      %v1208 = vadd.s32 %v1199, %v1143
      %v1209 = vadd.s32 %v1199, %v1144
      %v1210 = vadd.s32 %v1199, %v1145
      %v1211 = vadd.s32 %v1199, %v1146
      %v1212 = vadd.s32 %v1199, %v1147
      %v1213 = vadd.s32 %v1199, %v1148
      %v1214 = vadd.s32 %v1199, %v1149
      %v1215 = vadd.s32 %v1199, %v1150
      %v1216 = vadd.s32 %v1199, %v1151
      %v1217 = vadd.s32 %v1199, %v1152
      %v1218 = vadd.s32 %v1199, %v1153
      %v1219 = vadd.s32 %v1199, %v1154
      %v1220 = vadd.s32 %v1199, %v1155
      %v1221 = vadd.s32 %v1199, %v1156
      %v1222 = vadd.s32 %v1199, %v1157
      %v1223 = vadd.s32 %v1199, %v1158
      %v1224 = vadd.s32 %v1199, %v1159
      %v1225 = vadd.s32 %v1199, %v1160
      %v1226 = vadd.s32 %v1199, %v1161
      %v1227 = vadd.s32 %v1199, %v1162
      %v1228 = vadd.s32 %v1199, %v1163
      %v1229 = vadd.s32 %v1199, %v1164
      %v1230 = vadd.s32 %v1199, %v1165
      %v1231 = vadd.s32 %v1199, %v1166
      %v1232 = vadd.s32 %v1199, %v1167
      %v1233 = vadd.s32 %v1199, %v1168
      %v1234 = vadd.s32 %v1199, %v1169
      %v1235 = vadd.s32 %v1199, %v1170
      %v1236 = vadd.s32 %v1199, %v1171
      %v1237 = vadd.s32 %v1199, %v1172
      %v1238 = vadd.s32 %v1199, %v1173
      %v1239 = vadd.s32 %v1199, %v1174
      %v1240 = vadd.s32 %v1199, %v1175
      %v1241 = vadd.s32 %v1199, %v1176
      %v1242 = vadd.s32 %v1199, %v1177
      %v1243 = vadd.s32 %v1199, %v1178
      %v1244 = vadd.s32 %v1199, %v1179
      %v1245 = vadd.s32 %v1199, %v1180
      %v1246 = vadd.s32 %v1199, %v1181
      %v1247 = vadd.s32 %v1199, %v1182
      %v1248 = vadd.s32 %v1199, %v1183
      %v1249 = vadd.s32 %v1199, %v1184
      %v1250 = vadd.s32 %v1199, %v1185
      %v1251 = vadd.s32 %v1199, %v1186
      %v1252 = vadd.s32 %v1199, %v1187
      %v1253 = vadd.s32 %v1199, %v1188
      %v1254 = vadd.s32 %v1199, %v1189
      %v1255 = vadd.s32 %v1199, %v1190
      %v1256 = vadd.s32 %v1199, %v1191
      %v1257 = vadd.s32 %v1199, %v1192
      %v1258 = vadd.s32 %v1199, %v1193
      %v1259 = vadd.s32 %v1199, %v1194
      %v1260 = vadd.s32 %v1199, %v1195
      %v1261 = vadd.s32 %v1199, %v1196
      %v1262 = vadd.s32 %v1199, %v1197
      %v1263 = vadd.s32 %v1199, %v1198
      %vm1264 = vcmp.lt.s32.totalorder %v1200, 1024
      %vm1265 = vcmp.lt.s32.totalorder %v1201, 1024
      %vm1266 = vcmp.lt.s32.totalorder %v1202, 1024
      %vm1267 = vcmp.lt.s32.totalorder %v1203, 1024
      %vm1268 = vcmp.lt.s32.totalorder %v1204, 1024
      %vm1269 = vcmp.lt.s32.totalorder %v1205, 1024
      %vm1270 = vcmp.lt.s32.totalorder %v1206, 1024
      %vm1271 = vcmp.lt.s32.totalorder %v1207, 1024
      %vm1272 = vcmp.lt.s32.totalorder %v1208, 1024
      %vm1273 = vcmp.lt.s32.totalorder %v1209, 1024
      %vm1274 = vcmp.lt.s32.totalorder %v1210, 1024
      %vm1275 = vcmp.lt.s32.totalorder %v1211, 1024
      %vm1276 = vcmp.lt.s32.totalorder %v1212, 1024
      %vm1277 = vcmp.lt.s32.totalorder %v1213, 1024
      %vm1278 = vcmp.lt.s32.totalorder %v1214, 1024
      %vm1279 = vcmp.lt.s32.totalorder %v1215, 1024
      %vm1280 = vcmp.lt.s32.totalorder %v1216, 1024
      %vm1281 = vcmp.lt.s32.totalorder %v1217, 1024
      %vm1282 = vcmp.lt.s32.totalorder %v1218, 1024
      %vm1283 = vcmp.lt.s32.totalorder %v1219, 1024
      %vm1284 = vcmp.lt.s32.totalorder %v1220, 1024
      %vm1285 = vcmp.lt.s32.totalorder %v1221, 1024
      %vm1286 = vcmp.lt.s32.totalorder %v1222, 1024
      %vm1287 = vcmp.lt.s32.totalorder %v1223, 1024
      %vm1288 = vcmp.lt.s32.totalorder %v1224, 1024
      %vm1289 = vcmp.lt.s32.totalorder %v1225, 1024
      %vm1290 = vcmp.lt.s32.totalorder %v1226, 1024
      %vm1291 = vcmp.lt.s32.totalorder %v1227, 1024
      %vm1292 = vcmp.lt.s32.totalorder %v1228, 1024
      %vm1293 = vcmp.lt.s32.totalorder %v1229, 1024
      %vm1294 = vcmp.lt.s32.totalorder %v1230, 1024
      %vm1295 = vcmp.lt.s32.totalorder %v1231, 1024
      %vm1296 = vcmp.lt.s32.totalorder %v1232, 1024
      %vm1297 = vcmp.lt.s32.totalorder %v1233, 1024
      %vm1298 = vcmp.lt.s32.totalorder %v1234, 1024
      %vm1299 = vcmp.lt.s32.totalorder %v1235, 1024
      %vm1300 = vcmp.lt.s32.totalorder %v1236, 1024
      %vm1301 = vcmp.lt.s32.totalorder %v1237, 1024
      %vm1302 = vcmp.lt.s32.totalorder %v1238, 1024
      %vm1303 = vcmp.lt.s32.totalorder %v1239, 1024
      %vm1304 = vcmp.lt.s32.totalorder %v1240, 1024
      %vm1305 = vcmp.lt.s32.totalorder %v1241, 1024
      %vm1306 = vcmp.lt.s32.totalorder %v1242, 1024
      %vm1307 = vcmp.lt.s32.totalorder %v1243, 1024
      %vm1308 = vcmp.lt.s32.totalorder %v1244, 1024
      %vm1309 = vcmp.lt.s32.totalorder %v1245, 1024
      %vm1310 = vcmp.lt.s32.totalorder %v1246, 1024
      %vm1311 = vcmp.lt.s32.totalorder %v1247, 1024
      %vm1312 = vcmp.lt.s32.totalorder %v1248, 1024
      %vm1313 = vcmp.lt.s32.totalorder %v1249, 1024
      %vm1314 = vcmp.lt.s32.totalorder %v1250, 1024
      %vm1315 = vcmp.lt.s32.totalorder %v1251, 1024
      %vm1316 = vcmp.lt.s32.totalorder %v1252, 1024
      %vm1317 = vcmp.lt.s32.totalorder %v1253, 1024
      %vm1318 = vcmp.lt.s32.totalorder %v1254, 1024
      %vm1319 = vcmp.lt.s32.totalorder %v1255, 1024
      %vm1320 = vcmp.lt.s32.totalorder %v1256, 1024
      %vm1321 = vcmp.lt.s32.totalorder %v1257, 1024
      %vm1322 = vcmp.lt.s32.totalorder %v1258, 1024
      %vm1323 = vcmp.lt.s32.totalorder %v1259, 1024
      %vm1324 = vcmp.lt.s32.totalorder %v1260, 1024
      %vm1325 = vcmp.lt.s32.totalorder %v1261, 1024
      %vm1326 = vcmp.lt.s32.totalorder %v1262, 1024
      %vm1327 = vcmp.lt.s32.totalorder %v1263, 1024
      %v1328 = vsel %vm1264, 1, 0
      %v1329 = vsel %vm1265, 1, 0
      %v1330 = vsel %vm1266, 1, 0
      %v1331 = vsel %vm1267, 1, 0
      %v1332 = vsel %vm1268, 1, 0
      %v1333 = vsel %vm1269, 1, 0
      %v1334 = vsel %vm1270, 1, 0
      %v1335 = vsel %vm1271, 1, 0
      %v1336 = vsel %vm1272, 1, 0
      %v1337 = vsel %vm1273, 1, 0
      %v1338 = vsel %vm1274, 1, 0
      %v1339 = vsel %vm1275, 1, 0
      %v1340 = vsel %vm1276, 1, 0
      %v1341 = vsel %vm1277, 1, 0
      %v1342 = vsel %vm1278, 1, 0
      %v1343 = vsel %vm1279, 1, 0
      %v1344 = vsel %vm1280, 1, 0
      %v1345 = vsel %vm1281, 1, 0
      %v1346 = vsel %vm1282, 1, 0
      %v1347 = vsel %vm1283, 1, 0
      %v1348 = vsel %vm1284, 1, 0
      %v1349 = vsel %vm1285, 1, 0
      %v1350 = vsel %vm1286, 1, 0
      %v1351 = vsel %vm1287, 1, 0
      %v1352 = vsel %vm1288, 1, 0
      %v1353 = vsel %vm1289, 1, 0
      %v1354 = vsel %vm1290, 1, 0
      %v1355 = vsel %vm1291, 1, 0
      %v1356 = vsel %vm1292, 1, 0
      %v1357 = vsel %vm1293, 1, 0
      %v1358 = vsel %vm1294, 1, 0
      %v1359 = vsel %vm1295, 1, 0
      %v1360 = vsel %vm1296, 1, 0
      %v1361 = vsel %vm1297, 1, 0
      %v1362 = vsel %vm1298, 1, 0
      %v1363 = vsel %vm1299, 1, 0
      %v1364 = vsel %vm1300, 1, 0
      %v1365 = vsel %vm1301, 1, 0
      %v1366 = vsel %vm1302, 1, 0
      %v1367 = vsel %vm1303, 1, 0
      %v1368 = vsel %vm1304, 1, 0
      %v1369 = vsel %vm1305, 1, 0
      %v1370 = vsel %vm1306, 1, 0
      %v1371 = vsel %vm1307, 1, 0
      %v1372 = vsel %vm1308, 1, 0
      %v1373 = vsel %vm1309, 1, 0
      %v1374 = vsel %vm1310, 1, 0
      %v1375 = vsel %vm1311, 1, 0
      %v1376 = vsel %vm1312, 1, 0
      %v1377 = vsel %vm1313, 1, 0
      %v1378 = vsel %vm1314, 1, 0
      %v1379 = vsel %vm1315, 1, 0
      %v1380 = vsel %vm1316, 1, 0
      %v1381 = vsel %vm1317, 1, 0
      %v1382 = vsel %vm1318, 1, 0
      %v1383 = vsel %vm1319, 1, 0
      %v1384 = vsel %vm1320, 1, 0
      %v1385 = vsel %vm1321, 1, 0
      %v1386 = vsel %vm1322, 1, 0
      %v1387 = vsel %vm1323, 1, 0
      %v1388 = vsel %vm1324, 1, 0
      %v1389 = vsel %vm1325, 1, 0
      %v1390 = vsel %vm1326, 1, 0
      %v1391 = vsel %vm1327, 1, 0
      %v1392 = vcvt.s32.f32 %v1328
      %v1393 = vcvt.s32.f32 %v1329
      %v1394 = vcvt.s32.f32 %v1330
      %v1395 = vcvt.s32.f32 %v1331
      %v1396 = vcvt.s32.f32 %v1332
      %v1397 = vcvt.s32.f32 %v1333
      %v1398 = vcvt.s32.f32 %v1334
      %v1399 = vcvt.s32.f32 %v1335
      %v1400 = vcvt.s32.f32 %v1336
      %v1401 = vcvt.s32.f32 %v1337
      %v1402 = vcvt.s32.f32 %v1338
      %v1403 = vcvt.s32.f32 %v1339
      %v1404 = vcvt.s32.f32 %v1340
      %v1405 = vcvt.s32.f32 %v1341
      %v1406 = vcvt.s32.f32 %v1342
      %v1407 = vcvt.s32.f32 %v1343
      %v1408 = vcvt.s32.f32 %v1344
      %v1409 = vcvt.s32.f32 %v1345
      %v1410 = vcvt.s32.f32 %v1346
      %v1411 = vcvt.s32.f32 %v1347
      %v1412 = vcvt.s32.f32 %v1348
      %v1413 = vcvt.s32.f32 %v1349
      %v1414 = vcvt.s32.f32 %v1350
      %v1415 = vcvt.s32.f32 %v1351
      %v1416 = vcvt.s32.f32 %v1352
      %v1417 = vcvt.s32.f32 %v1353
      %v1418 = vcvt.s32.f32 %v1354
      %v1419 = vcvt.s32.f32 %v1355
      %v1420 = vcvt.s32.f32 %v1356
      %v1421 = vcvt.s32.f32 %v1357
      %v1422 = vcvt.s32.f32 %v1358
      %v1423 = vcvt.s32.f32 %v1359
      %v1424 = vcvt.s32.f32 %v1360
      %v1425 = vcvt.s32.f32 %v1361
      %v1426 = vcvt.s32.f32 %v1362
      %v1427 = vcvt.s32.f32 %v1363
      %v1428 = vcvt.s32.f32 %v1364
      %v1429 = vcvt.s32.f32 %v1365
      %v1430 = vcvt.s32.f32 %v1366
      %v1431 = vcvt.s32.f32 %v1367
      %v1432 = vcvt.s32.f32 %v1368
      %v1433 = vcvt.s32.f32 %v1369
      %v1434 = vcvt.s32.f32 %v1370
      %v1435 = vcvt.s32.f32 %v1371
      %v1436 = vcvt.s32.f32 %v1372
      %v1437 = vcvt.s32.f32 %v1373
      %v1438 = vcvt.s32.f32 %v1374
      %v1439 = vcvt.s32.f32 %v1375
      %v1440 = vcvt.s32.f32 %v1376
      %v1441 = vcvt.s32.f32 %v1377
      %v1442 = vcvt.s32.f32 %v1378
      %v1443 = vcvt.s32.f32 %v1379
      %v1444 = vcvt.s32.f32 %v1380
      %v1445 = vcvt.s32.f32 %v1381
      %v1446 = vcvt.s32.f32 %v1382
      %v1447 = vcvt.s32.f32 %v1383
      %v1448 = vcvt.s32.f32 %v1384
      %v1449 = vcvt.s32.f32 %v1385
      %v1450 = vcvt.s32.f32 %v1386
      %v1451 = vcvt.s32.f32 %v1387
      %v1452 = vcvt.s32.f32 %v1388
      %v1453 = vcvt.s32.f32 %v1389
      %v1454 = vcvt.s32.f32 %v1390
      %v1455 = vcvt.s32.f32 %v1391
      %v1456 = vmul.f32 %v910, %v1392
      %v1457 = vmul.f32 %v912, %v1393
      %v1458 = vmul.f32 %v915, %v1394
      %v1459 = vmul.f32 %v917, %v1395
      %v1460 = vmul.f32 %v920, %v1396
      %v1461 = vmul.f32 %v922, %v1397
      %v1462 = vmul.f32 %v925, %v1398
      %v1463 = vmul.f32 %v927, %v1399
      %v1464 = vmul.f32 %v930, %v1400
      %v1465 = vmul.f32 %v932, %v1401
      %v1466 = vmul.f32 %v935, %v1402
      %v1467 = vmul.f32 %v937, %v1403
      %v1468 = vmul.f32 %v940, %v1404
      %v1469 = vmul.f32 %v942, %v1405
      %v1470 = vmul.f32 %v945, %v1406
      %v1471 = vmul.f32 %v947, %v1407
      %v1472 = vmul.f32 %v950, %v1408
      %v1473 = vmul.f32 %v952, %v1409
      %v1474 = vmul.f32 %v955, %v1410
      %v1475 = vmul.f32 %v957, %v1411
      %v1476 = vmul.f32 %v960, %v1412
      %v1477 = vmul.f32 %v962, %v1413
      %v1478 = vmul.f32 %v965, %v1414
      %v1479 = vmul.f32 %v967, %v1415
      %v1480 = vmul.f32 %v970, %v1416
      %v1481 = vmul.f32 %v972, %v1417
      %v1482 = vmul.f32 %v975, %v1418
      %v1483 = vmul.f32 %v977, %v1419
      %v1484 = vmul.f32 %v980, %v1420
      %v1485 = vmul.f32 %v982, %v1421
      %v1486 = vmul.f32 %v985, %v1422
      %v1487 = vmul.f32 %v987, %v1423
      %v1488 = vmul.f32 %v990, %v1424
      %v1489 = vmul.f32 %v992, %v1425
      %v1490 = vmul.f32 %v995, %v1426
      %v1491 = vmul.f32 %v997, %v1427
      %v1492 = vmul.f32 %v1000, %v1428
      %v1493 = vmul.f32 %v1002, %v1429
      %v1494 = vmul.f32 %v1005, %v1430
      %v1495 = vmul.f32 %v1007, %v1431
      %v1496 = vmul.f32 %v1010, %v1432
      %v1497 = vmul.f32 %v1012, %v1433
      %v1498 = vmul.f32 %v1015, %v1434
      %v1499 = vmul.f32 %v1017, %v1435
      %v1500 = vmul.f32 %v1020, %v1436
      %v1501 = vmul.f32 %v1022, %v1437
      %v1502 = vmul.f32 %v1025, %v1438
      %v1503 = vmul.f32 %v1027, %v1439
      %v1504 = vmul.f32 %v1030, %v1440
      %v1505 = vmul.f32 %v1032, %v1441
      %v1506 = vmul.f32 %v1035, %v1442
      %v1507 = vmul.f32 %v1037, %v1443
      %v1508 = vmul.f32 %v1040, %v1444
      %v1509 = vmul.f32 %v1042, %v1445
      %v1510 = vmul.f32 %v1045, %v1446
      %v1511 = vmul.f32 %v1047, %v1447
      %v1512 = vmul.f32 %v1050, %v1448
      %v1513 = vmul.f32 %v1052, %v1449
      %v1514 = vmul.f32 %v1055, %v1450
      %v1515 = vmul.f32 %v1057, %v1451
      %v1516 = vmul.f32 %v1060, %v1452
      %v1517 = vmul.f32 %v1062, %v1453
      %v1518 = vmul.f32 %v1065, %v1454
      %v1519 = vmul.f32 %v1067, %v1455
      %v1520 = vadd.f32 %v1456, %v1457
      %v1521 = vadd.f32 %v1520, %v1458
      %v1522 = vadd.f32 %v1521, %v1459
      %v1523 = vadd.f32 %v1522, %v1460
      %v1524 = vadd.f32 %v1523, %v1461
      %v1525 = vadd.f32 %v1524, %v1462
      %v1526 = vadd.f32 %v1525, %v1463
      %v1527 = vadd.f32 %v1526, %v1464
      %v1528 = vadd.f32 %v1527, %v1465
      %v1529 = vadd.f32 %v1528, %v1466
      %v1530 = vadd.f32 %v1529, %v1467
      %v1531 = vadd.f32 %v1530, %v1468
      %v1532 = vadd.f32 %v1531, %v1469
      %v1533 = vadd.f32 %v1532, %v1470
      %v1534 = vadd.f32 %v1533, %v1471
      %v1535 = vadd.f32 %v1534, %v1472
      %v1536 = vadd.f32 %v1535, %v1473
      %v1537 = vadd.f32 %v1536, %v1474
      %v1538 = vadd.f32 %v1537, %v1475
      %v1539 = vadd.f32 %v1538, %v1476
      %v1540 = vadd.f32 %v1539, %v1477
      %v1541 = vadd.f32 %v1540, %v1478
      %v1542 = vadd.f32 %v1541, %v1479
      %v1543 = vadd.f32 %v1542, %v1480
      %v1544 = vadd.f32 %v1543, %v1481
      %v1545 = vadd.f32 %v1544, %v1482
      %v1546 = vadd.f32 %v1545, %v1483
      %v1547 = vadd.f32 %v1546, %v1484
      %v1548 = vadd.f32 %v1547, %v1485
      %v1549 = vadd.f32 %v1548, %v1486
      %v1550 = vadd.f32 %v1549, %v1487
      %v1551 = vadd.f32 %v1550, %v1488
      %v1552 = vadd.f32 %v1551, %v1489
      %v1553 = vadd.f32 %v1552, %v1490
      %v1554 = vadd.f32 %v1553, %v1491
      %v1555 = vadd.f32 %v1554, %v1492
      %v1556 = vadd.f32 %v1555, %v1493
      %v1557 = vadd.f32 %v1556, %v1494
      %v1558 = vadd.f32 %v1557, %v1495
      %v1559 = vadd.f32 %v1558, %v1496
      %v1560 = vadd.f32 %v1559, %v1497
      %v1561 = vadd.f32 %v1560, %v1498
      %v1562 = vadd.f32 %v1561, %v1499
      %v1563 = vadd.f32 %v1562, %v1500
      %v1564 = vadd.f32 %v1563, %v1501
      %v1565 = vadd.f32 %v1564, %v1502
      %v1566 = vadd.f32 %v1565, %v1503
      %v1567 = vadd.f32 %v1566, %v1504
      %v1568 = vadd.f32 %v1567, %v1505
      %v1569 = vadd.f32 %v1568, %v1506
      %v1570 = vadd.f32 %v1569, %v1507
      %v1571 = vadd.f32 %v1570, %v1508
      %v1572 = vadd.f32 %v1571, %v1509
      %v1573 = vadd.f32 %v1572, %v1510
      %v1574 = vadd.f32 %v1573, %v1511
      %v1575 = vadd.f32 %v1574, %v1512
      %v1576 = vadd.f32 %v1575, %v1513
      %v1577 = vadd.f32 %v1576, %v1514
      %v1578 = vadd.f32 %v1577, %v1515
      %v1579 = vadd.f32 %v1578, %v1516
      %v1580 = vadd.f32 %v1579, %v1517
      %v1581 = vadd.f32 %v1580, %v1518
      %v1582 = vadd.f32 %v1581, %v1519
      %v1583 = vrot.slane %v1582, 4
      %v1584 = vadd.f32 %v1582, %v1583
      %v1585 = vrot.slane %v1584, 2
      %v1586 = vadd.f32 %v1584, %v1585
      %v1587 = vrot.slane %v1586, 1
      %v1588 = vadd.f32 %v1586, %v1587
      %v1589 = vmul.f32 %v1456, %v1456
      %v1590 = vmul.f32 %v1457, %v1457
      %v1591 = vmul.f32 %v1458, %v1458
      %v1592 = vmul.f32 %v1459, %v1459
      %v1593 = vmul.f32 %v1460, %v1460
      %v1594 = vmul.f32 %v1461, %v1461
      %v1595 = vmul.f32 %v1462, %v1462
      %v1596 = vmul.f32 %v1463, %v1463
      %v1597 = vmul.f32 %v1464, %v1464
      %v1598 = vmul.f32 %v1465, %v1465
      %v1599 = vmul.f32 %v1466, %v1466
      %v1600 = vmul.f32 %v1467, %v1467
      %v1601 = vmul.f32 %v1468, %v1468
      %v1602 = vmul.f32 %v1469, %v1469
      %v1603 = vmul.f32 %v1470, %v1470
      %v1604 = vmul.f32 %v1471, %v1471
      %v1605 = vmul.f32 %v1472, %v1472
      %v1606 = vmul.f32 %v1473, %v1473
      %v1607 = vmul.f32 %v1474, %v1474
      %v1608 = vmul.f32 %v1475, %v1475
      %v1609 = vmul.f32 %v1476, %v1476
      %v1610 = vmul.f32 %v1477, %v1477
      %v1611 = vmul.f32 %v1478, %v1478
      %v1612 = vmul.f32 %v1479, %v1479
      %v1613 = vmul.f32 %v1480, %v1480
      %v1614 = vmul.f32 %v1481, %v1481
      %v1615 = vmul.f32 %v1482, %v1482
      %v1616 = vmul.f32 %v1483, %v1483
      %v1617 = vmul.f32 %v1484, %v1484
      %v1618 = vmul.f32 %v1485, %v1485
      %v1619 = vmul.f32 %v1486, %v1486
      %v1620 = vmul.f32 %v1487, %v1487
      %v1621 = vmul.f32 %v1488, %v1488
      %v1622 = vmul.f32 %v1489, %v1489
      %v1623 = vmul.f32 %v1490, %v1490
      %v1624 = vmul.f32 %v1491, %v1491
      %v1625 = vmul.f32 %v1492, %v1492
      %v1626 = vmul.f32 %v1493, %v1493
      %v1627 = vmul.f32 %v1494, %v1494
      %v1628 = vmul.f32 %v1495, %v1495
      %v1629 = vmul.f32 %v1496, %v1496
      %v1630 = vmul.f32 %v1497, %v1497
      %v1631 = vmul.f32 %v1498, %v1498
      %v1632 = vmul.f32 %v1499, %v1499
      %v1633 = vmul.f32 %v1500, %v1500
      %v1634 = vmul.f32 %v1501, %v1501
      %v1635 = vmul.f32 %v1502, %v1502
      %v1636 = vmul.f32 %v1503, %v1503
      %v1637 = vmul.f32 %v1504, %v1504
      %v1638 = vmul.f32 %v1505, %v1505
      %v1639 = vmul.f32 %v1506, %v1506
      %v1640 = vmul.f32 %v1507, %v1507
      %v1641 = vmul.f32 %v1508, %v1508
      %v1642 = vmul.f32 %v1509, %v1509
      %v1643 = vmul.f32 %v1510, %v1510
      %v1644 = vmul.f32 %v1511, %v1511
      %v1645 = vmul.f32 %v1512, %v1512
      %v1646 = vmul.f32 %v1513, %v1513
      %v1647 = vmul.f32 %v1514, %v1514
      %v1648 = vmul.f32 %v1515, %v1515
      %v1649 = vmul.f32 %v1516, %v1516
      %v1650 = vmul.f32 %v1517, %v1517
      %v1651 = vmul.f32 %v1518, %v1518
      %v1652 = vmul.f32 %v1519, %v1519
      %v1653 = vadd.f32 %v1589, %v1590
      %v1654 = vadd.f32 %v1653, %v1591
      %v1655 = vadd.f32 %v1654, %v1592
      %v1656 = vadd.f32 %v1655, %v1593
      %v1657 = vadd.f32 %v1656, %v1594
      %v1658 = vadd.f32 %v1657, %v1595
      %v1659 = vadd.f32 %v1658, %v1596
      %v1660 = vadd.f32 %v1659, %v1597
      %v1661 = vadd.f32 %v1660, %v1598
      %v1662 = vadd.f32 %v1661, %v1599
      %v1663 = vadd.f32 %v1662, %v1600
      %v1664 = vadd.f32 %v1663, %v1601
      %v1665 = vadd.f32 %v1664, %v1602
      %v1666 = vadd.f32 %v1665, %v1603
      %v1667 = vadd.f32 %v1666, %v1604
      %v1668 = vadd.f32 %v1667, %v1605
      %v1669 = vadd.f32 %v1668, %v1606
      %v1670 = vadd.f32 %v1669, %v1607
      %v1671 = vadd.f32 %v1670, %v1608
      %v1672 = vadd.f32 %v1671, %v1609
      %v1673 = vadd.f32 %v1672, %v1610
      %v1674 = vadd.f32 %v1673, %v1611
      %v1675 = vadd.f32 %v1674, %v1612
      %v1676 = vadd.f32 %v1675, %v1613
      %v1677 = vadd.f32 %v1676, %v1614
      %v1678 = vadd.f32 %v1677, %v1615
      %v1679 = vadd.f32 %v1678, %v1616
      %v1680 = vadd.f32 %v1679, %v1617
      %v1681 = vadd.f32 %v1680, %v1618
      %v1682 = vadd.f32 %v1681, %v1619
      %v1683 = vadd.f32 %v1682, %v1620
      %v1684 = vadd.f32 %v1683, %v1621
      %v1685 = vadd.f32 %v1684, %v1622
      %v1686 = vadd.f32 %v1685, %v1623
      %v1687 = vadd.f32 %v1686, %v1624
      %v1688 = vadd.f32 %v1687, %v1625
      %v1689 = vadd.f32 %v1688, %v1626
      %v1690 = vadd.f32 %v1689, %v1627
      %v1691 = vadd.f32 %v1690, %v1628
      %v1692 = vadd.f32 %v1691, %v1629
      %v1693 = vadd.f32 %v1692, %v1630
      %v1694 = vadd.f32 %v1693, %v1631
      %v1695 = vadd.f32 %v1694, %v1632
      %v1696 = vadd.f32 %v1695, %v1633
      %v1697 = vadd.f32 %v1696, %v1634
      %v1698 = vadd.f32 %v1697, %v1635
      %v1699 = vadd.f32 %v1698, %v1636
      %v1700 = vadd.f32 %v1699, %v1637
      %v1701 = vadd.f32 %v1700, %v1638
      %v1702 = vadd.f32 %v1701, %v1639
      %v1703 = vadd.f32 %v1702, %v1640
      %v1704 = vadd.f32 %v1703, %v1641
      %v1705 = vadd.f32 %v1704, %v1642
      %v1706 = vadd.f32 %v1705, %v1643
      %v1707 = vadd.f32 %v1706, %v1644
      %v1708 = vadd.f32 %v1707, %v1645
      %v1709 = vadd.f32 %v1708, %v1646
      %v1710 = vadd.f32 %v1709, %v1647
      %v1711 = vadd.f32 %v1710, %v1648
      %v1712 = vadd.f32 %v1711, %v1649
      %v1713 = vadd.f32 %v1712, %v1650
      %v1714 = vadd.f32 %v1713, %v1651
      %v1715 = vadd.f32 %v1714, %v1652
      %v1716 = vrot.slane %v1715, 4
      %v1717 = vadd.f32 %v1715, %v1716
      %v1718 = vrot.slane %v1717, 2
      %v1719 = vadd.f32 %v1717, %v1718
      %v1720 = vrot.slane %v1719, 1
      %v1721 = vadd.f32 %v1719, %v1720
      %vm1722 = vcmask 1040384
      %v1723 = vsel %vm1722, %v1588, %v1721
      %1724 = vst [vmem:[%s214] sm:$0x3] %v1723
      %s1725 = smul.u32 64, %s16
      %p1726 = scmp.lt.s32.totalorder %s1725, 127
      %s1727 = scalar_select %p1726, %s1725, 127
      %s1728 = smul.addr %s1727, 8
      %s1729 = scalar_lea.vmem %s3, %s1728
      %p1730 = scmp.lt.s32.totalorder %s16, 1
      %s1731 = scalar_select %p1730, %s16, 1
      %s1732 = smul.addr %s1731, 2
      %s1733 = scalar_lea.vmem %s4, %s1732
      // Predicated region
      $region33: #{double_conv_pallas.6} parent=31 // pred_check
        %p1734 = pneg %p102
      $region34: #{double_conv_pallas.6} parent=31 // pred_check_branch
        %1736 = sbr.rel (%p1734) target = $region36
      $region35: #{double_conv_pallas.6} parent=31 // pred_region
        %s1737 = smul.u32 64, %s16
      $region36: #{double_conv_pallas.6} parent=31 // pred_fallthru
        _
      // Predicated region
      $region37: #{double_conv_pallas.6} parent=31 // pred_check
        %p1738 = pneg %p128
      $region38: #{double_conv_pallas.6} parent=31 // pred_check_branch
        %1740 = sbr.rel (%p1738) target = $region40
      $region39: #{double_conv_pallas.6} parent=31 // pred_region
        _
      $region40: #{double_conv_pallas.6} parent=31 // pred_fallthru
        _
    $region32: #{double_conv_pallas.6} parent=5 // pred_fallthru
      _
    %p1741 = scmp.le.s32.totalorder 2, %s11
    // Predicated region
    $region41: #{double_conv_pallas.6} parent=5 // pred_check
      %p1742 = pneg %p1741
    $region42: #{double_conv_pallas.6} parent=5 // pred_check_branch
      %1744 = sbr.rel (%p1742) target = $region44
    $region43: #{double_conv_pallas.6} parent=5 // pred_region
      %s1745 = ssub.s32 %s11, 2
      // Predicated region
      $region45: #{double_conv_pallas.6} parent=43 // pred_check
        %p1746 = pneg %p108
      $region46: #{double_conv_pallas.6} parent=43 // pred_check_branch
        %1748 = sbr.rel (%p1746) target = $region48
      $region47: #{double_conv_pallas.6} parent=43 // pred_region
        %s1749 = smul.u32 64, %s17
        %p1750 = scmp.lt.s32.totalorder %s1749, 127
        %s1751 = scalar_select %p1750, %s1749, 127
        %s1752 = smul.addr %s1751, 8
        %s1753 = scalar_lea.vmem %s3, %s1752
      $region48: #{double_conv_pallas.6} parent=43 // pred_fallthru
        _
      // Predicated region
      $region49: #{double_conv_pallas.6} parent=43 // pred_check
        %p1754 = pneg %p134
      $region50: #{double_conv_pallas.6} parent=43 // pred_check_branch
        %1756 = sbr.rel (%p1754) target = $region52
      $region51: #{double_conv_pallas.6} parent=43 // pred_region
        %p1757 = scmp.lt.s32.totalorder %s17, 1
        %s1758 = scalar_select %p1757, %s17, 1
        %s1759 = smul.addr %s1758, 2
        %s1760 = scalar_lea.vmem %s4, %s1759
      $region52: #{double_conv_pallas.6} parent=43 // pred_fallthru
        _
    $region44: #{double_conv_pallas.6} parent=5 // pred_fallthru
      _
  $region6: #{double_conv_pallas.6} parent=0 // loop_footer
    %s15 = sadd.s32 1, %s11
  $region7: #{double_conv_pallas.6} parent=0 // loop_footer_branch
    %10 = sbr.rel target = $region3
  $region8: #{double_conv_pallas.6} parent=0 // loop_exit
    _

</llo_original>
